<compile_context>
chip_gen: v7x
topology: tpu7x:2x2x1
jax: 0.10.0
libtpu: 0.0.40
codegen_flags: <defaults>
</compile_context>

<pallas_src>
import jax
import jax.numpy as jnp
from jax.experimental import pallas as pl
from jax.experimental.pallas import tpu as pltpu

EPS = 1e-5          # nn.GroupNorm default eps
PRELU_INIT = 0.25   # nn.PReLU default init (single shared parameter)


def _prelu(x):
    return jnp.where(x >= 0, x, PRELU_INIT * x)


def _mm(a, w):
    """MXU matmul: bf16 operands (weights pre-cast on the host), f32 accumulation."""
    return jnp.dot(a.astype(jnp.bfloat16), w, preferred_element_type=jnp.float32)


def _round_up(v, m):
    return ((v + m - 1) // m) * m


# ---------------------------------------------------------------------------
# Fused Pallas kernel (whole ConvTasNet forward, block loop unrolled)
# ---------------------------------------------------------------------------

def _make_convtasnet_kernel(*, SB, L, stride, H, S, K, nb, dilations, plefts, PADL, PADR):
    f32 = jnp.float32

    def _gn(x, g, b):
        """GroupNorm(num_groups=1): single-pass stats per contiguous L-row sample slab."""
        if SB == 1:
            m = jnp.mean(x, keepdims=True)
            v = jnp.maximum(jnp.mean(x * x, keepdims=True) - m * m, 0.0)
            xn = (x - m) * jax.lax.rsqrt(v + EPS)
        else:
            row = jax.lax.broadcasted_iota(jnp.int32, (SB * L, 1), 0)
            mean_rows = jnp.zeros((SB * L, 1), f32)
            rstd_rows = jnp.zeros((SB * L, 1), f32)
            for s in range(SB):
                xs = x[s * L:(s + 1) * L, :]
                m = jnp.mean(xs, keepdims=True)
                v = jnp.maximum(jnp.mean(xs * xs, keepdims=True) - m * m, 0.0)
                r = jax.lax.rsqrt(v + EPS)
                sel = (row >= s * L) & (row < (s + 1) * L)
                mean_rows = jnp.where(sel, m, mean_rows)
                rstd_rows = jnp.where(sel, r, rstd_rows)
            xn = (x - mean_rows) * rstd_rows
        return xn * g + b

    def kernel(frames_ref, ew0_ref, ew1_ref, lng_ref, lnb_ref, bnw_ref, bnb_ref,
               cw_ref, vecH_ref, dcw_ref, sw_ref, sb_ref, rw_ref, rb_ref,
               ow_ref, ob_ref, dc0_ref, dc1_ref,
               o_ref,
               enc_scr, y_scr, pad_scr):
        # Zero only the pad fringes; the data region is fully rewritten every block and every
        # dilation's taps stay inside the fringes, so they remain valid for all blocks.
        # (Re-zeroed every grid step -> no cross-step scratch state; "parallel" axis is safe.)
        if PADL > 0:
            pad_scr[:, :PADL, :] = jnp.zeros((SB, PADL, H), f32)
        if PADR > 0:
            pad_scr[:, PADL + L:, :] = jnp.zeros((SB, PADR, H), f32)

        # ---- encoder: strided Conv1d as two matmuls on non-overlapping half-frames ----
        ew0 = ew0_ref[...]
        ew1 = ew1_ref[...]
        for s in range(SB):
            fr = frames_ref[s]                                          # (Lf, stride)
            enc_scr[s * L:(s + 1) * L, :] = _mm(fr[:L, :], ew0) + _mm(fr[1:, :], ew1)
        enc = enc_scr[...]                                              # (SB*L, F)

        # ---- TCN head: layer norm + bottleneck 1x1 conv ----
        h = _mm(_gn(enc, lng_ref[...], lnb_ref[...]), bnw_ref[...]) + bnb_ref[...]
        skip = jnp.zeros((SB * L, S), f32)

        # ---- repeats*layers _Conv1DBlocks, fully unrolled (static dilation / padding) ----
        for i in range(nb):
            d, p_l = dilations[i], plefts[i]
            vb = vecH_ref[i]                         # (6, H): conv_b, g1, b1, dconv_b, g2, b2
            x = _mm(h, cw_ref[i]) + vb[0:1, :]       # 1x1 conv -> (SB*L, H)
            x = _gn(_prelu(x), vb[1:2, :], vb[2:3, :])
            dcw = dcw_ref[i]                         # (K, H) depthwise taps, f32 (VPU)
            for s in range(SB):
                pad_scr[s, PADL:PADL + L, :] = x[s * L:(s + 1) * L, :]   # aligned store
                st = PADL - p_l
                ys = dcw[0:1, :] * pad_scr[s, st:st + L, :]              # tap 0 seeds the acc
                for k in range(1, K):
                    st = PADL - p_l + k * d
                    ys = ys + dcw[k:k + 1, :] * pad_scr[s, st:st + L, :]
                y_scr[s * L:(s + 1) * L, :] = ys
            y = _gn(_prelu(y_scr[...] + vb[3:4, :]), vb[4:5, :], vb[5:6, :])
            skip = skip + _mm(y, sw_ref[i]) + sb_ref[i]
            if i < nb - 1:                           # last block has no res_conv
                h = h + _mm(y, rw_ref[i]) + rb_ref[i]

        # ---- mask head (PReLU + 1x1 conv + sigmoid) + masked ConvTranspose1d decoder ----
        masks = jax.nn.sigmoid(_mm(_prelu(skip), ow_ref[...]) + ob_ref[...])   # (SB*L, F)
        z = enc * masks
        c0 = _mm(z, dc0_ref[...])                    # first half-frames  (SB*L, stride)
        c1 = _mm(z, dc1_ref[...])                    # second half-frames (SB*L, stride)
        # Overlap-add (stride == FL/2): row m = c0[m] (m<L) + c1[m-1] (m>=1).  Values are
        # assembled in registers and written with disjoint stores (no zero-fill / RMW);
        # the lane-dense flatten to (Bp, (L+1)*stride) is a free host-side reshape.
        for s in range(SB):
            c0s = c0[s * L:(s + 1) * L, :]
            c1s = c1[s * L:(s + 1) * L, :]
            o_ref[s, 0:1, :] = c0s[0:1, :]
            o_ref[s, 1:L, :] = c0s[1:, :] + c1s[:L - 1, :]
            o_ref[s, L:L + 1, :] = c1s[L - 1:, :]

    return kernel


# ---------------------------------------------------------------------------
# Forward pass wrapper (glue only) and parameter init
# ---------------------------------------------------------------------------

def convtasnet_forward(params, x, cfg, sb=1):
    """ConvTasNet forward.  `sb` = samples processed per grid step (sublane chunking)."""
    b, c_in, n = x.shape
    FL = cfg['filter_length']
    stride = FL // 2
    assert FL == 2 * stride, "overlap-add decoder assumes stride == filter_length // 2"
    K = cfg['kernel_size']
    causal = cfg['causal']
    dilations = tuple(cfg['dilations'])
    nb = len(dilations)
    ref_ch = cfg['reference_channels']
    c_out = len(ref_ch)

    F_ = params['enc_w'].shape[1]
    Bc = params['bn_w'].shape[1]
    H = params['conv_w'].shape[2]
    S = params['skip_w'].shape[2]

    # reference-channel selection + right padding (glue)
    xr = x[:, jnp.asarray(ref_ch), :].reshape(-1, n)                  # (B', n)
    Bp = xr.shape[0]
    padding = (FL - n) % stride
    xp = jnp.pad(xr, ((0, 0), (0, padding)))
    Lf = xp.shape[-1] // stride          # number of non-overlapping half frames
    L = Lf - 1                           # encoder output length
    assert L >= 2, "signal too short for this kernel"

    # pad the sample axis to a multiple of the chunk size
    bpad = (-Bp) % sb
    if bpad:
        xp = jnp.pad(xp, ((0, bpad), (0, 0)))
    Bt = Bp + bpad
    frames = xp.reshape(Bt, Lf, stride)  # no 2x-duplicated im2col patches

    # static per-block dilation / left-pad; data-region origin aligned to 8 sublanes
    plefts, prights = [], []
    for d in dilations:
        pt = (K - 1) * d
        p_l = pt if causal else pt // 2
        plefts.append(p_l)
        prights.append(pt - p_l)
    PADL = _round_up(max(plefts), 8) if max(plefts) > 0 else 0
    PADR = max(prights)
    PTOT = PADL + L + PADR

    # host-side bf16 pre-cast of every MXU weight operand (halves weight HBM->VMEM traffic)
    bf16 = jnp.bfloat16
    ew0 = params['enc_w'][:stride].astype(bf16)
    ew1 = params['enc_w'][stride:].astype(bf16)
    dc0 = params['dec_w'][:, :stride].astype(bf16)
    dc1 = params['dec_w'][:, stride:].astype(bf16)
    bn_w = params['bn_w'].astype(bf16)
    out_w = params['out_w'].astype(bf16)
    conv_w = params['conv_w'].astype(bf16)
    skip_w = params['skip_w'].astype(bf16)
    res_w = params['res_w'].astype(bf16)
    dconv_w = params['dconv_w']          # depthwise taps run on the VPU -> keep f32

    # coalesce the six tiny per-block (nb,1,H) vectors into one (nb, 6, H) operand
    vecH = jnp.concatenate([params['conv_b'], params['g1'], params['b1'],
                            params['dconv_b'], params['g2'], params['b2']], axis=1)

    operands = (frames, ew0, ew1, params['ln_g'], params['ln_b'], bn_w, params['bn_b'],
                conv_w, vecH, dconv_w, skip_w, params['skip_b'],
                res_w, params['res_b'], out_w, params['out_b'], dc0, dc1)

    def chunk_spec(a):                   # streamed per sample chunk
        return pl.BlockSpec((sb,) + a.shape[1:], lambda c: (c, 0, 0))

    def resident(a):                     # constant index_map -> DMA'd once, stays in VMEM
        nd = a.ndim
        return pl.BlockSpec(a.shape, lambda c, _n=nd: (0,) * _n)

    in_specs = [chunk_spec(frames)] + [resident(a) for a in operands[1:]]

    kernel = _make_convtasnet_kernel(
        SB=sb, L=L, stride=stride, H=H, S=S, K=K, nb=nb,
        dilations=dilations, plefts=tuple(plefts), PADL=PADL, PADR=PADR)

    scratch_shapes = [pltpu.VMEM((sb * L, F_), jnp.float32),   # encoder output
                      pltpu.VMEM((sb * L, H), jnp.float32),    # depthwise-conv output
                      pltpu.VMEM((sb, PTOT, H), jnp.float32)]  # zero-fringed dconv pad buffer

    # VMEM budget derived from the actual footprint (resident weights, double-buffered IO,
    # scratch, plus a cushion for live activation temporaries), capped by chip VMEM.
    def _nbytes(a):
        return int(a.size) * a.dtype.itemsize
    weight_bytes = sum(_nbytes(a) for a in operands[1:])
    io_bytes = 4 * sb * (Lf * stride + (L + 1) * stride)
    scratch_bytes = 4 * (sb * L * F_ + sb * L * H + sb * PTOT * H)
    act_bytes = 4 * sb * L * (2 * F_ + Bc + S + 4 * H)
    needed = 2 * weight_bytes + 4 * io_bytes + scratch_bytes + act_bytes
    try:
        vmem_cap = int(pltpu.get_tpu_info().vmem_capacity_bytes)
    except Exception:
        vmem_cap = 64 * 1024 * 1024
    vmem_limit = int(min(0.9 * vmem_cap, max(32 * 1024 * 1024, 2 * needed)))

    grid_spec = pltpu.PrefetchScalarGridSpec(
        num_scalar_prefetch=0,
        grid=(Bt // sb,),
        in_specs=in_specs,
        out_specs=pl.BlockSpec((sb, L + 1, stride), lambda c: (c, 0, 0)),
        scratch_shapes=scratch_shapes)

    out_frames = pl.pallas_call(
        kernel,
        out_shape=jax.ShapeDtypeStruct((Bt, L + 1, stride), jnp.float32),
        grid_spec=grid_spec,
        compiler_params=pltpu.CompilerParams(
            dimension_semantics=("parallel",),
            vmem_limit_bytes=vmem_limit),
    )(*operands)

    out = out_frames[:Bp].reshape(Bp, (L + 1) * stride)               # (B', Nout)
    out = out.reshape(b, c_out, -1)
    return out[:, :, :n]


def init_params(key, cfg):
    F_ = cfg['filters']; FL = cfg['filter_length']
    Bc = cfg['bottleneck_channels']; H = cfg['hidden_channels']
    S = cfg['skip_channels']; K = cfg['kernel_size']
    nb = cfg['repeats'] * cfg['layers']
    ks = jax.random.split(key, 20)

    def nrm(k, shape, scale=0.1):
        return (scale * jax.random.normal(k, shape)).astype(jnp.float32)

    params = {
        # Conv1d(1, F, FL, bias=False) weight (F,1,FL) stored transposed as (FL, F)
        'enc_w': nrm(ks[0], (FL, F_)),
        # ConvTranspose1d(F, 1, FL, bias=False) weight (F,1,FL) stored as (F, FL)
        'dec_w': nrm(ks[1], (F_, FL)),
        'ln_g': 1.0 + nrm(ks[2], (1, F_)),
        'ln_b': nrm(ks[3], (1, F_)),
        'bn_w': nrm(ks[4], (F_, Bc)),     # bottleneck 1x1 conv, stored (in, out)
        'bn_b': nrm(ks[5], (1, Bc)),
        'out_w': nrm(ks[6], (S, F_)),     # TCN output 1x1 conv, stored (in, out)
        'out_b': nrm(ks[7], (1, F_)),
        # per-block weights stacked on a leading `nb` axis (1x1 convs stored (in, out))
        'conv_w': nrm(ks[8], (nb, Bc, H)),
        'conv_b': nrm(ks[9], (nb, 1, H)),
        'g1': 1.0 + nrm(ks[10], (nb, 1, H)),
        'b1': nrm(ks[11], (nb, 1, H)),
        'dconv_w': nrm(ks[12], (nb, K, H)),   # depthwise weight (H,1,K) stored (K, H)
        'dconv_b': nrm(ks[13], (nb, 1, H)),
        'g2': 1.0 + nrm(ks[14], (nb, 1, H)),
        'b2': nrm(ks[15], (nb, 1, H)),
        'skip_w': nrm(ks[16], (nb, H, S)),
        'skip_b': nrm(ks[17], (nb, 1, S)),
        # last block has no res_conv in torch (output=None); entry unused there
        'res_w': nrm(ks[18], (nb, H, Bc)).at[nb - 1].set(0.0),
        'res_b': nrm(ks[19], (nb, 1, Bc)).at[nb - 1].set(0.0),
    }
    return params


# ---------------------------------------------------------------------------
# Pure-JAX references (same math) for numerical self-checks
# ---------------------------------------------------------------------------

def _gn_twopass(x, g, b):
    mean = jnp.mean(x, keepdims=True)
    var = jnp.mean(jnp.square(x - mean), keepdims=True)
    return (x - mean) * jax.lax.rsqrt(var + EPS) * g + b


def _gn_single(x, g, b):
    m = jnp.mean(x, keepdims=True)
    v = jnp.maximum(jnp.mean(x * x, keepdims=True) - m * m, 0.0)
    return (x - m) * jax.lax.rsqrt(v + EPS) * g + b


def reference_forward(params, x, cfg, matmul_dtype=jnp.float32, single_pass_gn=False):
    """Reference forward.  matmul_dtype=bf16 + single_pass_gn=True reproduces the kernel's
    exact precision policy (bf16 MXU operands, f32 accumulation, single-pass GN stats)."""
    FL = cfg['filter_length']; stride = FL // 2; K = cfg['kernel_size']
    causal = cfg['causal']; dilations = cfg['dilations']; nb = len(dilations)
    b, c_in, n = x.shape
    ref_ch = cfg['reference_channels']; c_out = len(ref_ch)
    gn = _gn_single if single_pass_gn else _gn_twopass

    xr = x[:, jnp.asarray(ref_ch), :].reshape(-1, n)
    padding = (FL - n) % stride
    xp = jnp.pad(xr, ((0, 0), (0, padding)))
    Bp = xr.shape[0]
    Lf = xp.shape[-1] // stride
    L = Lf - 1
    S = params['skip_w'].shape[2]

    def mm(a, w):
        return jnp.dot(a.astype(matmul_dtype), w.astype(matmul_dtype),
                       preferred_element_type=jnp.float32)

    outs = []
    for s in range(Bp):
        fr = xp[s].reshape(Lf, stride)
        enc = mm(fr[:L], params['enc_w'][:stride]) + mm(fr[1:], params['enc_w'][stride:])
        h = gn(enc, params['ln_g'], params['ln_b'])
        h = mm(h, params['bn_w']) + params['bn_b']
        skip = jnp.zeros((L, S), jnp.float32)
        for i in range(nb):
            d = dilations[i]
            xx = mm(h, params['conv_w'][i]) + params['conv_b'][i]
            xx = gn(_prelu(xx), params['g1'][i], params['b1'][i])
            pt = (K - 1) * d
            p_l = pt if causal else pt // 2
            p_r = pt - p_l
            xz = jnp.pad(xx, ((p_l, p_r), (0, 0)))
            y = sum(params['dconv_w'][i, k][None, :] * xz[k * d:k * d + L]
                    for k in range(K))
            y = gn(_prelu(y + params['dconv_b'][i]), params['g2'][i], params['b2'][i])
            skip = skip + mm(y, params['skip_w'][i]) + params['skip_b'][i]
            if i < nb - 1:
                h = h + mm(y, params['res_w'][i]) + params['res_b'][i]
        masks = jax.nn.sigmoid(mm(_prelu(skip), params['out_w']) + params['out_b'])
        z = enc * masks
        c0 = mm(z, params['dec_w'][:, :stride])
        c1 = mm(z, params['dec_w'][:, stride:])
        zrow = jnp.zeros((1, stride), jnp.float32)
        frames = jnp.concatenate([c0, zrow], 0) + jnp.concatenate([zrow, c1], 0)
        outs.append(frames.reshape(-1))
    out = jnp.stack(outs).reshape(b, c_out, -1)
    return out[:, :, :n]


if __name__ == "__main__":
    cfg = dict(
        input_channels=1,
        reference_channels=[0],
        filters=16,
        filter_length=8,
        bottleneck_channels=8,
        hidden_channels=16,
        skip_channels=8,
        kernel_size=3,
        layers=3,
        repeats=2,
        # TODO(synk): CausalLayerNorm (causal=True) undefined in reference source.
        causal=False,
    )
    cfg['dilations'] = [2 ** i for _ in range(cfg['repeats']) for i in range(cfg['layers'])]

    key = jax.random.PRNGKey(0)
    k_p, k_x = jax.random.split(key)
    params = init_params(k_p, cfg)

    B, N = 2, 64
    x = jax.random.normal(k_x, (B, cfg['input_channels'], N), dtype=jnp.float32)

    # --- default path: one sample per grid step (grid=(2,) -> both v7x TCs busy) ---
    out = jax.block_until_ready(convtasnet_forward(params, x, cfg, sb=1))
    assert out.shape == (B, len(cfg['reference_channels']), N), out.shape
    assert bool(jnp.all(jnp.isfinite(out))), "non-finite output"

    ref_bf16 = reference_forward(params, x, cfg, matmul_dtype=jnp.bfloat16,
                                 single_pass_gn=True)
    ref_f32 = reference_forward(params, x, cfg, matmul_dtype=jnp.float32,
                                single_pass_gn=False)
    scale_bf = float(jnp.max(jnp.abs(ref_bf16))) + 1e-12
    scale_f32 = float(jnp.max(jnp.abs(ref_f32))) + 1e-12

    rel = float(jnp.max(jnp.abs(out - ref_bf16))) / scale_bf
    assert rel < 2e-2, f"mismatch vs precision-matched reference: rel = {rel}"

    rel32 = float(jnp.max(jnp.abs(out - ref_f32))) / scale_f32
    assert rel32 < 1.5e-1, f"bf16 drift vs f32 reference too large: rel = {rel32}"

    # --- sample-chunked path: two samples stacked on the sublane axis per grid step ---
    out2 = jax.block_until_ready(convtasnet_forward(params, x, cfg, sb=2))
    rel2 = float(jnp.max(jnp.abs(out2 - ref_bf16))) / scale_bf
    assert rel2 < 2e-2, f"chunked-path mismatch vs reference: rel = {rel2}"

    print("KERNEL_OK")
</pallas_src>

<mosaic_0001>
module attributes {stable_mosaic.version = 11 : i64} {
  func.func @kernel(%arg0: i32, %arg1: memref<1x16x4xf32, #tpu.memory_space<vmem>>, %arg2: memref<4x16xbf16, #tpu.memory_space<vmem>>, %arg3: memref<4x16xbf16, #tpu.memory_space<vmem>>, %arg4: memref<1x16xf32, #tpu.memory_space<vmem>>, %arg5: memref<1x16xf32, #tpu.memory_space<vmem>>, %arg6: memref<16x8xbf16, #tpu.memory_space<vmem>>, %arg7: memref<1x8xf32, #tpu.memory_space<vmem>>, %arg8: memref<6x8x16xbf16, #tpu.memory_space<vmem>>, %arg9: memref<6x6x16xf32, #tpu.memory_space<vmem>>, %arg10: memref<6x3x16xf32, #tpu.memory_space<vmem>>, %arg11: memref<6x16x8xbf16, #tpu.memory_space<vmem>>, %arg12: memref<6x1x8xf32, #tpu.memory_space<vmem>>, %arg13: memref<6x16x8xbf16, #tpu.memory_space<vmem>>, %arg14: memref<6x1x8xf32, #tpu.memory_space<vmem>>, %arg15: memref<8x16xbf16, #tpu.memory_space<vmem>>, %arg16: memref<1x16xf32, #tpu.memory_space<vmem>>, %arg17: memref<16x4xbf16, #tpu.memory_space<vmem>>, %arg18: memref<16x4xbf16, #tpu.memory_space<vmem>>, %arg19: memref<1x16x4xf32, #tpu.memory_space<vmem>>, %arg20: memref<15x16xf32, #tpu.memory_space<vmem>>, %arg21: memref<15x16xf32, #tpu.memory_space<vmem>>, %arg22: memref<1x27x16xf32, #tpu.memory_space<vmem>>) attributes {dimension_semantics = [#tpu.dimension_semantics<parallel>], iteration_bounds = array<i64: 2>, scalar_prefetch = 0 : i64, scratch_operands = 3 : i64, tpu.core_type = #tpu.core_type<tc>, window_params = [{transform_indices = @transform_0, window_bounds = array<i64: 1, 16, 4>}, {pipeline_mode = #tpu.pipeline_mode<synchronous>, transform_indices = @transform_1, window_bounds = array<i64: 4, 16>}, {pipeline_mode = #tpu.pipeline_mode<synchronous>, transform_indices = @transform_2, window_bounds = array<i64: 4, 16>}, {pipeline_mode = #tpu.pipeline_mode<synchronous>, transform_indices = @transform_3, window_bounds = array<i64: 1, 16>}, {pipeline_mode = #tpu.pipeline_mode<synchronous>, transform_indices = @transform_4, window_bounds = array<i64: 1, 16>}, {pipeline_mode = #tpu.pipeline_mode<synchronous>, transform_indices = @transform_5, window_bounds = array<i64: 16, 8>}, {pipeline_mode = #tpu.pipeline_mode<synchronous>, transform_indices = @transform_6, window_bounds = array<i64: 1, 8>}, {pipeline_mode = #tpu.pipeline_mode<synchronous>, transform_indices = @transform_7, window_bounds = array<i64: 6, 8, 16>}, {pipeline_mode = #tpu.pipeline_mode<synchronous>, transform_indices = @transform_8, window_bounds = array<i64: 6, 6, 16>}, {pipeline_mode = #tpu.pipeline_mode<synchronous>, transform_indices = @transform_9, window_bounds = array<i64: 6, 3, 16>}, {pipeline_mode = #tpu.pipeline_mode<synchronous>, transform_indices = @transform_10, window_bounds = array<i64: 6, 16, 8>}, {pipeline_mode = #tpu.pipeline_mode<synchronous>, transform_indices = @transform_11, window_bounds = array<i64: 6, 1, 8>}, {pipeline_mode = #tpu.pipeline_mode<synchronous>, transform_indices = @transform_12, window_bounds = array<i64: 6, 16, 8>}, {pipeline_mode = #tpu.pipeline_mode<synchronous>, transform_indices = @transform_13, window_bounds = array<i64: 6, 1, 8>}, {pipeline_mode = #tpu.pipeline_mode<synchronous>, transform_indices = @transform_14, window_bounds = array<i64: 8, 16>}, {pipeline_mode = #tpu.pipeline_mode<synchronous>, transform_indices = @transform_15, window_bounds = array<i64: 1, 16>}, {pipeline_mode = #tpu.pipeline_mode<synchronous>, transform_indices = @transform_16, window_bounds = array<i64: 16, 4>}, {pipeline_mode = #tpu.pipeline_mode<synchronous>, transform_indices = @transform_17, window_bounds = array<i64: 16, 4>}, {transform_indices = @transform_18, window_bounds = array<i64: 1, 16, 4>}]} {
    %cst = arith.constant 0.000000e+00 : f32
    %0 = vector.broadcast %cst : f32 to vector<1x8x16xf32>
    %c0 = arith.constant 0 : index
    %c0_0 = arith.constant 0 : index
    %c0_1 = arith.constant 0 : index
    %1 = vector.load %arg22[%c0, %c0_0, %c0_1] : memref<1x27x16xf32, #tpu.memory_space<vmem>>, vector<1x8x16xf32>
    tpu.vector_store %arg22[%c0, %c0_0, %c0_1], %0 {strides = array<i32>} : memref<1x27x16xf32, #tpu.memory_space<vmem>>, vector<1x8x16xf32>,
    %cst_2 = arith.constant 0.000000e+00 : f32
    %2 = vector.broadcast %cst_2 : f32 to vector<1x4x16xf32>
    %c0_3 = arith.constant 0 : index
    %c23 = arith.constant 23 : index
    %c0_4 = arith.constant 0 : index
    %3 = vector.load %arg22[%c0_3, %c23, %c0_4] : memref<1x27x16xf32, #tpu.memory_space<vmem>>, vector<1x4x16xf32>
    tpu.vector_store %arg22[%c0_3, %c23, %c0_4], %2 {strides = array<i32>} : memref<1x27x16xf32, #tpu.memory_space<vmem>>, vector<1x4x16xf32>,
    %c0_5 = arith.constant 0 : index
    %c0_6 = arith.constant 0 : index
    %4 = vector.load %arg2[%c0_5, %c0_6] : memref<4x16xbf16, #tpu.memory_space<vmem>>, vector<4x16xbf16>
    %c0_7 = arith.constant 0 : index
    %c0_8 = arith.constant 0 : index
    %5 = vector.load %arg3[%c0_7, %c0_8] : memref<4x16xbf16, #tpu.memory_space<vmem>>, vector<4x16xbf16>
    %c0_9 = arith.constant 0 : index
    %c0_10 = arith.constant 0 : index
    %c0_11 = arith.constant 0 : index
    %6 = vector.load %arg1[%c0_9, %c0_10, %c0_11] : memref<1x16x4xf32, #tpu.memory_space<vmem>>, vector<1x16x4xf32>
    %7 = vector.shape_cast %6 : vector<1x16x4xf32> to vector<16x4xf32>
    %8 = vector.extract_strided_slice %7 {offsets = [0, 0], sizes = [15, 4], strides = [1, 1]} : vector<16x4xf32> to vector<15x4xf32>
    %9 = arith.truncf %8 : vector<15x4xf32> to vector<15x4xbf16>
    %cst_12 = arith.constant dense<0.000000e+00> : vector<15x16xf32>
    %10 = tpu.matmul %9, %4, %cst_12 {dimension_numbers = #tpu.dot_dimension_numbers<[1], [0], [0], [1], [0, 0, 1, 1], [], []>} : vector<15x4xbf16>, vector<4x16xbf16>, vector<15x16xf32> -> vector<15x16xf32>
    %11 = vector.extract_strided_slice %7 {offsets = [1, 0], sizes = [15, 4], strides = [1, 1]} : vector<16x4xf32> to vector<15x4xf32>
    %12 = arith.truncf %11 : vector<15x4xf32> to vector<15x4xbf16>
    %cst_13 = arith.constant dense<0.000000e+00> : vector<15x16xf32>
    %13 = tpu.matmul %12, %5, %cst_13 {dimension_numbers = #tpu.dot_dimension_numbers<[1], [0], [0], [1], [0, 0, 1, 1], [], []>} : vector<15x4xbf16>, vector<4x16xbf16>, vector<15x16xf32> -> vector<15x16xf32>
    %14 = arith.addf %10, %13 : vector<15x16xf32>
    %c0_14 = arith.constant 0 : index
    %c0_15 = arith.constant 0 : index
    %15 = vector.load %arg20[%c0_14, %c0_15] : memref<15x16xf32, #tpu.memory_space<vmem>>, vector<15x16xf32>
    tpu.vector_store %arg20[%c0_14, %c0_15], %14 {strides = array<i32>} : memref<15x16xf32, #tpu.memory_space<vmem>>, vector<15x16xf32>,
    %c0_16 = arith.constant 0 : index
    %c0_17 = arith.constant 0 : index
    %16 = vector.load %arg20[%c0_16, %c0_17] : memref<15x16xf32, #tpu.memory_space<vmem>>, vector<15x16xf32>
    %c0_18 = arith.constant 0 : index
    %c0_19 = arith.constant 0 : index
    %17 = vector.load %arg4[%c0_18, %c0_19] : memref<1x16xf32, #tpu.memory_space<vmem>>, vector<1x16xf32>
    %c0_20 = arith.constant 0 : index
    %c0_21 = arith.constant 0 : index
    %18 = vector.load %arg5[%c0_20, %c0_21] : memref<1x16xf32, #tpu.memory_space<vmem>>, vector<1x16xf32>
    %19 = vector.shape_cast %16 : vector<15x16xf32> to vector<1x15x16xf32>
    %cst_22 = arith.constant dense<0.000000e+00> : vector<1xf32>
    %20 = vector.multi_reduction <add>, %19, %cst_22 [1, 2] : vector<1x15x16xf32> to vector<1xf32>
    %21 = vector.shape_cast %20 : vector<1xf32> to vector<1x1x1xf32>
    %22 = vector.extract %21[0, 0, 0] : f32 from vector<1x1x1xf32>
    %23 = vector.broadcast %22 : f32 to vector<1x1xf32>
    %cst_23 = arith.constant 2.400000e+02 : f32
    %24 = vector.broadcast %cst_23 : f32 to vector<1x1xf32>
    %25 = arith.divf %23, %24 : vector<1x1xf32>
    %26 = arith.mulf %16, %16 : vector<15x16xf32>
    %27 = vector.shape_cast %26 : vector<15x16xf32> to vector<1x15x16xf32>
    %cst_24 = arith.constant dense<0.000000e+00> : vector<1xf32>
    %28 = vector.multi_reduction <add>, %27, %cst_24 [1, 2] : vector<1x15x16xf32> to vector<1xf32>
    %29 = vector.shape_cast %28 : vector<1xf32> to vector<1x1x1xf32>
    %30 = vector.extract %29[0, 0, 0] : f32 from vector<1x1x1xf32>
    %31 = vector.broadcast %30 : f32 to vector<1x1xf32>
    %cst_25 = arith.constant 2.400000e+02 : f32
    %32 = vector.broadcast %cst_25 : f32 to vector<1x1xf32>
    %33 = arith.divf %31, %32 : vector<1x1xf32>
    %34 = arith.mulf %25, %25 : vector<1x1xf32>
    %35 = arith.subf %33, %34 : vector<1x1xf32>
    %cst_26 = arith.constant 0.000000e+00 : f32
    %36 = vector.broadcast %cst_26 : f32 to vector<1x1xf32>
    %37 = arith.maximumf %35, %36 : vector<1x1xf32>
    %38 = vector.broadcast %25 : vector<1x1xf32> to vector<15x16xf32>
    %39 = arith.subf %16, %38 : vector<15x16xf32>
    %cst_27 = arith.constant 9.99999974E-6 : f32
    %40 = vector.broadcast %cst_27 : f32 to vector<1x1xf32>
    %41 = arith.addf %37, %40 : vector<1x1xf32>
    %42 = math.rsqrt %41 : vector<1x1xf32>
    %43 = vector.broadcast %42 : vector<1x1xf32> to vector<15x16xf32>
    %44 = arith.mulf %39, %43 : vector<15x16xf32>
    %45 = vector.broadcast %17 : vector<1x16xf32> to vector<15x16xf32>
    %46 = arith.mulf %44, %45 : vector<15x16xf32>
    %47 = vector.broadcast %18 : vector<1x16xf32> to vector<15x16xf32>
    %48 = arith.addf %46, %47 : vector<15x16xf32>
    %c0_28 = arith.constant 0 : index
    %c0_29 = arith.constant 0 : index
    %49 = vector.load %arg6[%c0_28, %c0_29] : memref<16x8xbf16, #tpu.memory_space<vmem>>, vector<16x8xbf16>
    %50 = arith.truncf %48 : vector<15x16xf32> to vector<15x16xbf16>
    %cst_30 = arith.constant dense<0.000000e+00> : vector<15x8xf32>
    %51 = tpu.matmul %50, %49, %cst_30 {dimension_numbers = #tpu.dot_dimension_numbers<[1], [0], [0], [1], [0, 0, 1, 1], [], []>} : vector<15x16xbf16>, vector<16x8xbf16>, vector<15x8xf32> -> vector<15x8xf32>
    %c0_31 = arith.constant 0 : index
    %c0_32 = arith.constant 0 : index
    %52 = vector.load %arg7[%c0_31, %c0_32] : memref<1x8xf32, #tpu.memory_space<vmem>>, vector<1x8xf32>
    %53 = vector.broadcast %52 : vector<1x8xf32> to vector<15x8xf32>
    %54 = arith.addf %51, %53 : vector<15x8xf32>
    %cst_33 = arith.constant 0.000000e+00 : f32
    %55 = vector.broadcast %cst_33 : f32 to vector<15x8xf32>
    %c0_34 = arith.constant 0 : index
    %c0_35 = arith.constant 0 : index
    %c0_36 = arith.constant 0 : index
    %56 = vector.load %arg9[%c0_34, %c0_35, %c0_36] : memref<6x6x16xf32, #tpu.memory_space<vmem>>, vector<1x6x16xf32>
    %57 = vector.shape_cast %56 : vector<1x6x16xf32> to vector<6x16xf32>
    %c0_37 = arith.constant 0 : index
    %c0_38 = arith.constant 0 : index
    %c0_39 = arith.constant 0 : index
    %58 = vector.load %arg8[%c0_37, %c0_38, %c0_39] : memref<6x8x16xbf16, #tpu.memory_space<vmem>>, vector<1x8x16xbf16>
    %59 = vector.shape_cast %58 : vector<1x8x16xbf16> to vector<8x16xbf16>
    %60 = arith.truncf %54 : vector<15x8xf32> to vector<15x8xbf16>
    %cst_40 = arith.constant dense<0.000000e+00> : vector<15x16xf32>
    %61 = tpu.matmul %60, %59, %cst_40 {dimension_numbers = #tpu.dot_dimension_numbers<[1], [0], [0], [1], [0, 0, 1, 1], [], []>} : vector<15x8xbf16>, vector<8x16xbf16>, vector<15x16xf32> -> vector<15x16xf32>
    %62 = vector.extract_strided_slice %57 {offsets = [0, 0], sizes = [1, 16], strides = [1, 1]} : vector<6x16xf32> to vector<1x16xf32>
    %63 = vector.broadcast %62 : vector<1x16xf32> to vector<15x16xf32>
    %64 = arith.addf %61, %63 : vector<15x16xf32>
    %cst_41 = arith.constant 0.000000e+00 : f32
    %65 = vector.broadcast %cst_41 : f32 to vector<15x16xf32>
    %66 = arith.cmpf oge, %64, %65 : vector<15x16xf32>
    %cst_42 = arith.constant 2.500000e-01 : f32
    %67 = vector.broadcast %cst_42 : f32 to vector<15x16xf32>
    %68 = arith.mulf %67, %64 : vector<15x16xf32>
    %69 = arith.select %66, %64, %68 : vector<15x16xi1>, vector<15x16xf32>
    %70 = vector.extract_strided_slice %57 {offsets = [1, 0], sizes = [1, 16], strides = [1, 1]} : vector<6x16xf32> to vector<1x16xf32>
    %71 = vector.extract_strided_slice %57 {offsets = [2, 0], sizes = [1, 16], strides = [1, 1]} : vector<6x16xf32> to vector<1x16xf32>
    %72 = vector.shape_cast %69 : vector<15x16xf32> to vector<1x15x16xf32>
    %cst_43 = arith.constant dense<0.000000e+00> : vector<1xf32>
    %73 = vector.multi_reduction <add>, %72, %cst_43 [1, 2] : vector<1x15x16xf32> to vector<1xf32>
    %74 = vector.shape_cast %73 : vector<1xf32> to vector<1x1x1xf32>
    %75 = vector.extract %74[0, 0, 0] : f32 from vector<1x1x1xf32>
    %76 = vector.broadcast %75 : f32 to vector<1x1xf32>
    %cst_44 = arith.constant 2.400000e+02 : f32
    %77 = vector.broadcast %cst_44 : f32 to vector<1x1xf32>
    %78 = arith.divf %76, %77 : vector<1x1xf32>
    %79 = arith.mulf %69, %69 : vector<15x16xf32>
    %80 = vector.shape_cast %79 : vector<15x16xf32> to vector<1x15x16xf32>
    %cst_45 = arith.constant dense<0.000000e+00> : vector<1xf32>
    %81 = vector.multi_reduction <add>, %80, %cst_45 [1, 2] : vector<1x15x16xf32> to vector<1xf32>
    %82 = vector.shape_cast %81 : vector<1xf32> to vector<1x1x1xf32>
    %83 = vector.extract %82[0, 0, 0] : f32 from vector<1x1x1xf32>
    %84 = vector.broadcast %83 : f32 to vector<1x1xf32>
    %cst_46 = arith.constant 2.400000e+02 : f32
    %85 = vector.broadcast %cst_46 : f32 to vector<1x1xf32>
    %86 = arith.divf %84, %85 : vector<1x1xf32>
    %87 = arith.mulf %78, %78 : vector<1x1xf32>
    %88 = arith.subf %86, %87 : vector<1x1xf32>
    %cst_47 = arith.constant 0.000000e+00 : f32
    %89 = vector.broadcast %cst_47 : f32 to vector<1x1xf32>
    %90 = arith.maximumf %88, %89 : vector<1x1xf32>
    %91 = vector.broadcast %78 : vector<1x1xf32> to vector<15x16xf32>
    %92 = arith.subf %69, %91 : vector<15x16xf32>
    %cst_48 = arith.constant 9.99999974E-6 : f32
    %93 = vector.broadcast %cst_48 : f32 to vector<1x1xf32>
    %94 = arith.addf %90, %93 : vector<1x1xf32>
    %95 = math.rsqrt %94 : vector<1x1xf32>
    %96 = vector.broadcast %95 : vector<1x1xf32> to vector<15x16xf32>
    %97 = arith.mulf %92, %96 : vector<15x16xf32>
    %98 = vector.broadcast %70 : vector<1x16xf32> to vector<15x16xf32>
    %99 = arith.mulf %97, %98 : vector<15x16xf32>
    %100 = vector.broadcast %71 : vector<1x16xf32> to vector<15x16xf32>
    %101 = arith.addf %99, %100 : vector<15x16xf32>
    %c0_49 = arith.constant 0 : index
    %c0_50 = arith.constant 0 : index
    %c0_51 = arith.constant 0 : index
    %102 = vector.load %arg10[%c0_49, %c0_50, %c0_51] : memref<6x3x16xf32, #tpu.memory_space<vmem>>, vector<1x3x16xf32>
    %103 = vector.shape_cast %102 : vector<1x3x16xf32> to vector<3x16xf32>
    %c0_52 = arith.constant 0 : index
    %c8 = arith.constant 8 : index
    %c0_53 = arith.constant 0 : index
    %104 = vector.load %arg22[%c0_52, %c8, %c0_53] : memref<1x27x16xf32, #tpu.memory_space<vmem>>, vector<1x15x16xf32>
    %105 = vector.shape_cast %104 : vector<1x15x16xf32> to vector<15x16xf32>
    %106 = vector.shape_cast %101 : vector<15x16xf32> to vector<1x15x16xf32>
    tpu.vector_store %arg22[%c0_52, %c8, %c0_53], %106 {strides = array<i32>} : memref<1x27x16xf32, #tpu.memory_space<vmem>>, vector<1x15x16xf32>,
    %107 = vector.extract_strided_slice %103 {offsets = [0, 0], sizes = [1, 16], strides = [1, 1]} : vector<3x16xf32> to vector<1x16xf32>
    %c0_54 = arith.constant 0 : index
    %c7 = arith.constant 7 : index
    %c0_55 = arith.constant 0 : index
    %108 = vector.load %arg22[%c0_54, %c7, %c0_55] : memref<1x27x16xf32, #tpu.memory_space<vmem>>, vector<1x15x16xf32>
    %109 = vector.shape_cast %108 : vector<1x15x16xf32> to vector<15x16xf32>
    %110 = vector.broadcast %107 : vector<1x16xf32> to vector<15x16xf32>
    %111 = arith.mulf %110, %109 : vector<15x16xf32>
    %112 = vector.extract_strided_slice %103 {offsets = [1, 0], sizes = [1, 16], strides = [1, 1]} : vector<3x16xf32> to vector<1x16xf32>
    %c0_56 = arith.constant 0 : index
    %c8_57 = arith.constant 8 : index
    %c0_58 = arith.constant 0 : index
    %113 = vector.load %arg22[%c0_56, %c8_57, %c0_58] : memref<1x27x16xf32, #tpu.memory_space<vmem>>, vector<1x15x16xf32>
    %114 = vector.shape_cast %113 : vector<1x15x16xf32> to vector<15x16xf32>
    %115 = vector.broadcast %112 : vector<1x16xf32> to vector<15x16xf32>
    %116 = arith.mulf %115, %114 : vector<15x16xf32>
    %117 = arith.addf %111, %116 : vector<15x16xf32>
    %118 = vector.extract_strided_slice %103 {offsets = [2, 0], sizes = [1, 16], strides = [1, 1]} : vector<3x16xf32> to vector<1x16xf32>
    %c0_59 = arith.constant 0 : index
    %c9 = arith.constant 9 : index
    %c0_60 = arith.constant 0 : index
    %119 = vector.load %arg22[%c0_59, %c9, %c0_60] : memref<1x27x16xf32, #tpu.memory_space<vmem>>, vector<1x15x16xf32>
    %120 = vector.shape_cast %119 : vector<1x15x16xf32> to vector<15x16xf32>
    %121 = vector.broadcast %118 : vector<1x16xf32> to vector<15x16xf32>
    %122 = arith.mulf %121, %120 : vector<15x16xf32>
    %123 = arith.addf %117, %122 : vector<15x16xf32>
    %c0_61 = arith.constant 0 : index
    %c0_62 = arith.constant 0 : index
    %124 = vector.load %arg21[%c0_61, %c0_62] : memref<15x16xf32, #tpu.memory_space<vmem>>, vector<15x16xf32>
    tpu.vector_store %arg21[%c0_61, %c0_62], %123 {strides = array<i32>} : memref<15x16xf32, #tpu.memory_space<vmem>>, vector<15x16xf32>,
    %c0_63 = arith.constant 0 : index
    %c0_64 = arith.constant 0 : index
    %125 = vector.load %arg21[%c0_63, %c0_64] : memref<15x16xf32, #tpu.memory_space<vmem>>, vector<15x16xf32>
    %126 = vector.extract_strided_slice %57 {offsets = [3, 0], sizes = [1, 16], strides = [1, 1]} : vector<6x16xf32> to vector<1x16xf32>
    %127 = vector.broadcast %126 : vector<1x16xf32> to vector<15x16xf32>
    %128 = arith.addf %125, %127 : vector<15x16xf32>
    %cst_65 = arith.constant 0.000000e+00 : f32
    %129 = vector.broadcast %cst_65 : f32 to vector<15x16xf32>
    %130 = arith.cmpf oge, %128, %129 : vector<15x16xf32>
    %cst_66 = arith.constant 2.500000e-01 : f32
    %131 = vector.broadcast %cst_66 : f32 to vector<15x16xf32>
    %132 = arith.mulf %131, %128 : vector<15x16xf32>
    %133 = arith.select %130, %128, %132 : vector<15x16xi1>, vector<15x16xf32>
    %134 = vector.extract_strided_slice %57 {offsets = [4, 0], sizes = [1, 16], strides = [1, 1]} : vector<6x16xf32> to vector<1x16xf32>
    %135 = vector.extract_strided_slice %57 {offsets = [5, 0], sizes = [1, 16], strides = [1, 1]} : vector<6x16xf32> to vector<1x16xf32>
    %136 = vector.shape_cast %133 : vector<15x16xf32> to vector<1x15x16xf32>
    %cst_67 = arith.constant dense<0.000000e+00> : vector<1xf32>
    %137 = vector.multi_reduction <add>, %136, %cst_67 [1, 2] : vector<1x15x16xf32> to vector<1xf32>
    %138 = vector.shape_cast %137 : vector<1xf32> to vector<1x1x1xf32>
    %139 = vector.extract %138[0, 0, 0] : f32 from vector<1x1x1xf32>
    %140 = vector.broadcast %139 : f32 to vector<1x1xf32>
    %cst_68 = arith.constant 2.400000e+02 : f32
    %141 = vector.broadcast %cst_68 : f32 to vector<1x1xf32>
    %142 = arith.divf %140, %141 : vector<1x1xf32>
    %143 = arith.mulf %133, %133 : vector<15x16xf32>
    %144 = vector.shape_cast %143 : vector<15x16xf32> to vector<1x15x16xf32>
    %cst_69 = arith.constant dense<0.000000e+00> : vector<1xf32>
    %145 = vector.multi_reduction <add>, %144, %cst_69 [1, 2] : vector<1x15x16xf32> to vector<1xf32>
    %146 = vector.shape_cast %145 : vector<1xf32> to vector<1x1x1xf32>
    %147 = vector.extract %146[0, 0, 0] : f32 from vector<1x1x1xf32>
    %148 = vector.broadcast %147 : f32 to vector<1x1xf32>
    %cst_70 = arith.constant 2.400000e+02 : f32
    %149 = vector.broadcast %cst_70 : f32 to vector<1x1xf32>
    %150 = arith.divf %148, %149 : vector<1x1xf32>
    %151 = arith.mulf %142, %142 : vector<1x1xf32>
    %152 = arith.subf %150, %151 : vector<1x1xf32>
    %cst_71 = arith.constant 0.000000e+00 : f32
    %153 = vector.broadcast %cst_71 : f32 to vector<1x1xf32>
    %154 = arith.maximumf %152, %153 : vector<1x1xf32>
    %155 = vector.broadcast %142 : vector<1x1xf32> to vector<15x16xf32>
    %156 = arith.subf %133, %155 : vector<15x16xf32>
    %cst_72 = arith.constant 9.99999974E-6 : f32
    %157 = vector.broadcast %cst_72 : f32 to vector<1x1xf32>
    %158 = arith.addf %154, %157 : vector<1x1xf32>
    %159 = math.rsqrt %158 : vector<1x1xf32>
    %160 = vector.broadcast %159 : vector<1x1xf32> to vector<15x16xf32>
    %161 = arith.mulf %156, %160 : vector<15x16xf32>
    %162 = vector.broadcast %134 : vector<1x16xf32> to vector<15x16xf32>
    %163 = arith.mulf %161, %162 : vector<15x16xf32>
    %164 = vector.broadcast %135 : vector<1x16xf32> to vector<15x16xf32>
    %165 = arith.addf %163, %164 : vector<15x16xf32>
    %c0_73 = arith.constant 0 : index
    %c0_74 = arith.constant 0 : index
    %c0_75 = arith.constant 0 : index
    %166 = vector.load %arg11[%c0_73, %c0_74, %c0_75] : memref<6x16x8xbf16, #tpu.memory_space<vmem>>, vector<1x16x8xbf16>
    %167 = vector.shape_cast %166 : vector<1x16x8xbf16> to vector<16x8xbf16>
    %168 = arith.truncf %165 : vector<15x16xf32> to vector<15x16xbf16>
    %cst_76 = arith.constant dense<0.000000e+00> : vector<15x8xf32>
    %169 = tpu.matmul %168, %167, %cst_76 {dimension_numbers = #tpu.dot_dimension_numbers<[1], [0], [0], [1], [0, 0, 1, 1], [], []>} : vector<15x16xbf16>, vector<16x8xbf16>, vector<15x8xf32> -> vector<15x8xf32>
    %170 = arith.addf %55, %169 : vector<15x8xf32>
    %c0_77 = arith.constant 0 : index
    %c0_78 = arith.constant 0 : index
    %c0_79 = arith.constant 0 : index
    %171 = vector.load %arg12[%c0_77, %c0_78, %c0_79] : memref<6x1x8xf32, #tpu.memory_space<vmem>>, vector<1x1x8xf32>
    %172 = vector.shape_cast %171 : vector<1x1x8xf32> to vector<1x8xf32>
    %173 = vector.broadcast %172 : vector<1x8xf32> to vector<15x8xf32>
    %174 = arith.addf %170, %173 : vector<15x8xf32>
    %c0_80 = arith.constant 0 : index
    %c0_81 = arith.constant 0 : index
    %c0_82 = arith.constant 0 : index
    %175 = vector.load %arg13[%c0_80, %c0_81, %c0_82] : memref<6x16x8xbf16, #tpu.memory_space<vmem>>, vector<1x16x8xbf16>
    %176 = vector.shape_cast %175 : vector<1x16x8xbf16> to vector<16x8xbf16>
    %177 = arith.truncf %165 : vector<15x16xf32> to vector<15x16xbf16>
    %cst_83 = arith.constant dense<0.000000e+00> : vector<15x8xf32>
    %178 = tpu.matmul %177, %176, %cst_83 {dimension_numbers = #tpu.dot_dimension_numbers<[1], [0], [0], [1], [0, 0, 1, 1], [], []>} : vector<15x16xbf16>, vector<16x8xbf16>, vector<15x8xf32> -> vector<15x8xf32>
    %179 = arith.addf %54, %178 : vector<15x8xf32>
    %c0_84 = arith.constant 0 : index
    %c0_85 = arith.constant 0 : index
    %c0_86 = arith.constant 0 : index
    %180 = vector.load %arg14[%c0_84, %c0_85, %c0_86] : memref<6x1x8xf32, #tpu.memory_space<vmem>>, vector<1x1x8xf32>
    %181 = vector.shape_cast %180 : vector<1x1x8xf32> to vector<1x8xf32>
    %182 = vector.broadcast %181 : vector<1x8xf32> to vector<15x8xf32>
    %183 = arith.addf %179, %182 : vector<15x8xf32>
    %c1 = arith.constant 1 : index
    %c0_87 = arith.constant 0 : index
    %c0_88 = arith.constant 0 : index
    %184 = vector.load %arg9[%c1, %c0_87, %c0_88] : memref<6x6x16xf32, #tpu.memory_space<vmem>>, vector<1x6x16xf32>
    %185 = vector.shape_cast %184 : vector<1x6x16xf32> to vector<6x16xf32>
    %c1_89 = arith.constant 1 : index
    %c0_90 = arith.constant 0 : index
    %c0_91 = arith.constant 0 : index
    %186 = vector.load %arg8[%c1_89, %c0_90, %c0_91] : memref<6x8x16xbf16, #tpu.memory_space<vmem>>, vector<1x8x16xbf16>
    %187 = vector.shape_cast %186 : vector<1x8x16xbf16> to vector<8x16xbf16>
    %188 = arith.truncf %183 : vector<15x8xf32> to vector<15x8xbf16>
    %cst_92 = arith.constant dense<0.000000e+00> : vector<15x16xf32>
    %189 = tpu.matmul %188, %187, %cst_92 {dimension_numbers = #tpu.dot_dimension_numbers<[1], [0], [0], [1], [0, 0, 1, 1], [], []>} : vector<15x8xbf16>, vector<8x16xbf16>, vector<15x16xf32> -> vector<15x16xf32>
    %190 = vector.extract_strided_slice %185 {offsets = [0, 0], sizes = [1, 16], strides = [1, 1]} : vector<6x16xf32> to vector<1x16xf32>
    %191 = vector.broadcast %190 : vector<1x16xf32> to vector<15x16xf32>
    %192 = arith.addf %189, %191 : vector<15x16xf32>
    %cst_93 = arith.constant 0.000000e+00 : f32
    %193 = vector.broadcast %cst_93 : f32 to vector<15x16xf32>
    %194 = arith.cmpf oge, %192, %193 : vector<15x16xf32>
    %cst_94 = arith.constant 2.500000e-01 : f32
    %195 = vector.broadcast %cst_94 : f32 to vector<15x16xf32>
    %196 = arith.mulf %195, %192 : vector<15x16xf32>
    %197 = arith.select %194, %192, %196 : vector<15x16xi1>, vector<15x16xf32>
    %198 = vector.extract_strided_slice %185 {offsets = [1, 0], sizes = [1, 16], strides = [1, 1]} : vector<6x16xf32> to vector<1x16xf32>
    %199 = vector.extract_strided_slice %185 {offsets = [2, 0], sizes = [1, 16], strides = [1, 1]} : vector<6x16xf32> to vector<1x16xf32>
    %200 = vector.shape_cast %197 : vector<15x16xf32> to vector<1x15x16xf32>
    %cst_95 = arith.constant dense<0.000000e+00> : vector<1xf32>
    %201 = vector.multi_reduction <add>, %200, %cst_95 [1, 2] : vector<1x15x16xf32> to vector<1xf32>
    %202 = vector.shape_cast %201 : vector<1xf32> to vector<1x1x1xf32>
    %203 = vector.extract %202[0, 0, 0] : f32 from vector<1x1x1xf32>
    %204 = vector.broadcast %203 : f32 to vector<1x1xf32>
    %cst_96 = arith.constant 2.400000e+02 : f32
    %205 = vector.broadcast %cst_96 : f32 to vector<1x1xf32>
    %206 = arith.divf %204, %205 : vector<1x1xf32>
    %207 = arith.mulf %197, %197 : vector<15x16xf32>
    %208 = vector.shape_cast %207 : vector<15x16xf32> to vector<1x15x16xf32>
    %cst_97 = arith.constant dense<0.000000e+00> : vector<1xf32>
    %209 = vector.multi_reduction <add>, %208, %cst_97 [1, 2] : vector<1x15x16xf32> to vector<1xf32>
    %210 = vector.shape_cast %209 : vector<1xf32> to vector<1x1x1xf32>
    %211 = vector.extract %210[0, 0, 0] : f32 from vector<1x1x1xf32>
    %212 = vector.broadcast %211 : f32 to vector<1x1xf32>
    %cst_98 = arith.constant 2.400000e+02 : f32
    %213 = vector.broadcast %cst_98 : f32 to vector<1x1xf32>
    %214 = arith.divf %212, %213 : vector<1x1xf32>
    %215 = arith.mulf %206, %206 : vector<1x1xf32>
    %216 = arith.subf %214, %215 : vector<1x1xf32>
    %cst_99 = arith.constant 0.000000e+00 : f32
    %217 = vector.broadcast %cst_99 : f32 to vector<1x1xf32>
    %218 = arith.maximumf %216, %217 : vector<1x1xf32>
    %219 = vector.broadcast %206 : vector<1x1xf32> to vector<15x16xf32>
    %220 = arith.subf %197, %219 : vector<15x16xf32>
    %cst_100 = arith.constant 9.99999974E-6 : f32
    %221 = vector.broadcast %cst_100 : f32 to vector<1x1xf32>
    %222 = arith.addf %218, %221 : vector<1x1xf32>
    %223 = math.rsqrt %222 : vector<1x1xf32>
    %224 = vector.broadcast %223 : vector<1x1xf32> to vector<15x16xf32>
    %225 = arith.mulf %220, %224 : vector<15x16xf32>
    %226 = vector.broadcast %198 : vector<1x16xf32> to vector<15x16xf32>
    %227 = arith.mulf %225, %226 : vector<15x16xf32>
    %228 = vector.broadcast %199 : vector<1x16xf32> to vector<15x16xf32>
    %229 = arith.addf %227, %228 : vector<15x16xf32>
    %c1_101 = arith.constant 1 : index
    %c0_102 = arith.constant 0 : index
    %c0_103 = arith.constant 0 : index
    %230 = vector.load %arg10[%c1_101, %c0_102, %c0_103] : memref<6x3x16xf32, #tpu.memory_space<vmem>>, vector<1x3x16xf32>
    %231 = vector.shape_cast %230 : vector<1x3x16xf32> to vector<3x16xf32>
    %c0_104 = arith.constant 0 : index
    %c8_105 = arith.constant 8 : index
    %c0_106 = arith.constant 0 : index
    %232 = vector.load %arg22[%c0_104, %c8_105, %c0_106] : memref<1x27x16xf32, #tpu.memory_space<vmem>>, vector<1x15x16xf32>
    %233 = vector.shape_cast %232 : vector<1x15x16xf32> to vector<15x16xf32>
    %234 = vector.shape_cast %229 : vector<15x16xf32> to vector<1x15x16xf32>
    tpu.vector_store %arg22[%c0_104, %c8_105, %c0_106], %234 {strides = array<i32>} : memref<1x27x16xf32, #tpu.memory_space<vmem>>, vector<1x15x16xf32>,
    %235 = vector.extract_strided_slice %231 {offsets = [0, 0], sizes = [1, 16], strides = [1, 1]} : vector<3x16xf32> to vector<1x16xf32>
    %c0_107 = arith.constant 0 : index
    %c6 = arith.constant 6 : index
    %c0_108 = arith.constant 0 : index
    %236 = vector.load %arg22[%c0_107, %c6, %c0_108] : memref<1x27x16xf32, #tpu.memory_space<vmem>>, vector<1x15x16xf32>
    %237 = vector.shape_cast %236 : vector<1x15x16xf32> to vector<15x16xf32>
    %238 = vector.broadcast %235 : vector<1x16xf32> to vector<15x16xf32>
    %239 = arith.mulf %238, %237 : vector<15x16xf32>
    %240 = vector.extract_strided_slice %231 {offsets = [1, 0], sizes = [1, 16], strides = [1, 1]} : vector<3x16xf32> to vector<1x16xf32>
    %c0_109 = arith.constant 0 : index
    %c8_110 = arith.constant 8 : index
    %c0_111 = arith.constant 0 : index
    %241 = vector.load %arg22[%c0_109, %c8_110, %c0_111] : memref<1x27x16xf32, #tpu.memory_space<vmem>>, vector<1x15x16xf32>
    %242 = vector.shape_cast %241 : vector<1x15x16xf32> to vector<15x16xf32>
    %243 = vector.broadcast %240 : vector<1x16xf32> to vector<15x16xf32>
    %244 = arith.mulf %243, %242 : vector<15x16xf32>
    %245 = arith.addf %239, %244 : vector<15x16xf32>
    %246 = vector.extract_strided_slice %231 {offsets = [2, 0], sizes = [1, 16], strides = [1, 1]} : vector<3x16xf32> to vector<1x16xf32>
    %c0_112 = arith.constant 0 : index
    %c10 = arith.constant 10 : index
    %c0_113 = arith.constant 0 : index
    %247 = vector.load %arg22[%c0_112, %c10, %c0_113] : memref<1x27x16xf32, #tpu.memory_space<vmem>>, vector<1x15x16xf32>
    %248 = vector.shape_cast %247 : vector<1x15x16xf32> to vector<15x16xf32>
    %249 = vector.broadcast %246 : vector<1x16xf32> to vector<15x16xf32>
    %250 = arith.mulf %249, %248 : vector<15x16xf32>
    %251 = arith.addf %245, %250 : vector<15x16xf32>
    %c0_114 = arith.constant 0 : index
    %c0_115 = arith.constant 0 : index
    %252 = vector.load %arg21[%c0_114, %c0_115] : memref<15x16xf32, #tpu.memory_space<vmem>>, vector<15x16xf32>
    tpu.vector_store %arg21[%c0_114, %c0_115], %251 {strides = array<i32>} : memref<15x16xf32, #tpu.memory_space<vmem>>, vector<15x16xf32>,
    %c0_116 = arith.constant 0 : index
    %c0_117 = arith.constant 0 : index
    %253 = vector.load %arg21[%c0_116, %c0_117] : memref<15x16xf32, #tpu.memory_space<vmem>>, vector<15x16xf32>
    %254 = vector.extract_strided_slice %185 {offsets = [3, 0], sizes = [1, 16], strides = [1, 1]} : vector<6x16xf32> to vector<1x16xf32>
    %255 = vector.broadcast %254 : vector<1x16xf32> to vector<15x16xf32>
    %256 = arith.addf %253, %255 : vector<15x16xf32>
    %cst_118 = arith.constant 0.000000e+00 : f32
    %257 = vector.broadcast %cst_118 : f32 to vector<15x16xf32>
    %258 = arith.cmpf oge, %256, %257 : vector<15x16xf32>
    %cst_119 = arith.constant 2.500000e-01 : f32
    %259 = vector.broadcast %cst_119 : f32 to vector<15x16xf32>
    %260 = arith.mulf %259, %256 : vector<15x16xf32>
    %261 = arith.select %258, %256, %260 : vector<15x16xi1>, vector<15x16xf32>
    %262 = vector.extract_strided_slice %185 {offsets = [4, 0], sizes = [1, 16], strides = [1, 1]} : vector<6x16xf32> to vector<1x16xf32>
    %263 = vector.extract_strided_slice %185 {offsets = [5, 0], sizes = [1, 16], strides = [1, 1]} : vector<6x16xf32> to vector<1x16xf32>
    %264 = vector.shape_cast %261 : vector<15x16xf32> to vector<1x15x16xf32>
    %cst_120 = arith.constant dense<0.000000e+00> : vector<1xf32>
    %265 = vector.multi_reduction <add>, %264, %cst_120 [1, 2] : vector<1x15x16xf32> to vector<1xf32>
    %266 = vector.shape_cast %265 : vector<1xf32> to vector<1x1x1xf32>
    %267 = vector.extract %266[0, 0, 0] : f32 from vector<1x1x1xf32>
    %268 = vector.broadcast %267 : f32 to vector<1x1xf32>
    %cst_121 = arith.constant 2.400000e+02 : f32
    %269 = vector.broadcast %cst_121 : f32 to vector<1x1xf32>
    %270 = arith.divf %268, %269 : vector<1x1xf32>
    %271 = arith.mulf %261, %261 : vector<15x16xf32>
    %272 = vector.shape_cast %271 : vector<15x16xf32> to vector<1x15x16xf32>
    %cst_122 = arith.constant dense<0.000000e+00> : vector<1xf32>
    %273 = vector.multi_reduction <add>, %272, %cst_122 [1, 2] : vector<1x15x16xf32> to vector<1xf32>
    %274 = vector.shape_cast %273 : vector<1xf32> to vector<1x1x1xf32>
    %275 = vector.extract %274[0, 0, 0] : f32 from vector<1x1x1xf32>
    %276 = vector.broadcast %275 : f32 to vector<1x1xf32>
    %cst_123 = arith.constant 2.400000e+02 : f32
    %277 = vector.broadcast %cst_123 : f32 to vector<1x1xf32>
    %278 = arith.divf %276, %277 : vector<1x1xf32>
    %279 = arith.mulf %270, %270 : vector<1x1xf32>
    %280 = arith.subf %278, %279 : vector<1x1xf32>
    %cst_124 = arith.constant 0.000000e+00 : f32
    %281 = vector.broadcast %cst_124 : f32 to vector<1x1xf32>
    %282 = arith.maximumf %280, %281 : vector<1x1xf32>
    %283 = vector.broadcast %270 : vector<1x1xf32> to vector<15x16xf32>
    %284 = arith.subf %261, %283 : vector<15x16xf32>
    %cst_125 = arith.constant 9.99999974E-6 : f32
    %285 = vector.broadcast %cst_125 : f32 to vector<1x1xf32>
    %286 = arith.addf %282, %285 : vector<1x1xf32>
    %287 = math.rsqrt %286 : vector<1x1xf32>
    %288 = vector.broadcast %287 : vector<1x1xf32> to vector<15x16xf32>
    %289 = arith.mulf %284, %288 : vector<15x16xf32>
    %290 = vector.broadcast %262 : vector<1x16xf32> to vector<15x16xf32>
    %291 = arith.mulf %289, %290 : vector<15x16xf32>
    %292 = vector.broadcast %263 : vector<1x16xf32> to vector<15x16xf32>
    %293 = arith.addf %291, %292 : vector<15x16xf32>
    %c1_126 = arith.constant 1 : index
    %c0_127 = arith.constant 0 : index
    %c0_128 = arith.constant 0 : index
    %294 = vector.load %arg11[%c1_126, %c0_127, %c0_128] : memref<6x16x8xbf16, #tpu.memory_space<vmem>>, vector<1x16x8xbf16>
    %295 = vector.shape_cast %294 : vector<1x16x8xbf16> to vector<16x8xbf16>
    %296 = arith.truncf %293 : vector<15x16xf32> to vector<15x16xbf16>
    %cst_129 = arith.constant dense<0.000000e+00> : vector<15x8xf32>
    %297 = tpu.matmul %296, %295, %cst_129 {dimension_numbers = #tpu.dot_dimension_numbers<[1], [0], [0], [1], [0, 0, 1, 1], [], []>} : vector<15x16xbf16>, vector<16x8xbf16>, vector<15x8xf32> -> vector<15x8xf32>
    %298 = arith.addf %174, %297 : vector<15x8xf32>
    %c1_130 = arith.constant 1 : index
    %c0_131 = arith.constant 0 : index
    %c0_132 = arith.constant 0 : index
    %299 = vector.load %arg12[%c1_130, %c0_131, %c0_132] : memref<6x1x8xf32, #tpu.memory_space<vmem>>, vector<1x1x8xf32>
    %300 = vector.shape_cast %299 : vector<1x1x8xf32> to vector<1x8xf32>
    %301 = vector.broadcast %300 : vector<1x8xf32> to vector<15x8xf32>
    %302 = arith.addf %298, %301 : vector<15x8xf32>
    %c1_133 = arith.constant 1 : index
    %c0_134 = arith.constant 0 : index
    %c0_135 = arith.constant 0 : index
    %303 = vector.load %arg13[%c1_133, %c0_134, %c0_135] : memref<6x16x8xbf16, #tpu.memory_space<vmem>>, vector<1x16x8xbf16>
    %304 = vector.shape_cast %303 : vector<1x16x8xbf16> to vector<16x8xbf16>
    %305 = arith.truncf %293 : vector<15x16xf32> to vector<15x16xbf16>
    %cst_136 = arith.constant dense<0.000000e+00> : vector<15x8xf32>
    %306 = tpu.matmul %305, %304, %cst_136 {dimension_numbers = #tpu.dot_dimension_numbers<[1], [0], [0], [1], [0, 0, 1, 1], [], []>} : vector<15x16xbf16>, vector<16x8xbf16>, vector<15x8xf32> -> vector<15x8xf32>
    %307 = arith.addf %183, %306 : vector<15x8xf32>
    %c1_137 = arith.constant 1 : index
    %c0_138 = arith.constant 0 : index
    %c0_139 = arith.constant 0 : index
    %308 = vector.load %arg14[%c1_137, %c0_138, %c0_139] : memref<6x1x8xf32, #tpu.memory_space<vmem>>, vector<1x1x8xf32>
    %309 = vector.shape_cast %308 : vector<1x1x8xf32> to vector<1x8xf32>
    %310 = vector.broadcast %309 : vector<1x8xf32> to vector<15x8xf32>
    %311 = arith.addf %307, %310 : vector<15x8xf32>
    %c2 = arith.constant 2 : index
    %c0_140 = arith.constant 0 : index
    %c0_141 = arith.constant 0 : index
    %312 = vector.load %arg9[%c2, %c0_140, %c0_141] : memref<6x6x16xf32, #tpu.memory_space<vmem>>, vector<1x6x16xf32>
    %313 = vector.shape_cast %312 : vector<1x6x16xf32> to vector<6x16xf32>
    %c2_142 = arith.constant 2 : index
    %c0_143 = arith.constant 0 : index
    %c0_144 = arith.constant 0 : index
    %314 = vector.load %arg8[%c2_142, %c0_143, %c0_144] : memref<6x8x16xbf16, #tpu.memory_space<vmem>>, vector<1x8x16xbf16>
    %315 = vector.shape_cast %314 : vector<1x8x16xbf16> to vector<8x16xbf16>
    %316 = arith.truncf %311 : vector<15x8xf32> to vector<15x8xbf16>
    %cst_145 = arith.constant dense<0.000000e+00> : vector<15x16xf32>
    %317 = tpu.matmul %316, %315, %cst_145 {dimension_numbers = #tpu.dot_dimension_numbers<[1], [0], [0], [1], [0, 0, 1, 1], [], []>} : vector<15x8xbf16>, vector<8x16xbf16>, vector<15x16xf32> -> vector<15x16xf32>
    %318 = vector.extract_strided_slice %313 {offsets = [0, 0], sizes = [1, 16], strides = [1, 1]} : vector<6x16xf32> to vector<1x16xf32>
    %319 = vector.broadcast %318 : vector<1x16xf32> to vector<15x16xf32>
    %320 = arith.addf %317, %319 : vector<15x16xf32>
    %cst_146 = arith.constant 0.000000e+00 : f32
    %321 = vector.broadcast %cst_146 : f32 to vector<15x16xf32>
    %322 = arith.cmpf oge, %320, %321 : vector<15x16xf32>
    %cst_147 = arith.constant 2.500000e-01 : f32
    %323 = vector.broadcast %cst_147 : f32 to vector<15x16xf32>
    %324 = arith.mulf %323, %320 : vector<15x16xf32>
    %325 = arith.select %322, %320, %324 : vector<15x16xi1>, vector<15x16xf32>
    %326 = vector.extract_strided_slice %313 {offsets = [1, 0], sizes = [1, 16], strides = [1, 1]} : vector<6x16xf32> to vector<1x16xf32>
    %327 = vector.extract_strided_slice %313 {offsets = [2, 0], sizes = [1, 16], strides = [1, 1]} : vector<6x16xf32> to vector<1x16xf32>
    %328 = vector.shape_cast %325 : vector<15x16xf32> to vector<1x15x16xf32>
    %cst_148 = arith.constant dense<0.000000e+00> : vector<1xf32>
    %329 = vector.multi_reduction <add>, %328, %cst_148 [1, 2] : vector<1x15x16xf32> to vector<1xf32>
    %330 = vector.shape_cast %329 : vector<1xf32> to vector<1x1x1xf32>
    %331 = vector.extract %330[0, 0, 0] : f32 from vector<1x1x1xf32>
    %332 = vector.broadcast %331 : f32 to vector<1x1xf32>
    %cst_149 = arith.constant 2.400000e+02 : f32
    %333 = vector.broadcast %cst_149 : f32 to vector<1x1xf32>
    %334 = arith.divf %332, %333 : vector<1x1xf32>
    %335 = arith.mulf %325, %325 : vector<15x16xf32>
    %336 = vector.shape_cast %335 : vector<15x16xf32> to vector<1x15x16xf32>
    %cst_150 = arith.constant dense<0.000000e+00> : vector<1xf32>
    %337 = vector.multi_reduction <add>, %336, %cst_150 [1, 2] : vector<1x15x16xf32> to vector<1xf32>
    %338 = vector.shape_cast %337 : vector<1xf32> to vector<1x1x1xf32>
    %339 = vector.extract %338[0, 0, 0] : f32 from vector<1x1x1xf32>
    %340 = vector.broadcast %339 : f32 to vector<1x1xf32>
    %cst_151 = arith.constant 2.400000e+02 : f32
    %341 = vector.broadcast %cst_151 : f32 to vector<1x1xf32>
    %342 = arith.divf %340, %341 : vector<1x1xf32>
    %343 = arith.mulf %334, %334 : vector<1x1xf32>
    %344 = arith.subf %342, %343 : vector<1x1xf32>
    %cst_152 = arith.constant 0.000000e+00 : f32
    %345 = vector.broadcast %cst_152 : f32 to vector<1x1xf32>
    %346 = arith.maximumf %344, %345 : vector<1x1xf32>
    %347 = vector.broadcast %334 : vector<1x1xf32> to vector<15x16xf32>
    %348 = arith.subf %325, %347 : vector<15x16xf32>
    %cst_153 = arith.constant 9.99999974E-6 : f32
    %349 = vector.broadcast %cst_153 : f32 to vector<1x1xf32>
    %350 = arith.addf %346, %349 : vector<1x1xf32>
    %351 = math.rsqrt %350 : vector<1x1xf32>
    %352 = vector.broadcast %351 : vector<1x1xf32> to vector<15x16xf32>
    %353 = arith.mulf %348, %352 : vector<15x16xf32>
    %354 = vector.broadcast %326 : vector<1x16xf32> to vector<15x16xf32>
    %355 = arith.mulf %353, %354 : vector<15x16xf32>
    %356 = vector.broadcast %327 : vector<1x16xf32> to vector<15x16xf32>
    %357 = arith.addf %355, %356 : vector<15x16xf32>
    %c2_154 = arith.constant 2 : index
    %c0_155 = arith.constant 0 : index
    %c0_156 = arith.constant 0 : index
    %358 = vector.load %arg10[%c2_154, %c0_155, %c0_156] : memref<6x3x16xf32, #tpu.memory_space<vmem>>, vector<1x3x16xf32>
    %359 = vector.shape_cast %358 : vector<1x3x16xf32> to vector<3x16xf32>
    %c0_157 = arith.constant 0 : index
    %c8_158 = arith.constant 8 : index
    %c0_159 = arith.constant 0 : index
    %360 = vector.load %arg22[%c0_157, %c8_158, %c0_159] : memref<1x27x16xf32, #tpu.memory_space<vmem>>, vector<1x15x16xf32>
    %361 = vector.shape_cast %360 : vector<1x15x16xf32> to vector<15x16xf32>
    %362 = vector.shape_cast %357 : vector<15x16xf32> to vector<1x15x16xf32>
    tpu.vector_store %arg22[%c0_157, %c8_158, %c0_159], %362 {strides = array<i32>} : memref<1x27x16xf32, #tpu.memory_space<vmem>>, vector<1x15x16xf32>,
    %363 = vector.extract_strided_slice %359 {offsets = [0, 0], sizes = [1, 16], strides = [1, 1]} : vector<3x16xf32> to vector<1x16xf32>
    %c0_160 = arith.constant 0 : index
    %c4 = arith.constant 4 : index
    %c0_161 = arith.constant 0 : index
    %364 = vector.load %arg22[%c0_160, %c4, %c0_161] : memref<1x27x16xf32, #tpu.memory_space<vmem>>, vector<1x15x16xf32>
    %365 = vector.shape_cast %364 : vector<1x15x16xf32> to vector<15x16xf32>
    %366 = vector.broadcast %363 : vector<1x16xf32> to vector<15x16xf32>
    %367 = arith.mulf %366, %365 : vector<15x16xf32>
    %368 = vector.extract_strided_slice %359 {offsets = [1, 0], sizes = [1, 16], strides = [1, 1]} : vector<3x16xf32> to vector<1x16xf32>
    %c0_162 = arith.constant 0 : index
    %c8_163 = arith.constant 8 : index
    %c0_164 = arith.constant 0 : index
    %369 = vector.load %arg22[%c0_162, %c8_163, %c0_164] : memref<1x27x16xf32, #tpu.memory_space<vmem>>, vector<1x15x16xf32>
    %370 = vector.shape_cast %369 : vector<1x15x16xf32> to vector<15x16xf32>
    %371 = vector.broadcast %368 : vector<1x16xf32> to vector<15x16xf32>
    %372 = arith.mulf %371, %370 : vector<15x16xf32>
    %373 = arith.addf %367, %372 : vector<15x16xf32>
    %374 = vector.extract_strided_slice %359 {offsets = [2, 0], sizes = [1, 16], strides = [1, 1]} : vector<3x16xf32> to vector<1x16xf32>
    %c0_165 = arith.constant 0 : index
    %c12 = arith.constant 12 : index
    %c0_166 = arith.constant 0 : index
    %375 = vector.load %arg22[%c0_165, %c12, %c0_166] : memref<1x27x16xf32, #tpu.memory_space<vmem>>, vector<1x15x16xf32>
    %376 = vector.shape_cast %375 : vector<1x15x16xf32> to vector<15x16xf32>
    %377 = vector.broadcast %374 : vector<1x16xf32> to vector<15x16xf32>
    %378 = arith.mulf %377, %376 : vector<15x16xf32>
    %379 = arith.addf %373, %378 : vector<15x16xf32>
    %c0_167 = arith.constant 0 : index
    %c0_168 = arith.constant 0 : index
    %380 = vector.load %arg21[%c0_167, %c0_168] : memref<15x16xf32, #tpu.memory_space<vmem>>, vector<15x16xf32>
    tpu.vector_store %arg21[%c0_167, %c0_168], %379 {strides = array<i32>} : memref<15x16xf32, #tpu.memory_space<vmem>>, vector<15x16xf32>,
    %c0_169 = arith.constant 0 : index
    %c0_170 = arith.constant 0 : index
    %381 = vector.load %arg21[%c0_169, %c0_170] : memref<15x16xf32, #tpu.memory_space<vmem>>, vector<15x16xf32>
    %382 = vector.extract_strided_slice %313 {offsets = [3, 0], sizes = [1, 16], strides = [1, 1]} : vector<6x16xf32> to vector<1x16xf32>
    %383 = vector.broadcast %382 : vector<1x16xf32> to vector<15x16xf32>
    %384 = arith.addf %381, %383 : vector<15x16xf32>
    %cst_171 = arith.constant 0.000000e+00 : f32
    %385 = vector.broadcast %cst_171 : f32 to vector<15x16xf32>
    %386 = arith.cmpf oge, %384, %385 : vector<15x16xf32>
    %cst_172 = arith.constant 2.500000e-01 : f32
    %387 = vector.broadcast %cst_172 : f32 to vector<15x16xf32>
    %388 = arith.mulf %387, %384 : vector<15x16xf32>
    %389 = arith.select %386, %384, %388 : vector<15x16xi1>, vector<15x16xf32>
    %390 = vector.extract_strided_slice %313 {offsets = [4, 0], sizes = [1, 16], strides = [1, 1]} : vector<6x16xf32> to vector<1x16xf32>
    %391 = vector.extract_strided_slice %313 {offsets = [5, 0], sizes = [1, 16], strides = [1, 1]} : vector<6x16xf32> to vector<1x16xf32>
    %392 = vector.shape_cast %389 : vector<15x16xf32> to vector<1x15x16xf32>
    %cst_173 = arith.constant dense<0.000000e+00> : vector<1xf32>
    %393 = vector.multi_reduction <add>, %392, %cst_173 [1, 2] : vector<1x15x16xf32> to vector<1xf32>
    %394 = vector.shape_cast %393 : vector<1xf32> to vector<1x1x1xf32>
    %395 = vector.extract %394[0, 0, 0] : f32 from vector<1x1x1xf32>
    %396 = vector.broadcast %395 : f32 to vector<1x1xf32>
    %cst_174 = arith.constant 2.400000e+02 : f32
    %397 = vector.broadcast %cst_174 : f32 to vector<1x1xf32>
    %398 = arith.divf %396, %397 : vector<1x1xf32>
    %399 = arith.mulf %389, %389 : vector<15x16xf32>
    %400 = vector.shape_cast %399 : vector<15x16xf32> to vector<1x15x16xf32>
    %cst_175 = arith.constant dense<0.000000e+00> : vector<1xf32>
    %401 = vector.multi_reduction <add>, %400, %cst_175 [1, 2] : vector<1x15x16xf32> to vector<1xf32>
    %402 = vector.shape_cast %401 : vector<1xf32> to vector<1x1x1xf32>
    %403 = vector.extract %402[0, 0, 0] : f32 from vector<1x1x1xf32>
    %404 = vector.broadcast %403 : f32 to vector<1x1xf32>
    %cst_176 = arith.constant 2.400000e+02 : f32
    %405 = vector.broadcast %cst_176 : f32 to vector<1x1xf32>
    %406 = arith.divf %404, %405 : vector<1x1xf32>
    %407 = arith.mulf %398, %398 : vector<1x1xf32>
    %408 = arith.subf %406, %407 : vector<1x1xf32>
    %cst_177 = arith.constant 0.000000e+00 : f32
    %409 = vector.broadcast %cst_177 : f32 to vector<1x1xf32>
    %410 = arith.maximumf %408, %409 : vector<1x1xf32>
    %411 = vector.broadcast %398 : vector<1x1xf32> to vector<15x16xf32>
    %412 = arith.subf %389, %411 : vector<15x16xf32>
    %cst_178 = arith.constant 9.99999974E-6 : f32
    %413 = vector.broadcast %cst_178 : f32 to vector<1x1xf32>
    %414 = arith.addf %410, %413 : vector<1x1xf32>
    %415 = math.rsqrt %414 : vector<1x1xf32>
    %416 = vector.broadcast %415 : vector<1x1xf32> to vector<15x16xf32>
    %417 = arith.mulf %412, %416 : vector<15x16xf32>
    %418 = vector.broadcast %390 : vector<1x16xf32> to vector<15x16xf32>
    %419 = arith.mulf %417, %418 : vector<15x16xf32>
    %420 = vector.broadcast %391 : vector<1x16xf32> to vector<15x16xf32>
    %421 = arith.addf %419, %420 : vector<15x16xf32>
    %c2_179 = arith.constant 2 : index
    %c0_180 = arith.constant 0 : index
    %c0_181 = arith.constant 0 : index
    %422 = vector.load %arg11[%c2_179, %c0_180, %c0_181] : memref<6x16x8xbf16, #tpu.memory_space<vmem>>, vector<1x16x8xbf16>
    %423 = vector.shape_cast %422 : vector<1x16x8xbf16> to vector<16x8xbf16>
    %424 = arith.truncf %421 : vector<15x16xf32> to vector<15x16xbf16>
    %cst_182 = arith.constant dense<0.000000e+00> : vector<15x8xf32>
    %425 = tpu.matmul %424, %423, %cst_182 {dimension_numbers = #tpu.dot_dimension_numbers<[1], [0], [0], [1], [0, 0, 1, 1], [], []>} : vector<15x16xbf16>, vector<16x8xbf16>, vector<15x8xf32> -> vector<15x8xf32>
    %426 = arith.addf %302, %425 : vector<15x8xf32>
    %c2_183 = arith.constant 2 : index
    %c0_184 = arith.constant 0 : index
    %c0_185 = arith.constant 0 : index
    %427 = vector.load %arg12[%c2_183, %c0_184, %c0_185] : memref<6x1x8xf32, #tpu.memory_space<vmem>>, vector<1x1x8xf32>
    %428 = vector.shape_cast %427 : vector<1x1x8xf32> to vector<1x8xf32>
    %429 = vector.broadcast %428 : vector<1x8xf32> to vector<15x8xf32>
    %430 = arith.addf %426, %429 : vector<15x8xf32>
    %c2_186 = arith.constant 2 : index
    %c0_187 = arith.constant 0 : index
    %c0_188 = arith.constant 0 : index
    %431 = vector.load %arg13[%c2_186, %c0_187, %c0_188] : memref<6x16x8xbf16, #tpu.memory_space<vmem>>, vector<1x16x8xbf16>
    %432 = vector.shape_cast %431 : vector<1x16x8xbf16> to vector<16x8xbf16>
    %433 = arith.truncf %421 : vector<15x16xf32> to vector<15x16xbf16>
    %cst_189 = arith.constant dense<0.000000e+00> : vector<15x8xf32>
    %434 = tpu.matmul %433, %432, %cst_189 {dimension_numbers = #tpu.dot_dimension_numbers<[1], [0], [0], [1], [0, 0, 1, 1], [], []>} : vector<15x16xbf16>, vector<16x8xbf16>, vector<15x8xf32> -> vector<15x8xf32>
    %435 = arith.addf %311, %434 : vector<15x8xf32>
    %c2_190 = arith.constant 2 : index
    %c0_191 = arith.constant 0 : index
    %c0_192 = arith.constant 0 : index
    %436 = vector.load %arg14[%c2_190, %c0_191, %c0_192] : memref<6x1x8xf32, #tpu.memory_space<vmem>>, vector<1x1x8xf32>
    %437 = vector.shape_cast %436 : vector<1x1x8xf32> to vector<1x8xf32>
    %438 = vector.broadcast %437 : vector<1x8xf32> to vector<15x8xf32>
    %439 = arith.addf %435, %438 : vector<15x8xf32>
    %c3 = arith.constant 3 : index
    %c0_193 = arith.constant 0 : index
    %c0_194 = arith.constant 0 : index
    %440 = vector.load %arg9[%c3, %c0_193, %c0_194] : memref<6x6x16xf32, #tpu.memory_space<vmem>>, vector<1x6x16xf32>
    %441 = vector.shape_cast %440 : vector<1x6x16xf32> to vector<6x16xf32>
    %c3_195 = arith.constant 3 : index
    %c0_196 = arith.constant 0 : index
    %c0_197 = arith.constant 0 : index
    %442 = vector.load %arg8[%c3_195, %c0_196, %c0_197] : memref<6x8x16xbf16, #tpu.memory_space<vmem>>, vector<1x8x16xbf16>
    %443 = vector.shape_cast %442 : vector<1x8x16xbf16> to vector<8x16xbf16>
    %444 = arith.truncf %439 : vector<15x8xf32> to vector<15x8xbf16>
    %cst_198 = arith.constant dense<0.000000e+00> : vector<15x16xf32>
    %445 = tpu.matmul %444, %443, %cst_198 {dimension_numbers = #tpu.dot_dimension_numbers<[1], [0], [0], [1], [0, 0, 1, 1], [], []>} : vector<15x8xbf16>, vector<8x16xbf16>, vector<15x16xf32> -> vector<15x16xf32>
    %446 = vector.extract_strided_slice %441 {offsets = [0, 0], sizes = [1, 16], strides = [1, 1]} : vector<6x16xf32> to vector<1x16xf32>
    %447 = vector.broadcast %446 : vector<1x16xf32> to vector<15x16xf32>
    %448 = arith.addf %445, %447 : vector<15x16xf32>
    %cst_199 = arith.constant 0.000000e+00 : f32
    %449 = vector.broadcast %cst_199 : f32 to vector<15x16xf32>
    %450 = arith.cmpf oge, %448, %449 : vector<15x16xf32>
    %cst_200 = arith.constant 2.500000e-01 : f32
    %451 = vector.broadcast %cst_200 : f32 to vector<15x16xf32>
    %452 = arith.mulf %451, %448 : vector<15x16xf32>
    %453 = arith.select %450, %448, %452 : vector<15x16xi1>, vector<15x16xf32>
    %454 = vector.extract_strided_slice %441 {offsets = [1, 0], sizes = [1, 16], strides = [1, 1]} : vector<6x16xf32> to vector<1x16xf32>
    %455 = vector.extract_strided_slice %441 {offsets = [2, 0], sizes = [1, 16], strides = [1, 1]} : vector<6x16xf32> to vector<1x16xf32>
    %456 = vector.shape_cast %453 : vector<15x16xf32> to vector<1x15x16xf32>
    %cst_201 = arith.constant dense<0.000000e+00> : vector<1xf32>
    %457 = vector.multi_reduction <add>, %456, %cst_201 [1, 2] : vector<1x15x16xf32> to vector<1xf32>
    %458 = vector.shape_cast %457 : vector<1xf32> to vector<1x1x1xf32>
    %459 = vector.extract %458[0, 0, 0] : f32 from vector<1x1x1xf32>
    %460 = vector.broadcast %459 : f32 to vector<1x1xf32>
    %cst_202 = arith.constant 2.400000e+02 : f32
    %461 = vector.broadcast %cst_202 : f32 to vector<1x1xf32>
    %462 = arith.divf %460, %461 : vector<1x1xf32>
    %463 = arith.mulf %453, %453 : vector<15x16xf32>
    %464 = vector.shape_cast %463 : vector<15x16xf32> to vector<1x15x16xf32>
    %cst_203 = arith.constant dense<0.000000e+00> : vector<1xf32>
    %465 = vector.multi_reduction <add>, %464, %cst_203 [1, 2] : vector<1x15x16xf32> to vector<1xf32>
    %466 = vector.shape_cast %465 : vector<1xf32> to vector<1x1x1xf32>
    %467 = vector.extract %466[0, 0, 0] : f32 from vector<1x1x1xf32>
    %468 = vector.broadcast %467 : f32 to vector<1x1xf32>
    %cst_204 = arith.constant 2.400000e+02 : f32
    %469 = vector.broadcast %cst_204 : f32 to vector<1x1xf32>
    %470 = arith.divf %468, %469 : vector<1x1xf32>
    %471 = arith.mulf %462, %462 : vector<1x1xf32>
    %472 = arith.subf %470, %471 : vector<1x1xf32>
    %cst_205 = arith.constant 0.000000e+00 : f32
    %473 = vector.broadcast %cst_205 : f32 to vector<1x1xf32>
    %474 = arith.maximumf %472, %473 : vector<1x1xf32>
    %475 = vector.broadcast %462 : vector<1x1xf32> to vector<15x16xf32>
    %476 = arith.subf %453, %475 : vector<15x16xf32>
    %cst_206 = arith.constant 9.99999974E-6 : f32
    %477 = vector.broadcast %cst_206 : f32 to vector<1x1xf32>
    %478 = arith.addf %474, %477 : vector<1x1xf32>
    %479 = math.rsqrt %478 : vector<1x1xf32>
    %480 = vector.broadcast %479 : vector<1x1xf32> to vector<15x16xf32>
    %481 = arith.mulf %476, %480 : vector<15x16xf32>
    %482 = vector.broadcast %454 : vector<1x16xf32> to vector<15x16xf32>
    %483 = arith.mulf %481, %482 : vector<15x16xf32>
    %484 = vector.broadcast %455 : vector<1x16xf32> to vector<15x16xf32>
    %485 = arith.addf %483, %484 : vector<15x16xf32>
    %c3_207 = arith.constant 3 : index
    %c0_208 = arith.constant 0 : index
    %c0_209 = arith.constant 0 : index
    %486 = vector.load %arg10[%c3_207, %c0_208, %c0_209] : memref<6x3x16xf32, #tpu.memory_space<vmem>>, vector<1x3x16xf32>
    %487 = vector.shape_cast %486 : vector<1x3x16xf32> to vector<3x16xf32>
    %c0_210 = arith.constant 0 : index
    %c8_211 = arith.constant 8 : index
    %c0_212 = arith.constant 0 : index
    %488 = vector.load %arg22[%c0_210, %c8_211, %c0_212] : memref<1x27x16xf32, #tpu.memory_space<vmem>>, vector<1x15x16xf32>
    %489 = vector.shape_cast %488 : vector<1x15x16xf32> to vector<15x16xf32>
    %490 = vector.shape_cast %485 : vector<15x16xf32> to vector<1x15x16xf32>
    tpu.vector_store %arg22[%c0_210, %c8_211, %c0_212], %490 {strides = array<i32>} : memref<1x27x16xf32, #tpu.memory_space<vmem>>, vector<1x15x16xf32>,
    %491 = vector.extract_strided_slice %487 {offsets = [0, 0], sizes = [1, 16], strides = [1, 1]} : vector<3x16xf32> to vector<1x16xf32>
    %c0_213 = arith.constant 0 : index
    %c7_214 = arith.constant 7 : index
    %c0_215 = arith.constant 0 : index
    %492 = vector.load %arg22[%c0_213, %c7_214, %c0_215] : memref<1x27x16xf32, #tpu.memory_space<vmem>>, vector<1x15x16xf32>
    %493 = vector.shape_cast %492 : vector<1x15x16xf32> to vector<15x16xf32>
    %494 = vector.broadcast %491 : vector<1x16xf32> to vector<15x16xf32>
    %495 = arith.mulf %494, %493 : vector<15x16xf32>
    %496 = vector.extract_strided_slice %487 {offsets = [1, 0], sizes = [1, 16], strides = [1, 1]} : vector<3x16xf32> to vector<1x16xf32>
    %c0_216 = arith.constant 0 : index
    %c8_217 = arith.constant 8 : index
    %c0_218 = arith.constant 0 : index
    %497 = vector.load %arg22[%c0_216, %c8_217, %c0_218] : memref<1x27x16xf32, #tpu.memory_space<vmem>>, vector<1x15x16xf32>
    %498 = vector.shape_cast %497 : vector<1x15x16xf32> to vector<15x16xf32>
    %499 = vector.broadcast %496 : vector<1x16xf32> to vector<15x16xf32>
    %500 = arith.mulf %499, %498 : vector<15x16xf32>
    %501 = arith.addf %495, %500 : vector<15x16xf32>
    %502 = vector.extract_strided_slice %487 {offsets = [2, 0], sizes = [1, 16], strides = [1, 1]} : vector<3x16xf32> to vector<1x16xf32>
    %c0_219 = arith.constant 0 : index
    %c9_220 = arith.constant 9 : index
    %c0_221 = arith.constant 0 : index
    %503 = vector.load %arg22[%c0_219, %c9_220, %c0_221] : memref<1x27x16xf32, #tpu.memory_space<vmem>>, vector<1x15x16xf32>
    %504 = vector.shape_cast %503 : vector<1x15x16xf32> to vector<15x16xf32>
    %505 = vector.broadcast %502 : vector<1x16xf32> to vector<15x16xf32>
    %506 = arith.mulf %505, %504 : vector<15x16xf32>
    %507 = arith.addf %501, %506 : vector<15x16xf32>
    %c0_222 = arith.constant 0 : index
    %c0_223 = arith.constant 0 : index
    %508 = vector.load %arg21[%c0_222, %c0_223] : memref<15x16xf32, #tpu.memory_space<vmem>>, vector<15x16xf32>
    tpu.vector_store %arg21[%c0_222, %c0_223], %507 {strides = array<i32>} : memref<15x16xf32, #tpu.memory_space<vmem>>, vector<15x16xf32>,
    %c0_224 = arith.constant 0 : index
    %c0_225 = arith.constant 0 : index
    %509 = vector.load %arg21[%c0_224, %c0_225] : memref<15x16xf32, #tpu.memory_space<vmem>>, vector<15x16xf32>
    %510 = vector.extract_strided_slice %441 {offsets = [3, 0], sizes = [1, 16], strides = [1, 1]} : vector<6x16xf32> to vector<1x16xf32>
    %511 = vector.broadcast %510 : vector<1x16xf32> to vector<15x16xf32>
    %512 = arith.addf %509, %511 : vector<15x16xf32>
    %cst_226 = arith.constant 0.000000e+00 : f32
    %513 = vector.broadcast %cst_226 : f32 to vector<15x16xf32>
    %514 = arith.cmpf oge, %512, %513 : vector<15x16xf32>
    %cst_227 = arith.constant 2.500000e-01 : f32
    %515 = vector.broadcast %cst_227 : f32 to vector<15x16xf32>
    %516 = arith.mulf %515, %512 : vector<15x16xf32>
    %517 = arith.select %514, %512, %516 : vector<15x16xi1>, vector<15x16xf32>
    %518 = vector.extract_strided_slice %441 {offsets = [4, 0], sizes = [1, 16], strides = [1, 1]} : vector<6x16xf32> to vector<1x16xf32>
    %519 = vector.extract_strided_slice %441 {offsets = [5, 0], sizes = [1, 16], strides = [1, 1]} : vector<6x16xf32> to vector<1x16xf32>
    %520 = vector.shape_cast %517 : vector<15x16xf32> to vector<1x15x16xf32>
    %cst_228 = arith.constant dense<0.000000e+00> : vector<1xf32>
    %521 = vector.multi_reduction <add>, %520, %cst_228 [1, 2] : vector<1x15x16xf32> to vector<1xf32>
    %522 = vector.shape_cast %521 : vector<1xf32> to vector<1x1x1xf32>
    %523 = vector.extract %522[0, 0, 0] : f32 from vector<1x1x1xf32>
    %524 = vector.broadcast %523 : f32 to vector<1x1xf32>
    %cst_229 = arith.constant 2.400000e+02 : f32
    %525 = vector.broadcast %cst_229 : f32 to vector<1x1xf32>
    %526 = arith.divf %524, %525 : vector<1x1xf32>
    %527 = arith.mulf %517, %517 : vector<15x16xf32>
    %528 = vector.shape_cast %527 : vector<15x16xf32> to vector<1x15x16xf32>
    %cst_230 = arith.constant dense<0.000000e+00> : vector<1xf32>
    %529 = vector.multi_reduction <add>, %528, %cst_230 [1, 2] : vector<1x15x16xf32> to vector<1xf32>
    %530 = vector.shape_cast %529 : vector<1xf32> to vector<1x1x1xf32>
    %531 = vector.extract %530[0, 0, 0] : f32 from vector<1x1x1xf32>
    %532 = vector.broadcast %531 : f32 to vector<1x1xf32>
    %cst_231 = arith.constant 2.400000e+02 : f32
    %533 = vector.broadcast %cst_231 : f32 to vector<1x1xf32>
    %534 = arith.divf %532, %533 : vector<1x1xf32>
    %535 = arith.mulf %526, %526 : vector<1x1xf32>
    %536 = arith.subf %534, %535 : vector<1x1xf32>
    %cst_232 = arith.constant 0.000000e+00 : f32
    %537 = vector.broadcast %cst_232 : f32 to vector<1x1xf32>
    %538 = arith.maximumf %536, %537 : vector<1x1xf32>
    %539 = vector.broadcast %526 : vector<1x1xf32> to vector<15x16xf32>
    %540 = arith.subf %517, %539 : vector<15x16xf32>
    %cst_233 = arith.constant 9.99999974E-6 : f32
    %541 = vector.broadcast %cst_233 : f32 to vector<1x1xf32>
    %542 = arith.addf %538, %541 : vector<1x1xf32>
    %543 = math.rsqrt %542 : vector<1x1xf32>
    %544 = vector.broadcast %543 : vector<1x1xf32> to vector<15x16xf32>
    %545 = arith.mulf %540, %544 : vector<15x16xf32>
    %546 = vector.broadcast %518 : vector<1x16xf32> to vector<15x16xf32>
    %547 = arith.mulf %545, %546 : vector<15x16xf32>
    %548 = vector.broadcast %519 : vector<1x16xf32> to vector<15x16xf32>
    %549 = arith.addf %547, %548 : vector<15x16xf32>
    %c3_234 = arith.constant 3 : index
    %c0_235 = arith.constant 0 : index
    %c0_236 = arith.constant 0 : index
    %550 = vector.load %arg11[%c3_234, %c0_235, %c0_236] : memref<6x16x8xbf16, #tpu.memory_space<vmem>>, vector<1x16x8xbf16>
    %551 = vector.shape_cast %550 : vector<1x16x8xbf16> to vector<16x8xbf16>
    %552 = arith.truncf %549 : vector<15x16xf32> to vector<15x16xbf16>
    %cst_237 = arith.constant dense<0.000000e+00> : vector<15x8xf32>
    %553 = tpu.matmul %552, %551, %cst_237 {dimension_numbers = #tpu.dot_dimension_numbers<[1], [0], [0], [1], [0, 0, 1, 1], [], []>} : vector<15x16xbf16>, vector<16x8xbf16>, vector<15x8xf32> -> vector<15x8xf32>
    %554 = arith.addf %430, %553 : vector<15x8xf32>
    %c3_238 = arith.constant 3 : index
    %c0_239 = arith.constant 0 : index
    %c0_240 = arith.constant 0 : index
    %555 = vector.load %arg12[%c3_238, %c0_239, %c0_240] : memref<6x1x8xf32, #tpu.memory_space<vmem>>, vector<1x1x8xf32>
    %556 = vector.shape_cast %555 : vector<1x1x8xf32> to vector<1x8xf32>
    %557 = vector.broadcast %556 : vector<1x8xf32> to vector<15x8xf32>
    %558 = arith.addf %554, %557 : vector<15x8xf32>
    %c3_241 = arith.constant 3 : index
    %c0_242 = arith.constant 0 : index
    %c0_243 = arith.constant 0 : index
    %559 = vector.load %arg13[%c3_241, %c0_242, %c0_243] : memref<6x16x8xbf16, #tpu.memory_space<vmem>>, vector<1x16x8xbf16>
    %560 = vector.shape_cast %559 : vector<1x16x8xbf16> to vector<16x8xbf16>
    %561 = arith.truncf %549 : vector<15x16xf32> to vector<15x16xbf16>
    %cst_244 = arith.constant dense<0.000000e+00> : vector<15x8xf32>
    %562 = tpu.matmul %561, %560, %cst_244 {dimension_numbers = #tpu.dot_dimension_numbers<[1], [0], [0], [1], [0, 0, 1, 1], [], []>} : vector<15x16xbf16>, vector<16x8xbf16>, vector<15x8xf32> -> vector<15x8xf32>
    %563 = arith.addf %439, %562 : vector<15x8xf32>
    %c3_245 = arith.constant 3 : index
    %c0_246 = arith.constant 0 : index
    %c0_247 = arith.constant 0 : index
    %564 = vector.load %arg14[%c3_245, %c0_246, %c0_247] : memref<6x1x8xf32, #tpu.memory_space<vmem>>, vector<1x1x8xf32>
    %565 = vector.shape_cast %564 : vector<1x1x8xf32> to vector<1x8xf32>
    %566 = vector.broadcast %565 : vector<1x8xf32> to vector<15x8xf32>
    %567 = arith.addf %563, %566 : vector<15x8xf32>
    %c4_248 = arith.constant 4 : index
    %c0_249 = arith.constant 0 : index
    %c0_250 = arith.constant 0 : index
    %568 = vector.load %arg9[%c4_248, %c0_249, %c0_250] : memref<6x6x16xf32, #tpu.memory_space<vmem>>, vector<1x6x16xf32>
    %569 = vector.shape_cast %568 : vector<1x6x16xf32> to vector<6x16xf32>
    %c4_251 = arith.constant 4 : index
    %c0_252 = arith.constant 0 : index
    %c0_253 = arith.constant 0 : index
    %570 = vector.load %arg8[%c4_251, %c0_252, %c0_253] : memref<6x8x16xbf16, #tpu.memory_space<vmem>>, vector<1x8x16xbf16>
    %571 = vector.shape_cast %570 : vector<1x8x16xbf16> to vector<8x16xbf16>
    %572 = arith.truncf %567 : vector<15x8xf32> to vector<15x8xbf16>
    %cst_254 = arith.constant dense<0.000000e+00> : vector<15x16xf32>
    %573 = tpu.matmul %572, %571, %cst_254 {dimension_numbers = #tpu.dot_dimension_numbers<[1], [0], [0], [1], [0, 0, 1, 1], [], []>} : vector<15x8xbf16>, vector<8x16xbf16>, vector<15x16xf32> -> vector<15x16xf32>
    %574 = vector.extract_strided_slice %569 {offsets = [0, 0], sizes = [1, 16], strides = [1, 1]} : vector<6x16xf32> to vector<1x16xf32>
    %575 = vector.broadcast %574 : vector<1x16xf32> to vector<15x16xf32>
    %576 = arith.addf %573, %575 : vector<15x16xf32>
    %cst_255 = arith.constant 0.000000e+00 : f32
    %577 = vector.broadcast %cst_255 : f32 to vector<15x16xf32>
    %578 = arith.cmpf oge, %576, %577 : vector<15x16xf32>
    %cst_256 = arith.constant 2.500000e-01 : f32
    %579 = vector.broadcast %cst_256 : f32 to vector<15x16xf32>
    %580 = arith.mulf %579, %576 : vector<15x16xf32>
    %581 = arith.select %578, %576, %580 : vector<15x16xi1>, vector<15x16xf32>
    %582 = vector.extract_strided_slice %569 {offsets = [1, 0], sizes = [1, 16], strides = [1, 1]} : vector<6x16xf32> to vector<1x16xf32>
    %583 = vector.extract_strided_slice %569 {offsets = [2, 0], sizes = [1, 16], strides = [1, 1]} : vector<6x16xf32> to vector<1x16xf32>
    %584 = vector.shape_cast %581 : vector<15x16xf32> to vector<1x15x16xf32>
    %cst_257 = arith.constant dense<0.000000e+00> : vector<1xf32>
    %585 = vector.multi_reduction <add>, %584, %cst_257 [1, 2] : vector<1x15x16xf32> to vector<1xf32>
    %586 = vector.shape_cast %585 : vector<1xf32> to vector<1x1x1xf32>
    %587 = vector.extract %586[0, 0, 0] : f32 from vector<1x1x1xf32>
    %588 = vector.broadcast %587 : f32 to vector<1x1xf32>
    %cst_258 = arith.constant 2.400000e+02 : f32
    %589 = vector.broadcast %cst_258 : f32 to vector<1x1xf32>
    %590 = arith.divf %588, %589 : vector<1x1xf32>
    %591 = arith.mulf %581, %581 : vector<15x16xf32>
    %592 = vector.shape_cast %591 : vector<15x16xf32> to vector<1x15x16xf32>
    %cst_259 = arith.constant dense<0.000000e+00> : vector<1xf32>
    %593 = vector.multi_reduction <add>, %592, %cst_259 [1, 2] : vector<1x15x16xf32> to vector<1xf32>
    %594 = vector.shape_cast %593 : vector<1xf32> to vector<1x1x1xf32>
    %595 = vector.extract %594[0, 0, 0] : f32 from vector<1x1x1xf32>
    %596 = vector.broadcast %595 : f32 to vector<1x1xf32>
    %cst_260 = arith.constant 2.400000e+02 : f32
    %597 = vector.broadcast %cst_260 : f32 to vector<1x1xf32>
    %598 = arith.divf %596, %597 : vector<1x1xf32>
    %599 = arith.mulf %590, %590 : vector<1x1xf32>
    %600 = arith.subf %598, %599 : vector<1x1xf32>
    %cst_261 = arith.constant 0.000000e+00 : f32
    %601 = vector.broadcast %cst_261 : f32 to vector<1x1xf32>
    %602 = arith.maximumf %600, %601 : vector<1x1xf32>
    %603 = vector.broadcast %590 : vector<1x1xf32> to vector<15x16xf32>
    %604 = arith.subf %581, %603 : vector<15x16xf32>
    %cst_262 = arith.constant 9.99999974E-6 : f32
    %605 = vector.broadcast %cst_262 : f32 to vector<1x1xf32>
    %606 = arith.addf %602, %605 : vector<1x1xf32>
    %607 = math.rsqrt %606 : vector<1x1xf32>
    %608 = vector.broadcast %607 : vector<1x1xf32> to vector<15x16xf32>
    %609 = arith.mulf %604, %608 : vector<15x16xf32>
    %610 = vector.broadcast %582 : vector<1x16xf32> to vector<15x16xf32>
    %611 = arith.mulf %609, %610 : vector<15x16xf32>
    %612 = vector.broadcast %583 : vector<1x16xf32> to vector<15x16xf32>
    %613 = arith.addf %611, %612 : vector<15x16xf32>
    %c4_263 = arith.constant 4 : index
    %c0_264 = arith.constant 0 : index
    %c0_265 = arith.constant 0 : index
    %614 = vector.load %arg10[%c4_263, %c0_264, %c0_265] : memref<6x3x16xf32, #tpu.memory_space<vmem>>, vector<1x3x16xf32>
    %615 = vector.shape_cast %614 : vector<1x3x16xf32> to vector<3x16xf32>
    %c0_266 = arith.constant 0 : index
    %c8_267 = arith.constant 8 : index
    %c0_268 = arith.constant 0 : index
    %616 = vector.load %arg22[%c0_266, %c8_267, %c0_268] : memref<1x27x16xf32, #tpu.memory_space<vmem>>, vector<1x15x16xf32>
    %617 = vector.shape_cast %616 : vector<1x15x16xf32> to vector<15x16xf32>
    %618 = vector.shape_cast %613 : vector<15x16xf32> to vector<1x15x16xf32>
    tpu.vector_store %arg22[%c0_266, %c8_267, %c0_268], %618 {strides = array<i32>} : memref<1x27x16xf32, #tpu.memory_space<vmem>>, vector<1x15x16xf32>,
    %619 = vector.extract_strided_slice %615 {offsets = [0, 0], sizes = [1, 16], strides = [1, 1]} : vector<3x16xf32> to vector<1x16xf32>
    %c0_269 = arith.constant 0 : index
    %c6_270 = arith.constant 6 : index
    %c0_271 = arith.constant 0 : index
    %620 = vector.load %arg22[%c0_269, %c6_270, %c0_271] : memref<1x27x16xf32, #tpu.memory_space<vmem>>, vector<1x15x16xf32>
    %621 = vector.shape_cast %620 : vector<1x15x16xf32> to vector<15x16xf32>
    %622 = vector.broadcast %619 : vector<1x16xf32> to vector<15x16xf32>
    %623 = arith.mulf %622, %621 : vector<15x16xf32>
    %624 = vector.extract_strided_slice %615 {offsets = [1, 0], sizes = [1, 16], strides = [1, 1]} : vector<3x16xf32> to vector<1x16xf32>
    %c0_272 = arith.constant 0 : index
    %c8_273 = arith.constant 8 : index
    %c0_274 = arith.constant 0 : index
    %625 = vector.load %arg22[%c0_272, %c8_273, %c0_274] : memref<1x27x16xf32, #tpu.memory_space<vmem>>, vector<1x15x16xf32>
    %626 = vector.shape_cast %625 : vector<1x15x16xf32> to vector<15x16xf32>
    %627 = vector.broadcast %624 : vector<1x16xf32> to vector<15x16xf32>
    %628 = arith.mulf %627, %626 : vector<15x16xf32>
    %629 = arith.addf %623, %628 : vector<15x16xf32>
    %630 = vector.extract_strided_slice %615 {offsets = [2, 0], sizes = [1, 16], strides = [1, 1]} : vector<3x16xf32> to vector<1x16xf32>
    %c0_275 = arith.constant 0 : index
    %c10_276 = arith.constant 10 : index
    %c0_277 = arith.constant 0 : index
    %631 = vector.load %arg22[%c0_275, %c10_276, %c0_277] : memref<1x27x16xf32, #tpu.memory_space<vmem>>, vector<1x15x16xf32>
    %632 = vector.shape_cast %631 : vector<1x15x16xf32> to vector<15x16xf32>
    %633 = vector.broadcast %630 : vector<1x16xf32> to vector<15x16xf32>
    %634 = arith.mulf %633, %632 : vector<15x16xf32>
    %635 = arith.addf %629, %634 : vector<15x16xf32>
    %c0_278 = arith.constant 0 : index
    %c0_279 = arith.constant 0 : index
    %636 = vector.load %arg21[%c0_278, %c0_279] : memref<15x16xf32, #tpu.memory_space<vmem>>, vector<15x16xf32>
    tpu.vector_store %arg21[%c0_278, %c0_279], %635 {strides = array<i32>} : memref<15x16xf32, #tpu.memory_space<vmem>>, vector<15x16xf32>,
    %c0_280 = arith.constant 0 : index
    %c0_281 = arith.constant 0 : index
    %637 = vector.load %arg21[%c0_280, %c0_281] : memref<15x16xf32, #tpu.memory_space<vmem>>, vector<15x16xf32>
    %638 = vector.extract_strided_slice %569 {offsets = [3, 0], sizes = [1, 16], strides = [1, 1]} : vector<6x16xf32> to vector<1x16xf32>
    %639 = vector.broadcast %638 : vector<1x16xf32> to vector<15x16xf32>
    %640 = arith.addf %637, %639 : vector<15x16xf32>
    %cst_282 = arith.constant 0.000000e+00 : f32
    %641 = vector.broadcast %cst_282 : f32 to vector<15x16xf32>
    %642 = arith.cmpf oge, %640, %641 : vector<15x16xf32>
    %cst_283 = arith.constant 2.500000e-01 : f32
    %643 = vector.broadcast %cst_283 : f32 to vector<15x16xf32>
    %644 = arith.mulf %643, %640 : vector<15x16xf32>
    %645 = arith.select %642, %640, %644 : vector<15x16xi1>, vector<15x16xf32>
    %646 = vector.extract_strided_slice %569 {offsets = [4, 0], sizes = [1, 16], strides = [1, 1]} : vector<6x16xf32> to vector<1x16xf32>
    %647 = vector.extract_strided_slice %569 {offsets = [5, 0], sizes = [1, 16], strides = [1, 1]} : vector<6x16xf32> to vector<1x16xf32>
    %648 = vector.shape_cast %645 : vector<15x16xf32> to vector<1x15x16xf32>
    %cst_284 = arith.constant dense<0.000000e+00> : vector<1xf32>
    %649 = vector.multi_reduction <add>, %648, %cst_284 [1, 2] : vector<1x15x16xf32> to vector<1xf32>
    %650 = vector.shape_cast %649 : vector<1xf32> to vector<1x1x1xf32>
    %651 = vector.extract %650[0, 0, 0] : f32 from vector<1x1x1xf32>
    %652 = vector.broadcast %651 : f32 to vector<1x1xf32>
    %cst_285 = arith.constant 2.400000e+02 : f32
    %653 = vector.broadcast %cst_285 : f32 to vector<1x1xf32>
    %654 = arith.divf %652, %653 : vector<1x1xf32>
    %655 = arith.mulf %645, %645 : vector<15x16xf32>
    %656 = vector.shape_cast %655 : vector<15x16xf32> to vector<1x15x16xf32>
    %cst_286 = arith.constant dense<0.000000e+00> : vector<1xf32>
    %657 = vector.multi_reduction <add>, %656, %cst_286 [1, 2] : vector<1x15x16xf32> to vector<1xf32>
    %658 = vector.shape_cast %657 : vector<1xf32> to vector<1x1x1xf32>
    %659 = vector.extract %658[0, 0, 0] : f32 from vector<1x1x1xf32>
    %660 = vector.broadcast %659 : f32 to vector<1x1xf32>
    %cst_287 = arith.constant 2.400000e+02 : f32
    %661 = vector.broadcast %cst_287 : f32 to vector<1x1xf32>
    %662 = arith.divf %660, %661 : vector<1x1xf32>
    %663 = arith.mulf %654, %654 : vector<1x1xf32>
    %664 = arith.subf %662, %663 : vector<1x1xf32>
    %cst_288 = arith.constant 0.000000e+00 : f32
    %665 = vector.broadcast %cst_288 : f32 to vector<1x1xf32>
    %666 = arith.maximumf %664, %665 : vector<1x1xf32>
    %667 = vector.broadcast %654 : vector<1x1xf32> to vector<15x16xf32>
    %668 = arith.subf %645, %667 : vector<15x16xf32>
    %cst_289 = arith.constant 9.99999974E-6 : f32
    %669 = vector.broadcast %cst_289 : f32 to vector<1x1xf32>
    %670 = arith.addf %666, %669 : vector<1x1xf32>
    %671 = math.rsqrt %670 : vector<1x1xf32>
    %672 = vector.broadcast %671 : vector<1x1xf32> to vector<15x16xf32>
    %673 = arith.mulf %668, %672 : vector<15x16xf32>
    %674 = vector.broadcast %646 : vector<1x16xf32> to vector<15x16xf32>
    %675 = arith.mulf %673, %674 : vector<15x16xf32>
    %676 = vector.broadcast %647 : vector<1x16xf32> to vector<15x16xf32>
    %677 = arith.addf %675, %676 : vector<15x16xf32>
    %c4_290 = arith.constant 4 : index
    %c0_291 = arith.constant 0 : index
    %c0_292 = arith.constant 0 : index
    %678 = vector.load %arg11[%c4_290, %c0_291, %c0_292] : memref<6x16x8xbf16, #tpu.memory_space<vmem>>, vector<1x16x8xbf16>
    %679 = vector.shape_cast %678 : vector<1x16x8xbf16> to vector<16x8xbf16>
    %680 = arith.truncf %677 : vector<15x16xf32> to vector<15x16xbf16>
    %cst_293 = arith.constant dense<0.000000e+00> : vector<15x8xf32>
    %681 = tpu.matmul %680, %679, %cst_293 {dimension_numbers = #tpu.dot_dimension_numbers<[1], [0], [0], [1], [0, 0, 1, 1], [], []>} : vector<15x16xbf16>, vector<16x8xbf16>, vector<15x8xf32> -> vector<15x8xf32>
    %682 = arith.addf %558, %681 : vector<15x8xf32>
    %c4_294 = arith.constant 4 : index
    %c0_295 = arith.constant 0 : index
    %c0_296 = arith.constant 0 : index
    %683 = vector.load %arg12[%c4_294, %c0_295, %c0_296] : memref<6x1x8xf32, #tpu.memory_space<vmem>>, vector<1x1x8xf32>
    %684 = vector.shape_cast %683 : vector<1x1x8xf32> to vector<1x8xf32>
    %685 = vector.broadcast %684 : vector<1x8xf32> to vector<15x8xf32>
    %686 = arith.addf %682, %685 : vector<15x8xf32>
    %c4_297 = arith.constant 4 : index
    %c0_298 = arith.constant 0 : index
    %c0_299 = arith.constant 0 : index
    %687 = vector.load %arg13[%c4_297, %c0_298, %c0_299] : memref<6x16x8xbf16, #tpu.memory_space<vmem>>, vector<1x16x8xbf16>
    %688 = vector.shape_cast %687 : vector<1x16x8xbf16> to vector<16x8xbf16>
    %689 = arith.truncf %677 : vector<15x16xf32> to vector<15x16xbf16>
    %cst_300 = arith.constant dense<0.000000e+00> : vector<15x8xf32>
    %690 = tpu.matmul %689, %688, %cst_300 {dimension_numbers = #tpu.dot_dimension_numbers<[1], [0], [0], [1], [0, 0, 1, 1], [], []>} : vector<15x16xbf16>, vector<16x8xbf16>, vector<15x8xf32> -> vector<15x8xf32>
    %691 = arith.addf %567, %690 : vector<15x8xf32>
    %c4_301 = arith.constant 4 : index
    %c0_302 = arith.constant 0 : index
    %c0_303 = arith.constant 0 : index
    %692 = vector.load %arg14[%c4_301, %c0_302, %c0_303] : memref<6x1x8xf32, #tpu.memory_space<vmem>>, vector<1x1x8xf32>
    %693 = vector.shape_cast %692 : vector<1x1x8xf32> to vector<1x8xf32>
    %694 = vector.broadcast %693 : vector<1x8xf32> to vector<15x8xf32>
    %695 = arith.addf %691, %694 : vector<15x8xf32>
    %c5 = arith.constant 5 : index
    %c0_304 = arith.constant 0 : index
    %c0_305 = arith.constant 0 : index
    %696 = vector.load %arg9[%c5, %c0_304, %c0_305] : memref<6x6x16xf32, #tpu.memory_space<vmem>>, vector<1x6x16xf32>
    %697 = vector.shape_cast %696 : vector<1x6x16xf32> to vector<6x16xf32>
    %c5_306 = arith.constant 5 : index
    %c0_307 = arith.constant 0 : index
    %c0_308 = arith.constant 0 : index
    %698 = vector.load %arg8[%c5_306, %c0_307, %c0_308] : memref<6x8x16xbf16, #tpu.memory_space<vmem>>, vector<1x8x16xbf16>
    %699 = vector.shape_cast %698 : vector<1x8x16xbf16> to vector<8x16xbf16>
    %700 = arith.truncf %695 : vector<15x8xf32> to vector<15x8xbf16>
    %cst_309 = arith.constant dense<0.000000e+00> : vector<15x16xf32>
    %701 = tpu.matmul %700, %699, %cst_309 {dimension_numbers = #tpu.dot_dimension_numbers<[1], [0], [0], [1], [0, 0, 1, 1], [], []>} : vector<15x8xbf16>, vector<8x16xbf16>, vector<15x16xf32> -> vector<15x16xf32>
    %702 = vector.extract_strided_slice %697 {offsets = [0, 0], sizes = [1, 16], strides = [1, 1]} : vector<6x16xf32> to vector<1x16xf32>
    %703 = vector.broadcast %702 : vector<1x16xf32> to vector<15x16xf32>
    %704 = arith.addf %701, %703 : vector<15x16xf32>
    %cst_310 = arith.constant 0.000000e+00 : f32
    %705 = vector.broadcast %cst_310 : f32 to vector<15x16xf32>
    %706 = arith.cmpf oge, %704, %705 : vector<15x16xf32>
    %cst_311 = arith.constant 2.500000e-01 : f32
    %707 = vector.broadcast %cst_311 : f32 to vector<15x16xf32>
    %708 = arith.mulf %707, %704 : vector<15x16xf32>
    %709 = arith.select %706, %704, %708 : vector<15x16xi1>, vector<15x16xf32>
    %710 = vector.extract_strided_slice %697 {offsets = [1, 0], sizes = [1, 16], strides = [1, 1]} : vector<6x16xf32> to vector<1x16xf32>
    %711 = vector.extract_strided_slice %697 {offsets = [2, 0], sizes = [1, 16], strides = [1, 1]} : vector<6x16xf32> to vector<1x16xf32>
    %712 = vector.shape_cast %709 : vector<15x16xf32> to vector<1x15x16xf32>
    %cst_312 = arith.constant dense<0.000000e+00> : vector<1xf32>
    %713 = vector.multi_reduction <add>, %712, %cst_312 [1, 2] : vector<1x15x16xf32> to vector<1xf32>
    %714 = vector.shape_cast %713 : vector<1xf32> to vector<1x1x1xf32>
    %715 = vector.extract %714[0, 0, 0] : f32 from vector<1x1x1xf32>
    %716 = vector.broadcast %715 : f32 to vector<1x1xf32>
    %cst_313 = arith.constant 2.400000e+02 : f32
    %717 = vector.broadcast %cst_313 : f32 to vector<1x1xf32>
    %718 = arith.divf %716, %717 : vector<1x1xf32>
    %719 = arith.mulf %709, %709 : vector<15x16xf32>
    %720 = vector.shape_cast %719 : vector<15x16xf32> to vector<1x15x16xf32>
    %cst_314 = arith.constant dense<0.000000e+00> : vector<1xf32>
    %721 = vector.multi_reduction <add>, %720, %cst_314 [1, 2] : vector<1x15x16xf32> to vector<1xf32>
    %722 = vector.shape_cast %721 : vector<1xf32> to vector<1x1x1xf32>
    %723 = vector.extract %722[0, 0, 0] : f32 from vector<1x1x1xf32>
    %724 = vector.broadcast %723 : f32 to vector<1x1xf32>
    %cst_315 = arith.constant 2.400000e+02 : f32
    %725 = vector.broadcast %cst_315 : f32 to vector<1x1xf32>
    %726 = arith.divf %724, %725 : vector<1x1xf32>
    %727 = arith.mulf %718, %718 : vector<1x1xf32>
    %728 = arith.subf %726, %727 : vector<1x1xf32>
    %cst_316 = arith.constant 0.000000e+00 : f32
    %729 = vector.broadcast %cst_316 : f32 to vector<1x1xf32>
    %730 = arith.maximumf %728, %729 : vector<1x1xf32>
    %731 = vector.broadcast %718 : vector<1x1xf32> to vector<15x16xf32>
    %732 = arith.subf %709, %731 : vector<15x16xf32>
    %cst_317 = arith.constant 9.99999974E-6 : f32
    %733 = vector.broadcast %cst_317 : f32 to vector<1x1xf32>
    %734 = arith.addf %730, %733 : vector<1x1xf32>
    %735 = math.rsqrt %734 : vector<1x1xf32>
    %736 = vector.broadcast %735 : vector<1x1xf32> to vector<15x16xf32>
    %737 = arith.mulf %732, %736 : vector<15x16xf32>
    %738 = vector.broadcast %710 : vector<1x16xf32> to vector<15x16xf32>
    %739 = arith.mulf %737, %738 : vector<15x16xf32>
    %740 = vector.broadcast %711 : vector<1x16xf32> to vector<15x16xf32>
    %741 = arith.addf %739, %740 : vector<15x16xf32>
    %c5_318 = arith.constant 5 : index
    %c0_319 = arith.constant 0 : index
    %c0_320 = arith.constant 0 : index
    %742 = vector.load %arg10[%c5_318, %c0_319, %c0_320] : memref<6x3x16xf32, #tpu.memory_space<vmem>>, vector<1x3x16xf32>
    %743 = vector.shape_cast %742 : vector<1x3x16xf32> to vector<3x16xf32>
    %c0_321 = arith.constant 0 : index
    %c8_322 = arith.constant 8 : index
    %c0_323 = arith.constant 0 : index
    %744 = vector.load %arg22[%c0_321, %c8_322, %c0_323] : memref<1x27x16xf32, #tpu.memory_space<vmem>>, vector<1x15x16xf32>
    %745 = vector.shape_cast %744 : vector<1x15x16xf32> to vector<15x16xf32>
    %746 = vector.shape_cast %741 : vector<15x16xf32> to vector<1x15x16xf32>
    tpu.vector_store %arg22[%c0_321, %c8_322, %c0_323], %746 {strides = array<i32>} : memref<1x27x16xf32, #tpu.memory_space<vmem>>, vector<1x15x16xf32>,
    %747 = vector.extract_strided_slice %743 {offsets = [0, 0], sizes = [1, 16], strides = [1, 1]} : vector<3x16xf32> to vector<1x16xf32>
    %c0_324 = arith.constant 0 : index
    %c4_325 = arith.constant 4 : index
    %c0_326 = arith.constant 0 : index
    %748 = vector.load %arg22[%c0_324, %c4_325, %c0_326] : memref<1x27x16xf32, #tpu.memory_space<vmem>>, vector<1x15x16xf32>
    %749 = vector.shape_cast %748 : vector<1x15x16xf32> to vector<15x16xf32>
    %750 = vector.broadcast %747 : vector<1x16xf32> to vector<15x16xf32>
    %751 = arith.mulf %750, %749 : vector<15x16xf32>
    %752 = vector.extract_strided_slice %743 {offsets = [1, 0], sizes = [1, 16], strides = [1, 1]} : vector<3x16xf32> to vector<1x16xf32>
    %c0_327 = arith.constant 0 : index
    %c8_328 = arith.constant 8 : index
    %c0_329 = arith.constant 0 : index
    %753 = vector.load %arg22[%c0_327, %c8_328, %c0_329] : memref<1x27x16xf32, #tpu.memory_space<vmem>>, vector<1x15x16xf32>
    %754 = vector.shape_cast %753 : vector<1x15x16xf32> to vector<15x16xf32>
    %755 = vector.broadcast %752 : vector<1x16xf32> to vector<15x16xf32>
    %756 = arith.mulf %755, %754 : vector<15x16xf32>
    %757 = arith.addf %751, %756 : vector<15x16xf32>
    %758 = vector.extract_strided_slice %743 {offsets = [2, 0], sizes = [1, 16], strides = [1, 1]} : vector<3x16xf32> to vector<1x16xf32>
    %c0_330 = arith.constant 0 : index
    %c12_331 = arith.constant 12 : index
    %c0_332 = arith.constant 0 : index
    %759 = vector.load %arg22[%c0_330, %c12_331, %c0_332] : memref<1x27x16xf32, #tpu.memory_space<vmem>>, vector<1x15x16xf32>
    %760 = vector.shape_cast %759 : vector<1x15x16xf32> to vector<15x16xf32>
    %761 = vector.broadcast %758 : vector<1x16xf32> to vector<15x16xf32>
    %762 = arith.mulf %761, %760 : vector<15x16xf32>
    %763 = arith.addf %757, %762 : vector<15x16xf32>
    %c0_333 = arith.constant 0 : index
    %c0_334 = arith.constant 0 : index
    %764 = vector.load %arg21[%c0_333, %c0_334] : memref<15x16xf32, #tpu.memory_space<vmem>>, vector<15x16xf32>
    tpu.vector_store %arg21[%c0_333, %c0_334], %763 {strides = array<i32>} : memref<15x16xf32, #tpu.memory_space<vmem>>, vector<15x16xf32>,
    %c0_335 = arith.constant 0 : index
    %c0_336 = arith.constant 0 : index
    %765 = vector.load %arg21[%c0_335, %c0_336] : memref<15x16xf32, #tpu.memory_space<vmem>>, vector<15x16xf32>
    %766 = vector.extract_strided_slice %697 {offsets = [3, 0], sizes = [1, 16], strides = [1, 1]} : vector<6x16xf32> to vector<1x16xf32>
    %767 = vector.broadcast %766 : vector<1x16xf32> to vector<15x16xf32>
    %768 = arith.addf %765, %767 : vector<15x16xf32>
    %cst_337 = arith.constant 0.000000e+00 : f32
    %769 = vector.broadcast %cst_337 : f32 to vector<15x16xf32>
    %770 = arith.cmpf oge, %768, %769 : vector<15x16xf32>
    %cst_338 = arith.constant 2.500000e-01 : f32
    %771 = vector.broadcast %cst_338 : f32 to vector<15x16xf32>
    %772 = arith.mulf %771, %768 : vector<15x16xf32>
    %773 = arith.select %770, %768, %772 : vector<15x16xi1>, vector<15x16xf32>
    %774 = vector.extract_strided_slice %697 {offsets = [4, 0], sizes = [1, 16], strides = [1, 1]} : vector<6x16xf32> to vector<1x16xf32>
    %775 = vector.extract_strided_slice %697 {offsets = [5, 0], sizes = [1, 16], strides = [1, 1]} : vector<6x16xf32> to vector<1x16xf32>
    %776 = vector.shape_cast %773 : vector<15x16xf32> to vector<1x15x16xf32>
    %cst_339 = arith.constant dense<0.000000e+00> : vector<1xf32>
    %777 = vector.multi_reduction <add>, %776, %cst_339 [1, 2] : vector<1x15x16xf32> to vector<1xf32>
    %778 = vector.shape_cast %777 : vector<1xf32> to vector<1x1x1xf32>
    %779 = vector.extract %778[0, 0, 0] : f32 from vector<1x1x1xf32>
    %780 = vector.broadcast %779 : f32 to vector<1x1xf32>
    %cst_340 = arith.constant 2.400000e+02 : f32
    %781 = vector.broadcast %cst_340 : f32 to vector<1x1xf32>
    %782 = arith.divf %780, %781 : vector<1x1xf32>
    %783 = arith.mulf %773, %773 : vector<15x16xf32>
    %784 = vector.shape_cast %783 : vector<15x16xf32> to vector<1x15x16xf32>
    %cst_341 = arith.constant dense<0.000000e+00> : vector<1xf32>
    %785 = vector.multi_reduction <add>, %784, %cst_341 [1, 2] : vector<1x15x16xf32> to vector<1xf32>
    %786 = vector.shape_cast %785 : vector<1xf32> to vector<1x1x1xf32>
    %787 = vector.extract %786[0, 0, 0] : f32 from vector<1x1x1xf32>
    %788 = vector.broadcast %787 : f32 to vector<1x1xf32>
    %cst_342 = arith.constant 2.400000e+02 : f32
    %789 = vector.broadcast %cst_342 : f32 to vector<1x1xf32>
    %790 = arith.divf %788, %789 : vector<1x1xf32>
    %791 = arith.mulf %782, %782 : vector<1x1xf32>
    %792 = arith.subf %790, %791 : vector<1x1xf32>
    %cst_343 = arith.constant 0.000000e+00 : f32
    %793 = vector.broadcast %cst_343 : f32 to vector<1x1xf32>
    %794 = arith.maximumf %792, %793 : vector<1x1xf32>
    %795 = vector.broadcast %782 : vector<1x1xf32> to vector<15x16xf32>
    %796 = arith.subf %773, %795 : vector<15x16xf32>
    %cst_344 = arith.constant 9.99999974E-6 : f32
    %797 = vector.broadcast %cst_344 : f32 to vector<1x1xf32>
    %798 = arith.addf %794, %797 : vector<1x1xf32>
    %799 = math.rsqrt %798 : vector<1x1xf32>
    %800 = vector.broadcast %799 : vector<1x1xf32> to vector<15x16xf32>
    %801 = arith.mulf %796, %800 : vector<15x16xf32>
    %802 = vector.broadcast %774 : vector<1x16xf32> to vector<15x16xf32>
    %803 = arith.mulf %801, %802 : vector<15x16xf32>
    %804 = vector.broadcast %775 : vector<1x16xf32> to vector<15x16xf32>
    %805 = arith.addf %803, %804 : vector<15x16xf32>
    %c5_345 = arith.constant 5 : index
    %c0_346 = arith.constant 0 : index
    %c0_347 = arith.constant 0 : index
    %806 = vector.load %arg11[%c5_345, %c0_346, %c0_347] : memref<6x16x8xbf16, #tpu.memory_space<vmem>>, vector<1x16x8xbf16>
    %807 = vector.shape_cast %806 : vector<1x16x8xbf16> to vector<16x8xbf16>
    %808 = arith.truncf %805 : vector<15x16xf32> to vector<15x16xbf16>
    %cst_348 = arith.constant dense<0.000000e+00> : vector<15x8xf32>
    %809 = tpu.matmul %808, %807, %cst_348 {dimension_numbers = #tpu.dot_dimension_numbers<[1], [0], [0], [1], [0, 0, 1, 1], [], []>} : vector<15x16xbf16>, vector<16x8xbf16>, vector<15x8xf32> -> vector<15x8xf32>
    %810 = arith.addf %686, %809 : vector<15x8xf32>
    %c5_349 = arith.constant 5 : index
    %c0_350 = arith.constant 0 : index
    %c0_351 = arith.constant 0 : index
    %811 = vector.load %arg12[%c5_349, %c0_350, %c0_351] : memref<6x1x8xf32, #tpu.memory_space<vmem>>, vector<1x1x8xf32>
    %812 = vector.shape_cast %811 : vector<1x1x8xf32> to vector<1x8xf32>
    %813 = vector.broadcast %812 : vector<1x8xf32> to vector<15x8xf32>
    %814 = arith.addf %810, %813 : vector<15x8xf32>
    %cst_352 = arith.constant 0.000000e+00 : f32
    %815 = vector.broadcast %cst_352 : f32 to vector<15x8xf32>
    %816 = arith.cmpf oge, %814, %815 : vector<15x8xf32>
    %cst_353 = arith.constant 2.500000e-01 : f32
    %817 = vector.broadcast %cst_353 : f32 to vector<15x8xf32>
    %818 = arith.mulf %817, %814 : vector<15x8xf32>
    %819 = arith.select %816, %814, %818 : vector<15x8xi1>, vector<15x8xf32>
    %c0_354 = arith.constant 0 : index
    %c0_355 = arith.constant 0 : index
    %820 = vector.load %arg15[%c0_354, %c0_355] : memref<8x16xbf16, #tpu.memory_space<vmem>>, vector<8x16xbf16>
    %821 = arith.truncf %819 : vector<15x8xf32> to vector<15x8xbf16>
    %cst_356 = arith.constant dense<0.000000e+00> : vector<15x16xf32>
    %822 = tpu.matmul %821, %820, %cst_356 {dimension_numbers = #tpu.dot_dimension_numbers<[1], [0], [0], [1], [0, 0, 1, 1], [], []>} : vector<15x8xbf16>, vector<8x16xbf16>, vector<15x16xf32> -> vector<15x16xf32>
    %c0_357 = arith.constant 0 : index
    %c0_358 = arith.constant 0 : index
    %823 = vector.load %arg16[%c0_357, %c0_358] : memref<1x16xf32, #tpu.memory_space<vmem>>, vector<1x16xf32>
    %824 = vector.broadcast %823 : vector<1x16xf32> to vector<15x16xf32>
    %825 = arith.addf %822, %824 : vector<15x16xf32>
    %826 = arith.negf %825 : vector<15x16xf32>
    %827 = math.exp %826 : vector<15x16xf32>
    %cst_359 = arith.constant 1.000000e+00 : f32
    %828 = vector.broadcast %cst_359 : f32 to vector<15x16xf32>
    %829 = arith.addf %828, %827 : vector<15x16xf32>
    %830 = arith.divf %828, %829 : vector<15x16xf32>
    %831 = arith.mulf %16, %830 : vector<15x16xf32>
    %c0_360 = arith.constant 0 : index
    %c0_361 = arith.constant 0 : index
    %832 = vector.load %arg17[%c0_360, %c0_361] : memref<16x4xbf16, #tpu.memory_space<vmem>>, vector<16x4xbf16>
    %833 = arith.truncf %831 : vector<15x16xf32> to vector<15x16xbf16>
    %cst_362 = arith.constant dense<0.000000e+00> : vector<15x4xf32>
    %834 = tpu.matmul %833, %832, %cst_362 {dimension_numbers = #tpu.dot_dimension_numbers<[1], [0], [0], [1], [0, 0, 1, 1], [], []>} : vector<15x16xbf16>, vector<16x4xbf16>, vector<15x4xf32> -> vector<15x4xf32>
    %c0_363 = arith.constant 0 : index
    %c0_364 = arith.constant 0 : index
    %835 = vector.load %arg18[%c0_363, %c0_364] : memref<16x4xbf16, #tpu.memory_space<vmem>>, vector<16x4xbf16>
    %836 = arith.truncf %831 : vector<15x16xf32> to vector<15x16xbf16>
    %cst_365 = arith.constant dense<0.000000e+00> : vector<15x4xf32>
    %837 = tpu.matmul %836, %835, %cst_365 {dimension_numbers = #tpu.dot_dimension_numbers<[1], [0], [0], [1], [0, 0, 1, 1], [], []>} : vector<15x16xbf16>, vector<16x4xbf16>, vector<15x4xf32> -> vector<15x4xf32>
    %838 = vector.extract_strided_slice %834 {offsets = [0, 0], sizes = [1, 4], strides = [1, 1]} : vector<15x4xf32> to vector<1x4xf32>
    %c0_366 = arith.constant 0 : index
    %c0_367 = arith.constant 0 : index
    %c0_368 = arith.constant 0 : index
    %839 = vector.load %arg19[%c0_366, %c0_367, %c0_368] : memref<1x16x4xf32, #tpu.memory_space<vmem>>, vector<1x1x4xf32>
    %840 = vector.shape_cast %839 : vector<1x1x4xf32> to vector<1x4xf32>
    %841 = vector.shape_cast %838 : vector<1x4xf32> to vector<1x1x4xf32>
    tpu.vector_store %arg19[%c0_366, %c0_367, %c0_368], %841 {strides = array<i32>} : memref<1x16x4xf32, #tpu.memory_space<vmem>>, vector<1x1x4xf32>,
    %842 = vector.extract_strided_slice %834 {offsets = [1, 0], sizes = [14, 4], strides = [1, 1]} : vector<15x4xf32> to vector<14x4xf32>
    %843 = vector.extract_strided_slice %837 {offsets = [0, 0], sizes = [14, 4], strides = [1, 1]} : vector<15x4xf32> to vector<14x4xf32>
    %844 = arith.addf %842, %843 : vector<14x4xf32>
    %c0_369 = arith.constant 0 : index
    %c1_370 = arith.constant 1 : index
    %c0_371 = arith.constant 0 : index
    %845 = vector.load %arg19[%c0_369, %c1_370, %c0_371] : memref<1x16x4xf32, #tpu.memory_space<vmem>>, vector<1x14x4xf32>
    %846 = vector.shape_cast %845 : vector<1x14x4xf32> to vector<14x4xf32>
    %847 = vector.shape_cast %844 : vector<14x4xf32> to vector<1x14x4xf32>
    tpu.vector_store %arg19[%c0_369, %c1_370, %c0_371], %847 {strides = array<i32>} : memref<1x16x4xf32, #tpu.memory_space<vmem>>, vector<1x14x4xf32>,
    %848 = vector.extract_strided_slice %837 {offsets = [14, 0], sizes = [1, 4], strides = [1, 1]} : vector<15x4xf32> to vector<1x4xf32>
    %c0_372 = arith.constant 0 : index
    %c15 = arith.constant 15 : index
    %c0_373 = arith.constant 0 : index
    %849 = vector.load %arg19[%c0_372, %c15, %c0_373] : memref<1x16x4xf32, #tpu.memory_space<vmem>>, vector<1x1x4xf32>
    %850 = vector.shape_cast %849 : vector<1x1x4xf32> to vector<1x4xf32>
    %851 = vector.shape_cast %848 : vector<1x4xf32> to vector<1x1x4xf32>
    tpu.vector_store %arg19[%c0_372, %c15, %c0_373], %851 {strides = array<i32>} : memref<1x16x4xf32, #tpu.memory_space<vmem>>, vector<1x1x4xf32>,
    return
  }
  func.func @transform_0(%arg0: i32) -> (i32, i32, i32) {
    %c0_i32 = arith.constant 0 : i32
    %c0_i32_0 = arith.constant 0 : i32
    %c0_i32_1 = arith.constant 0 : i32
    return %arg0, %c0_i32, %c0_i32_0 : i32, i32, i32
  }
  func.func @transform_1(%arg0: i32) -> (i32, i32) {
    %c0_i32 = arith.constant 0 : i32
    %c0_i32_0 = arith.constant 0 : i32
    %c0_i32_1 = arith.constant 0 : i32
    return %c0_i32, %c0_i32_0 : i32, i32
  }
  func.func @transform_2(%arg0: i32) -> (i32, i32) {
    %c0_i32 = arith.constant 0 : i32
    %c0_i32_0 = arith.constant 0 : i32
    %c0_i32_1 = arith.constant 0 : i32
    return %c0_i32, %c0_i32_0 : i32, i32
  }
  func.func @transform_3(%arg0: i32) -> (i32, i32) {
    %c0_i32 = arith.constant 0 : i32
    %c0_i32_0 = arith.constant 0 : i32
    %c0_i32_1 = arith.constant 0 : i32
    return %c0_i32, %c0_i32_0 : i32, i32
  }
  func.func @transform_4(%arg0: i32) -> (i32, i32) {
    %c0_i32 = arith.constant 0 : i32
    %c0_i32_0 = arith.constant 0 : i32
    %c0_i32_1 = arith.constant 0 : i32
    return %c0_i32, %c0_i32_0 : i32, i32
  }
  func.func @transform_5(%arg0: i32) -> (i32, i32) {
    %c0_i32 = arith.constant 0 : i32
    %c0_i32_0 = arith.constant 0 : i32
    %c0_i32_1 = arith.constant 0 : i32
    return %c0_i32, %c0_i32_0 : i32, i32
  }
  func.func @transform_6(%arg0: i32) -> (i32, i32) {
    %c0_i32 = arith.constant 0 : i32
    %c0_i32_0 = arith.constant 0 : i32
    %c0_i32_1 = arith.constant 0 : i32
    return %c0_i32, %c0_i32_0 : i32, i32
  }
  func.func @transform_7(%arg0: i32) -> (i32, i32, i32) {
    %c0_i32 = arith.constant 0 : i32
    %c0_i32_0 = arith.constant 0 : i32
    %c0_i32_1 = arith.constant 0 : i32
    %c0_i32_2 = arith.constant 0 : i32
    return %c0_i32, %c0_i32_0, %c0_i32_1 : i32, i32, i32
  }
  func.func @transform_8(%arg0: i32) -> (i32, i32, i32) {
    %c0_i32 = arith.constant 0 : i32
    %c0_i32_0 = arith.constant 0 : i32
    %c0_i32_1 = arith.constant 0 : i32
    %c0_i32_2 = arith.constant 0 : i32
    return %c0_i32, %c0_i32_0, %c0_i32_1 : i32, i32, i32
  }
  func.func @transform_9(%arg0: i32) -> (i32, i32, i32) {
    %c0_i32 = arith.constant 0 : i32
    %c0_i32_0 = arith.constant 0 : i32
    %c0_i32_1 = arith.constant 0 : i32
    %c0_i32_2 = arith.constant 0 : i32
    return %c0_i32, %c0_i32_0, %c0_i32_1 : i32, i32, i32
  }
  func.func @transform_10(%arg0: i32) -> (i32, i32, i32) {
    %c0_i32 = arith.constant 0 : i32
    %c0_i32_0 = arith.constant 0 : i32
    %c0_i32_1 = arith.constant 0 : i32
    %c0_i32_2 = arith.constant 0 : i32
    return %c0_i32, %c0_i32_0, %c0_i32_1 : i32, i32, i32
  }
  func.func @transform_11(%arg0: i32) -> (i32, i32, i32) {
    %c0_i32 = arith.constant 0 : i32
    %c0_i32_0 = arith.constant 0 : i32
    %c0_i32_1 = arith.constant 0 : i32
    %c0_i32_2 = arith.constant 0 : i32
    return %c0_i32, %c0_i32_0, %c0_i32_1 : i32, i32, i32
  }
  func.func @transform_12(%arg0: i32) -> (i32, i32, i32) {
    %c0_i32 = arith.constant 0 : i32
    %c0_i32_0 = arith.constant 0 : i32
    %c0_i32_1 = arith.constant 0 : i32
    %c0_i32_2 = arith.constant 0 : i32
    return %c0_i32, %c0_i32_0, %c0_i32_1 : i32, i32, i32
  }
  func.func @transform_13(%arg0: i32) -> (i32, i32, i32) {
    %c0_i32 = arith.constant 0 : i32
    %c0_i32_0 = arith.constant 0 : i32
    %c0_i32_1 = arith.constant 0 : i32
    %c0_i32_2 = arith.constant 0 : i32
    return %c0_i32, %c0_i32_0, %c0_i32_1 : i32, i32, i32
  }
  func.func @transform_14(%arg0: i32) -> (i32, i32) {
    %c0_i32 = arith.constant 0 : i32
    %c0_i32_0 = arith.constant 0 : i32
    %c0_i32_1 = arith.constant 0 : i32
    return %c0_i32, %c0_i32_0 : i32, i32
  }
  func.func @transform_15(%arg0: i32) -> (i32, i32) {
    %c0_i32 = arith.constant 0 : i32
    %c0_i32_0 = arith.constant 0 : i32
    %c0_i32_1 = arith.constant 0 : i32
    return %c0_i32, %c0_i32_0 : i32, i32
  }
  func.func @transform_16(%arg0: i32) -> (i32, i32) {
    %c0_i32 = arith.constant 0 : i32
    %c0_i32_0 = arith.constant 0 : i32
    %c0_i32_1 = arith.constant 0 : i32
    return %c0_i32, %c0_i32_0 : i32, i32
  }
  func.func @transform_17(%arg0: i32) -> (i32, i32) {
    %c0_i32 = arith.constant 0 : i32
    %c0_i32_0 = arith.constant 0 : i32
    %c0_i32_1 = arith.constant 0 : i32
    return %c0_i32, %c0_i32_0 : i32, i32
  }
  func.func @transform_18(%arg0: i32) -> (i32, i32, i32) {
    %c0_i32 = arith.constant 0 : i32
    %c0_i32_0 = arith.constant 0 : i32
    %c0_i32_1 = arith.constant 0 : i32
    return %arg0, %c0_i32, %c0_i32_0 : i32, i32, i32
  }
}

</mosaic_0001>

<llo_original>
// kernel: tpu_custom_call.1
$region0: #{tpu_custom_call.1}
  #allocation0 [shape = 'u32[]', space=smem, size = 0x4, offset = 0x4, fixed_abs, tag = 'smem constant byte address 0x4 - core index']
  #allocation1 [shape = 'u32[144,128]{1,0:T(1,128)}', space=vmem, size = 0x12000, scoped, tag = 'internal scratch']
  #allocation2 [shape = 'f32[15,16]{1,0:T(8,128)}', space=vmem, size = 0x2000, scoped, tag = 'scratch operand']
  #allocation3 [shape = 'f32[15,16]{1,0:T(8,128)}', space=vmem, size = 0x2000, scoped, tag = 'scratch operand']
  #allocation4 [shape = 'f32[1,27,16]{2,1,0:T(8,128)}', space=vmem, size = 0x4000, scoped, tag = 'scratch operand']
  %s0 = inlined_call_operand.vmem [shape: f32[2,16,4], index: 0, kind: input, shape index: {}]
  %s1 = inlined_call_operand.vmem [shape: bf16[4,16], index: 1, kind: input, shape index: {}]
  %s2 = inlined_call_operand.vmem [shape: bf16[4,16], index: 2, kind: input, shape index: {}]
  %s3 = inlined_call_operand.vmem [shape: f32[1,16], index: 3, kind: input, shape index: {}]
  %s4 = inlined_call_operand.vmem [shape: f32[1,16], index: 4, kind: input, shape index: {}]
  %s5 = inlined_call_operand.vmem [shape: bf16[16,8], index: 5, kind: input, shape index: {}]
  %s6 = inlined_call_operand.vmem [shape: f32[1,8], index: 6, kind: input, shape index: {}]
  %s7 = inlined_call_operand.vmem [shape: bf16[6,8,16], index: 7, kind: input, shape index: {}]
  %s8 = inlined_call_operand.vmem [shape: f32[6,6,16], index: 8, kind: input, shape index: {}]
  %s9 = inlined_call_operand.vmem [shape: f32[6,3,16], index: 9, kind: input, shape index: {}]
  %s10 = inlined_call_operand.vmem [shape: bf16[6,16,8], index: 10, kind: input, shape index: {}]
  %s11 = inlined_call_operand.vmem [shape: f32[6,1,8], index: 11, kind: input, shape index: {}]
  %s12 = inlined_call_operand.vmem [shape: bf16[6,16,8], index: 12, kind: input, shape index: {}]
  %s13 = inlined_call_operand.vmem [shape: f32[6,1,8], index: 13, kind: input, shape index: {}]
  %s14 = inlined_call_operand.vmem [shape: bf16[8,16], index: 14, kind: input, shape index: {}]
  %s15 = inlined_call_operand.vmem [shape: f32[1,16], index: 15, kind: input, shape index: {}]
  %s16 = inlined_call_operand.vmem [shape: bf16[16,4], index: 16, kind: input, shape index: {}]
  %s17 = inlined_call_operand.vmem [shape: bf16[16,4], index: 17, kind: input, shape index: {}]
  %s18 = inlined_call_operand.vmem [shape: f32[2,16,4], index: 18, kind: output, shape index: {}]
  %s19 = sld [smem:[#allocation0]]
  $region105: #{tpu_custom_call.1} parent=0
    _
  %s21 = ssub.s32 1, %s19
  %s22 = scalar_select 0, %s21, %s19
  loop: start=0, step=1, limit=4
  $region2: #{tpu_custom_call.1} parent=0 // loop_pre_header
    _
  $region3: #{tpu_custom_call.1} parent=0 // loop_header
    %s24 = sphi 0, %s28
    %p25 = scmp.ge.s32.totalorder %s24, 4
    %s34 = sphi 0, %s36
    %s37 = sphi 0, %s34
    %s38 = sphi 0, %s37
    %s54 = sphi 0, %s38
    %s58 = sphi 0, %s58
    %s60 = sphi 0, %s58
    %s61 = sphi 0, %s60
    %s75 = sphi 0, %s61
    %s79 = sphi 0, %s79
    %s81 = sphi 0, %s79
    %s82 = sphi 0, %s81
    %s96 = sphi 0, %s82
    %s100 = sphi 0, %s100
    %s102 = sphi 0, %s100
    %s103 = sphi 0, %s102
    %s117 = sphi 0, %s103
    %s121 = sphi 0, %s121
    %s123 = sphi 0, %s121
    %s124 = sphi 0, %s123
    %s138 = sphi 0, %s124
    %s142 = sphi 0, %s142
    %s144 = sphi 0, %s142
    %s145 = sphi 0, %s144
    %s159 = sphi 0, %s145
    %s163 = sphi 0, %s163
    %s165 = sphi 0, %s163
    %s166 = sphi 0, %s165
    %s180 = sphi 0, %s166
    %s184 = sphi 0, %s184
    %s186 = sphi 0, %s184
    %s187 = sphi 0, %s186
    %s201 = sphi 0, %s187
    %s205 = sphi 0, %s205
    %s207 = sphi 0, %s205
    %s208 = sphi 0, %s207
    %s222 = sphi 0, %s208
    %s226 = sphi 0, %s226
    %s228 = sphi 0, %s226
    %s229 = sphi 0, %s228
    %s243 = sphi 0, %s229
    %s247 = sphi 0, %s247
    %s249 = sphi 0, %s247
    %s250 = sphi 0, %s249
    %s264 = sphi 0, %s250
    %s268 = sphi 0, %s268
    %s270 = sphi 0, %s268
    %s271 = sphi 0, %s270
    %s285 = sphi 0, %s271
    %s289 = sphi 0, %s289
    %s291 = sphi 0, %s289
    %s292 = sphi 0, %s291
    %s306 = sphi 0, %s292
    %s310 = sphi 0, %s310
    %s312 = sphi 0, %s310
    %s313 = sphi 0, %s312
    %s327 = sphi 0, %s313
    %s331 = sphi 0, %s331
    %s333 = sphi 0, %s331
    %s334 = sphi 0, %s333
    %s348 = sphi 0, %s334
    %s352 = sphi 0, %s352
    %s354 = sphi 0, %s352
    %s355 = sphi 0, %s354
    %s369 = sphi 0, %s355
    %s373 = sphi 0, %s373
    %s375 = sphi 0, %s373
    %s376 = sphi 0, %s375
    %s390 = sphi 0, %s376
    %s394 = sphi 0, %s394
    %s396 = sphi 0, %s394
    %s397 = sphi 0, %s396
    %s411 = sphi 0, %s397
    %s417 = sphi 0, %s419
    %s420 = sphi 0, %s417
    %s421 = sphi 0, %s420
    %s437 = sphi 0, %s421
  $region4: #{tpu_custom_call.1} parent=0 // loop_header_branch
    %27 = sbr.rel (%p25) target = $region8
  $region5: #{tpu_custom_call.1} parent=0 // loop_body
    %s29 = ssub.s32 %s24, 1
    %s30 = ssub.s32 %s24, 2
    %s31 = sadd.s32 %s24, 1
    %s32 = ssub.s32 %s24, %s31
    %p33 = scmp.eq.s32.totalorder %s32, 0
    %s35 = sadd.s32 %s34, 1
    %s36 = scalar_select %p33, %s34, %s35
    %p39 = pneg %p33
    %p40 = scmp.eq.s32.totalorder %s24, 1
    %p41 = por %p39, %p40
    %p42 = scmp.ne.s32.totalorder %s34, %s37
    %p43 = scmp.eq.s32.totalorder %s24, 0
    %p44 = por %p42, %p43
    %p45 = scmp.ne.s32.totalorder %s34, %s37
    %p46 = scmp.eq.s32.totalorder %s29, 1
    %p47 = por %p45, %p46
    %p48 = scmp.ne.s32.totalorder %s37, %s38
    %p49 = scmp.eq.s32.totalorder %s29, 0
    %p50 = por %p48, %p49
    %p51 = scmp.ne.s32.totalorder %s37, %s38
    %p52 = scmp.eq.s32.totalorder %s30, 1
    %p53 = por %p51, %p52
    %p55 = scmp.ne.s32.totalorder %s38, %s54
    %p56 = scmp.eq.s32.totalorder %s30, 0
    %p57 = por %p55, %p56
    %s59 = sadd.s32 %s58, 1
    %p62 = scmp.eq.s32.totalorder %s24, 1
    %p63 = scmp.ne.s32.totalorder %s58, %s60
    %p64 = scmp.eq.s32.totalorder %s24, 0
    %p65 = por %p63, %p64
    %p66 = scmp.ne.s32.totalorder %s58, %s60
    %p67 = scmp.eq.s32.totalorder %s29, 1
    %p68 = por %p66, %p67
    %p69 = scmp.ne.s32.totalorder %s60, %s61
    %p70 = scmp.eq.s32.totalorder %s29, 0
    %p71 = por %p69, %p70
    %p72 = scmp.ne.s32.totalorder %s60, %s61
    %p73 = scmp.eq.s32.totalorder %s30, 1
    %p74 = por %p72, %p73
    %p76 = scmp.ne.s32.totalorder %s61, %s75
    %p77 = scmp.eq.s32.totalorder %s30, 0
    %p78 = por %p76, %p77
    %s80 = sadd.s32 %s79, 1
    %p83 = scmp.eq.s32.totalorder %s24, 1
    %p84 = scmp.ne.s32.totalorder %s79, %s81
    %p85 = scmp.eq.s32.totalorder %s24, 0
    %p86 = por %p84, %p85
    %p87 = scmp.ne.s32.totalorder %s79, %s81
    %p88 = scmp.eq.s32.totalorder %s29, 1
    %p89 = por %p87, %p88
    %p90 = scmp.ne.s32.totalorder %s81, %s82
    %p91 = scmp.eq.s32.totalorder %s29, 0
    %p92 = por %p90, %p91
    %p93 = scmp.ne.s32.totalorder %s81, %s82
    %p94 = scmp.eq.s32.totalorder %s30, 1
    %p95 = por %p93, %p94
    %p97 = scmp.ne.s32.totalorder %s82, %s96
    %p98 = scmp.eq.s32.totalorder %s30, 0
    %p99 = por %p97, %p98
    %s101 = sadd.s32 %s100, 1
    %p104 = scmp.eq.s32.totalorder %s24, 1
    %p105 = scmp.ne.s32.totalorder %s100, %s102
    %p106 = scmp.eq.s32.totalorder %s24, 0
    %p107 = por %p105, %p106
    %p108 = scmp.ne.s32.totalorder %s100, %s102
    %p109 = scmp.eq.s32.totalorder %s29, 1
    %p110 = por %p108, %p109
    %p111 = scmp.ne.s32.totalorder %s102, %s103
    %p112 = scmp.eq.s32.totalorder %s29, 0
    %p113 = por %p111, %p112
    %p114 = scmp.ne.s32.totalorder %s102, %s103
    %p115 = scmp.eq.s32.totalorder %s30, 1
    %p116 = por %p114, %p115
    %p118 = scmp.ne.s32.totalorder %s103, %s117
    %p119 = scmp.eq.s32.totalorder %s30, 0
    %p120 = por %p118, %p119
    %s122 = sadd.s32 %s121, 1
    %p125 = scmp.eq.s32.totalorder %s24, 1
    %p126 = scmp.ne.s32.totalorder %s121, %s123
    %p127 = scmp.eq.s32.totalorder %s24, 0
    %p128 = por %p126, %p127
    %p129 = scmp.ne.s32.totalorder %s121, %s123
    %p130 = scmp.eq.s32.totalorder %s29, 1
    %p131 = por %p129, %p130
    %p132 = scmp.ne.s32.totalorder %s123, %s124
    %p133 = scmp.eq.s32.totalorder %s29, 0
    %p134 = por %p132, %p133
    %p135 = scmp.ne.s32.totalorder %s123, %s124
    %p136 = scmp.eq.s32.totalorder %s30, 1
    %p137 = por %p135, %p136
    %p139 = scmp.ne.s32.totalorder %s124, %s138
    %p140 = scmp.eq.s32.totalorder %s30, 0
    %p141 = por %p139, %p140
    %s143 = sadd.s32 %s142, 1
    %p146 = scmp.eq.s32.totalorder %s24, 1
    %p147 = scmp.ne.s32.totalorder %s142, %s144
    %p148 = scmp.eq.s32.totalorder %s24, 0
    %p149 = por %p147, %p148
    %p150 = scmp.ne.s32.totalorder %s142, %s144
    %p151 = scmp.eq.s32.totalorder %s29, 1
    %p152 = por %p150, %p151
    %p153 = scmp.ne.s32.totalorder %s144, %s145
    %p154 = scmp.eq.s32.totalorder %s29, 0
    %p155 = por %p153, %p154
    %p156 = scmp.ne.s32.totalorder %s144, %s145
    %p157 = scmp.eq.s32.totalorder %s30, 1
    %p158 = por %p156, %p157
    %p160 = scmp.ne.s32.totalorder %s145, %s159
    %p161 = scmp.eq.s32.totalorder %s30, 0
    %p162 = por %p160, %p161
    %s164 = sadd.s32 %s163, 1
    %p167 = scmp.eq.s32.totalorder %s24, 1
    %p168 = scmp.ne.s32.totalorder %s163, %s165
    %p169 = scmp.eq.s32.totalorder %s24, 0
    %p170 = por %p168, %p169
    %p171 = scmp.ne.s32.totalorder %s163, %s165
    %p172 = scmp.eq.s32.totalorder %s29, 1
    %p173 = por %p171, %p172
    %p174 = scmp.ne.s32.totalorder %s165, %s166
    %p175 = scmp.eq.s32.totalorder %s29, 0
    %p176 = por %p174, %p175
    %p177 = scmp.ne.s32.totalorder %s165, %s166
    %p178 = scmp.eq.s32.totalorder %s30, 1
    %p179 = por %p177, %p178
    %p181 = scmp.ne.s32.totalorder %s166, %s180
    %p182 = scmp.eq.s32.totalorder %s30, 0
    %p183 = por %p181, %p182
    %s185 = sadd.s32 %s184, 1
    %p188 = scmp.eq.s32.totalorder %s24, 1
    %p189 = scmp.ne.s32.totalorder %s184, %s186
    %p190 = scmp.eq.s32.totalorder %s24, 0
    %p191 = por %p189, %p190
    %p192 = scmp.ne.s32.totalorder %s184, %s186
    %p193 = scmp.eq.s32.totalorder %s29, 1
    %p194 = por %p192, %p193
    %p195 = scmp.ne.s32.totalorder %s186, %s187
    %p196 = scmp.eq.s32.totalorder %s29, 0
    %p197 = por %p195, %p196
    %p198 = scmp.ne.s32.totalorder %s186, %s187
    %p199 = scmp.eq.s32.totalorder %s30, 1
    %p200 = por %p198, %p199
    %p202 = scmp.ne.s32.totalorder %s187, %s201
    %p203 = scmp.eq.s32.totalorder %s30, 0
    %p204 = por %p202, %p203
    %s206 = sadd.s32 %s205, 1
    %p209 = scmp.eq.s32.totalorder %s24, 1
    %p210 = scmp.ne.s32.totalorder %s205, %s207
    %p211 = scmp.eq.s32.totalorder %s24, 0
    %p212 = por %p210, %p211
    %p213 = scmp.ne.s32.totalorder %s205, %s207
    %p214 = scmp.eq.s32.totalorder %s29, 1
    %p215 = por %p213, %p214
    %p216 = scmp.ne.s32.totalorder %s207, %s208
    %p217 = scmp.eq.s32.totalorder %s29, 0
    %p218 = por %p216, %p217
    %p219 = scmp.ne.s32.totalorder %s207, %s208
    %p220 = scmp.eq.s32.totalorder %s30, 1
    %p221 = por %p219, %p220
    %p223 = scmp.ne.s32.totalorder %s208, %s222
    %p224 = scmp.eq.s32.totalorder %s30, 0
    %p225 = por %p223, %p224
    %s227 = sadd.s32 %s226, 1
    %p230 = scmp.eq.s32.totalorder %s24, 1
    %p231 = scmp.ne.s32.totalorder %s226, %s228
    %p232 = scmp.eq.s32.totalorder %s24, 0
    %p233 = por %p231, %p232
    %p234 = scmp.ne.s32.totalorder %s226, %s228
    %p235 = scmp.eq.s32.totalorder %s29, 1
    %p236 = por %p234, %p235
    %p237 = scmp.ne.s32.totalorder %s228, %s229
    %p238 = scmp.eq.s32.totalorder %s29, 0
    %p239 = por %p237, %p238
    %p240 = scmp.ne.s32.totalorder %s228, %s229
    %p241 = scmp.eq.s32.totalorder %s30, 1
    %p242 = por %p240, %p241
    %p244 = scmp.ne.s32.totalorder %s229, %s243
    %p245 = scmp.eq.s32.totalorder %s30, 0
    %p246 = por %p244, %p245
    %s248 = sadd.s32 %s247, 1
    %p251 = scmp.eq.s32.totalorder %s24, 1
    %p252 = scmp.ne.s32.totalorder %s247, %s249
    %p253 = scmp.eq.s32.totalorder %s24, 0
    %p254 = por %p252, %p253
    %p255 = scmp.ne.s32.totalorder %s247, %s249
    %p256 = scmp.eq.s32.totalorder %s29, 1
    %p257 = por %p255, %p256
    %p258 = scmp.ne.s32.totalorder %s249, %s250
    %p259 = scmp.eq.s32.totalorder %s29, 0
    %p260 = por %p258, %p259
    %p261 = scmp.ne.s32.totalorder %s249, %s250
    %p262 = scmp.eq.s32.totalorder %s30, 1
    %p263 = por %p261, %p262
    %p265 = scmp.ne.s32.totalorder %s250, %s264
    %p266 = scmp.eq.s32.totalorder %s30, 0
    %p267 = por %p265, %p266
    %s269 = sadd.s32 %s268, 1
    %p272 = scmp.eq.s32.totalorder %s24, 1
    %p273 = scmp.ne.s32.totalorder %s268, %s270
    %p274 = scmp.eq.s32.totalorder %s24, 0
    %p275 = por %p273, %p274
    %p276 = scmp.ne.s32.totalorder %s268, %s270
    %p277 = scmp.eq.s32.totalorder %s29, 1
    %p278 = por %p276, %p277
    %p279 = scmp.ne.s32.totalorder %s270, %s271
    %p280 = scmp.eq.s32.totalorder %s29, 0
    %p281 = por %p279, %p280
    %p282 = scmp.ne.s32.totalorder %s270, %s271
    %p283 = scmp.eq.s32.totalorder %s30, 1
    %p284 = por %p282, %p283
    %p286 = scmp.ne.s32.totalorder %s271, %s285
    %p287 = scmp.eq.s32.totalorder %s30, 0
    %p288 = por %p286, %p287
    %s290 = sadd.s32 %s289, 1
    %p293 = scmp.eq.s32.totalorder %s24, 1
    %p294 = scmp.ne.s32.totalorder %s289, %s291
    %p295 = scmp.eq.s32.totalorder %s24, 0
    %p296 = por %p294, %p295
    %p297 = scmp.ne.s32.totalorder %s289, %s291
    %p298 = scmp.eq.s32.totalorder %s29, 1
    %p299 = por %p297, %p298
    %p300 = scmp.ne.s32.totalorder %s291, %s292
    %p301 = scmp.eq.s32.totalorder %s29, 0
    %p302 = por %p300, %p301
    %p303 = scmp.ne.s32.totalorder %s291, %s292
    %p304 = scmp.eq.s32.totalorder %s30, 1
    %p305 = por %p303, %p304
    %p307 = scmp.ne.s32.totalorder %s292, %s306
    %p308 = scmp.eq.s32.totalorder %s30, 0
    %p309 = por %p307, %p308
    %s311 = sadd.s32 %s310, 1
    %p314 = scmp.eq.s32.totalorder %s24, 1
    %p315 = scmp.ne.s32.totalorder %s310, %s312
    %p316 = scmp.eq.s32.totalorder %s24, 0
    %p317 = por %p315, %p316
    %p318 = scmp.ne.s32.totalorder %s310, %s312
    %p319 = scmp.eq.s32.totalorder %s29, 1
    %p320 = por %p318, %p319
    %p321 = scmp.ne.s32.totalorder %s312, %s313
    %p322 = scmp.eq.s32.totalorder %s29, 0
    %p323 = por %p321, %p322
    %p324 = scmp.ne.s32.totalorder %s312, %s313
    %p325 = scmp.eq.s32.totalorder %s30, 1
    %p326 = por %p324, %p325
    %p328 = scmp.ne.s32.totalorder %s313, %s327
    %p329 = scmp.eq.s32.totalorder %s30, 0
    %p330 = por %p328, %p329
    %s332 = sadd.s32 %s331, 1
    %p335 = scmp.eq.s32.totalorder %s24, 1
    %p336 = scmp.ne.s32.totalorder %s331, %s333
    %p337 = scmp.eq.s32.totalorder %s24, 0
    %p338 = por %p336, %p337
    %p339 = scmp.ne.s32.totalorder %s331, %s333
    %p340 = scmp.eq.s32.totalorder %s29, 1
    %p341 = por %p339, %p340
    %p342 = scmp.ne.s32.totalorder %s333, %s334
    %p343 = scmp.eq.s32.totalorder %s29, 0
    %p344 = por %p342, %p343
    %p345 = scmp.ne.s32.totalorder %s333, %s334
    %p346 = scmp.eq.s32.totalorder %s30, 1
    %p347 = por %p345, %p346
    %p349 = scmp.ne.s32.totalorder %s334, %s348
    %p350 = scmp.eq.s32.totalorder %s30, 0
    %p351 = por %p349, %p350
    %s353 = sadd.s32 %s352, 1
    %p356 = scmp.eq.s32.totalorder %s24, 1
    %p357 = scmp.ne.s32.totalorder %s352, %s354
    %p358 = scmp.eq.s32.totalorder %s24, 0
    %p359 = por %p357, %p358
    %p360 = scmp.ne.s32.totalorder %s352, %s354
    %p361 = scmp.eq.s32.totalorder %s29, 1
    %p362 = por %p360, %p361
    %p363 = scmp.ne.s32.totalorder %s354, %s355
    %p364 = scmp.eq.s32.totalorder %s29, 0
    %p365 = por %p363, %p364
    %p366 = scmp.ne.s32.totalorder %s354, %s355
    %p367 = scmp.eq.s32.totalorder %s30, 1
    %p368 = por %p366, %p367
    %p370 = scmp.ne.s32.totalorder %s355, %s369
    %p371 = scmp.eq.s32.totalorder %s30, 0
    %p372 = por %p370, %p371
    %s374 = sadd.s32 %s373, 1
    %p377 = scmp.eq.s32.totalorder %s24, 1
    %p378 = scmp.ne.s32.totalorder %s373, %s375
    %p379 = scmp.eq.s32.totalorder %s24, 0
    %p380 = por %p378, %p379
    %p381 = scmp.ne.s32.totalorder %s373, %s375
    %p382 = scmp.eq.s32.totalorder %s29, 1
    %p383 = por %p381, %p382
    %p384 = scmp.ne.s32.totalorder %s375, %s376
    %p385 = scmp.eq.s32.totalorder %s29, 0
    %p386 = por %p384, %p385
    %p387 = scmp.ne.s32.totalorder %s375, %s376
    %p388 = scmp.eq.s32.totalorder %s30, 1
    %p389 = por %p387, %p388
    %p391 = scmp.ne.s32.totalorder %s376, %s390
    %p392 = scmp.eq.s32.totalorder %s30, 0
    %p393 = por %p391, %p392
    %s395 = sadd.s32 %s394, 1
    %p398 = scmp.eq.s32.totalorder %s24, 1
    %p399 = scmp.ne.s32.totalorder %s394, %s396
    %p400 = scmp.eq.s32.totalorder %s24, 0
    %p401 = por %p399, %p400
    %p402 = scmp.ne.s32.totalorder %s394, %s396
    %p403 = scmp.eq.s32.totalorder %s29, 1
    %p404 = por %p402, %p403
    %p405 = scmp.ne.s32.totalorder %s396, %s397
    %p406 = scmp.eq.s32.totalorder %s29, 0
    %p407 = por %p405, %p406
    %p408 = scmp.ne.s32.totalorder %s396, %s397
    %p409 = scmp.eq.s32.totalorder %s30, 1
    %p410 = por %p408, %p409
    %p412 = scmp.ne.s32.totalorder %s397, %s411
    %p413 = scmp.eq.s32.totalorder %s30, 0
    %p414 = por %p412, %p413
    %s415 = ssub.s32 %s24, %s31
    %p416 = scmp.eq.s32.totalorder %s415, 0
    %s418 = sadd.s32 %s417, 1
    %s419 = scalar_select %p416, %s417, %s418
    %p422 = pneg %p416
    %p423 = scmp.eq.s32.totalorder %s24, 1
    %p424 = por %p422, %p423
    %p425 = scmp.ne.s32.totalorder %s417, %s420
    %p426 = scmp.eq.s32.totalorder %s24, 0
    %p427 = por %p425, %p426
    %p428 = scmp.ne.s32.totalorder %s417, %s420
    %p429 = scmp.eq.s32.totalorder %s29, 1
    %p430 = por %p428, %p429
    %p431 = scmp.ne.s32.totalorder %s420, %s421
    %p432 = scmp.eq.s32.totalorder %s29, 0
    %p433 = por %p431, %p432
    %p434 = scmp.ne.s32.totalorder %s420, %s421
    %p435 = scmp.eq.s32.totalorder %s30, 1
    %p436 = por %p434, %p435
    %p438 = scmp.ne.s32.totalorder %s421, %s437
    %p439 = scmp.eq.s32.totalorder %s30, 0
    %p440 = por %p438, %p439
    %p441 = scmp.le.s32.totalorder 1, %s24
    %p442 = scmp.lt.s32.totalorder %s24, 3
    %p443 = pnand %p441, %p442
    %p444 = pneg %p443
    // Predicated region
    $region9: #{tpu_custom_call.1} parent=5 // pred_check
      _
    $region10: #{tpu_custom_call.1} parent=5 // pred_check_branch
      %446 = sbr.rel (%p443) target = $region12
    $region11: #{tpu_custom_call.1} parent=5 // pred_region
      %s447 = ssub.s32 %s24, 1
      // Predicated region
      $region13: #{tpu_custom_call.1} parent=11 // pred_check
        %p448 = pneg %p71
      $region14: #{tpu_custom_call.1} parent=11 // pred_check_branch
        %450 = sbr.rel (%p448) target = $region16
      $region15: #{tpu_custom_call.1} parent=11 // pred_region
        _
      $region16: #{tpu_custom_call.1} parent=11 // pred_fallthru
        _
      // Predicated region
      $region17: #{tpu_custom_call.1} parent=11 // pred_check
        %p451 = pneg %p92
      $region18: #{tpu_custom_call.1} parent=11 // pred_check_branch
        %453 = sbr.rel (%p451) target = $region20
      $region19: #{tpu_custom_call.1} parent=11 // pred_region
        _
      $region20: #{tpu_custom_call.1} parent=11 // pred_fallthru
        _
      // Predicated region
      $region21: #{tpu_custom_call.1} parent=11 // pred_check
        %p454 = pneg %p113
      $region22: #{tpu_custom_call.1} parent=11 // pred_check_branch
        %456 = sbr.rel (%p454) target = $region24
      $region23: #{tpu_custom_call.1} parent=11 // pred_region
        _
      $region24: #{tpu_custom_call.1} parent=11 // pred_fallthru
        _
      // Predicated region
      $region25: #{tpu_custom_call.1} parent=11 // pred_check
        %p457 = pneg %p134
      $region26: #{tpu_custom_call.1} parent=11 // pred_check_branch
        %459 = sbr.rel (%p457) target = $region28
      $region27: #{tpu_custom_call.1} parent=11 // pred_region
        _
      $region28: #{tpu_custom_call.1} parent=11 // pred_fallthru
        _
      // Predicated region
      $region29: #{tpu_custom_call.1} parent=11 // pred_check
        %p460 = pneg %p155
      $region30: #{tpu_custom_call.1} parent=11 // pred_check_branch
        %462 = sbr.rel (%p460) target = $region32
      $region31: #{tpu_custom_call.1} parent=11 // pred_region
        _
      $region32: #{tpu_custom_call.1} parent=11 // pred_fallthru
        _
      // Predicated region
      $region33: #{tpu_custom_call.1} parent=11 // pred_check
        %p463 = pneg %p176
      $region34: #{tpu_custom_call.1} parent=11 // pred_check_branch
        %465 = sbr.rel (%p463) target = $region36
      $region35: #{tpu_custom_call.1} parent=11 // pred_region
        _
      $region36: #{tpu_custom_call.1} parent=11 // pred_fallthru
        _
      // Predicated region
      $region37: #{tpu_custom_call.1} parent=11 // pred_check
        %p466 = pneg %p197
      $region38: #{tpu_custom_call.1} parent=11 // pred_check_branch
        %468 = sbr.rel (%p466) target = $region40
      $region39: #{tpu_custom_call.1} parent=11 // pred_region
        _
      $region40: #{tpu_custom_call.1} parent=11 // pred_fallthru
        _
      // Predicated region
      $region41: #{tpu_custom_call.1} parent=11 // pred_check
        %p469 = pneg %p218
      $region42: #{tpu_custom_call.1} parent=11 // pred_check_branch
        %471 = sbr.rel (%p469) target = $region44
      $region43: #{tpu_custom_call.1} parent=11 // pred_region
        _
      $region44: #{tpu_custom_call.1} parent=11 // pred_fallthru
        _
      // Predicated region
      $region45: #{tpu_custom_call.1} parent=11 // pred_check
        %p472 = pneg %p239
      $region46: #{tpu_custom_call.1} parent=11 // pred_check_branch
        %474 = sbr.rel (%p472) target = $region48
      $region47: #{tpu_custom_call.1} parent=11 // pred_region
        _
      $region48: #{tpu_custom_call.1} parent=11 // pred_fallthru
        _
      // Predicated region
      $region49: #{tpu_custom_call.1} parent=11 // pred_check
        %p475 = pneg %p260
      $region50: #{tpu_custom_call.1} parent=11 // pred_check_branch
        %477 = sbr.rel (%p475) target = $region52
      $region51: #{tpu_custom_call.1} parent=11 // pred_region
        _
      $region52: #{tpu_custom_call.1} parent=11 // pred_fallthru
        _
      // Predicated region
      $region53: #{tpu_custom_call.1} parent=11 // pred_check
        %p478 = pneg %p281
      $region54: #{tpu_custom_call.1} parent=11 // pred_check_branch
        %480 = sbr.rel (%p478) target = $region56
      $region55: #{tpu_custom_call.1} parent=11 // pred_region
        _
      $region56: #{tpu_custom_call.1} parent=11 // pred_fallthru
        _
      // Predicated region
      $region57: #{tpu_custom_call.1} parent=11 // pred_check
        %p481 = pneg %p302
      $region58: #{tpu_custom_call.1} parent=11 // pred_check_branch
        %483 = sbr.rel (%p481) target = $region60
      $region59: #{tpu_custom_call.1} parent=11 // pred_region
        _
      $region60: #{tpu_custom_call.1} parent=11 // pred_fallthru
        _
      // Predicated region
      $region61: #{tpu_custom_call.1} parent=11 // pred_check
        %p484 = pneg %p323
      $region62: #{tpu_custom_call.1} parent=11 // pred_check_branch
        %486 = sbr.rel (%p484) target = $region64
      $region63: #{tpu_custom_call.1} parent=11 // pred_region
        _
      $region64: #{tpu_custom_call.1} parent=11 // pred_fallthru
        _
      // Predicated region
      $region65: #{tpu_custom_call.1} parent=11 // pred_check
        %p487 = pneg %p344
      $region66: #{tpu_custom_call.1} parent=11 // pred_check_branch
        %489 = sbr.rel (%p487) target = $region68
      $region67: #{tpu_custom_call.1} parent=11 // pred_region
        _
      $region68: #{tpu_custom_call.1} parent=11 // pred_fallthru
        _
      // Predicated region
      $region69: #{tpu_custom_call.1} parent=11 // pred_check
        %p490 = pneg %p365
      $region70: #{tpu_custom_call.1} parent=11 // pred_check_branch
        %492 = sbr.rel (%p490) target = $region72
      $region71: #{tpu_custom_call.1} parent=11 // pred_region
        _
      $region72: #{tpu_custom_call.1} parent=11 // pred_fallthru
        _
      // Predicated region
      $region73: #{tpu_custom_call.1} parent=11 // pred_check
        %p493 = pneg %p386
      $region74: #{tpu_custom_call.1} parent=11 // pred_check_branch
        %495 = sbr.rel (%p493) target = $region76
      $region75: #{tpu_custom_call.1} parent=11 // pred_region
        _
      $region76: #{tpu_custom_call.1} parent=11 // pred_fallthru
        _
      // Predicated region
      $region77: #{tpu_custom_call.1} parent=11 // pred_check
        %p496 = pneg %p407
      $region78: #{tpu_custom_call.1} parent=11 // pred_check_branch
        %498 = sbr.rel (%p496) target = $region80
      $region79: #{tpu_custom_call.1} parent=11 // pred_region
        _
      $region80: #{tpu_custom_call.1} parent=11 // pred_fallthru
        _
    $region12: #{tpu_custom_call.1} parent=5 // pred_fallthru
      _
    %p499 = scmp.lt.s32.totalorder %s24, 2
    // Predicated region
    $region81: #{tpu_custom_call.1} parent=5 // pred_check
      %p500 = pneg %p499
    $region82: #{tpu_custom_call.1} parent=5 // pred_check_branch
      %502 = sbr.rel (%p500) target = $region84
    $region83: #{tpu_custom_call.1} parent=5 // pred_region
      // Predicated region
      $region85: #{tpu_custom_call.1} parent=83 // pred_check
        %p503 = pneg %p44
      $region86: #{tpu_custom_call.1} parent=83 // pred_check_branch
        %505 = sbr.rel (%p503) target = $region88
      $region87: #{tpu_custom_call.1} parent=83 // pred_region
        %p506 = scmp.lt.s32.totalorder %s24, 1
        %s507 = scalar_select %p506, %s24, 1
        %s508 = smul.addr %s507, 2
        %s509 = smul.addr %s508, 8
        %s510 = scalar_lea.vmem %s0, %s509
      $region88: #{tpu_custom_call.1} parent=83 // pred_fallthru
        _
    $region84: #{tpu_custom_call.1} parent=5 // pred_fallthru
      _
    %p511 = scmp.le.s32.totalorder 1, %s24
    %p512 = scmp.lt.s32.totalorder %s24, 3
    %p513 = pnand %p511, %p512
    %p514 = pneg %p513
    // Predicated region
    $region89: #{tpu_custom_call.1} parent=5 // pred_check
      _
    $region90: #{tpu_custom_call.1} parent=5 // pred_check_branch
      %516 = sbr.rel (%p513) target = $region92
    $region91: #{tpu_custom_call.1} parent=5 // pred_region
      %s517 = ssub.s32 %s24, 1
      %p518 = scmp.lt.s32.totalorder %s29, 1
      %s519 = scalar_select %p518, %s29, 1
      %s520 = smul.addr %s519, 2
      %s521 = smul.addr %s520, 8
      %s522 = scalar_lea.vmem %s0, %s521
      %p523 = pneg %p50
      %p524 = pneg %p47
      %p525 = pneg %p71
      %p526 = pneg %p68
      %p527 = pneg %p92
      %p528 = pneg %p89
      %p529 = pneg %p113
      %p530 = pneg %p110
      %p531 = pneg %p134
      %p532 = pneg %p131
      %p533 = pneg %p155
      %p534 = pneg %p152
      %p535 = pneg %p176
      %p536 = pneg %p173
      %p537 = pneg %p197
      %p538 = pneg %p194
      %p539 = pneg %p218
      %p540 = pneg %p215
      %p541 = pneg %p239
      %p542 = pneg %p236
      %p543 = pneg %p260
      %p544 = pneg %p257
      %p545 = pneg %p281
      %p546 = pneg %p278
      %p547 = pneg %p302
      %p548 = pneg %p299
      %p549 = pneg %p323
      %p550 = pneg %p320
      %p551 = pneg %p344
      %p552 = pneg %p341
      %p553 = pneg %p365
      %p554 = pneg %p362
      %p555 = pneg %p386
      %p556 = pneg %p383
      %p557 = pneg %p407
      %p558 = pneg %p404
      %p559 = pneg %p433
      %p560 = pneg %p430
      %p561 = scmp.lt.s32.totalorder %s29, 1
      %s562 = scalar_select %p561, %s29, 1
      %s563 = smul.addr %s562, 2
      %s564 = smul.addr %s563, 8
      %s565 = scalar_lea.vmem %s18, %s564
      %p566 = scmp.lt.s32.totalorder %s29, 1
      %s567 = scalar_select %p566, %s29, 1
      %s568 = smul.addr %s567, 2
      %s569 = smul.addr %s568, 8
      %s570 = scalar_lea.vmem %s0, %s569
      %p571 = scmp.lt.s32.totalorder %s29, 1
      %s572 = scalar_select %p571, %s29, 1
      %s573 = smul.addr %s572, 2
      %s574 = smul.addr %s573, 8
      %s575 = scalar_lea.vmem %s18, %s574
      %vm577 = vcmask 130048
      %578 = vst.msk [vmem:[#allocation4] sm:$0xff] %vm577, 0.0
      %vm579 = vcmask 125952
      %580 = vst.msk [vmem:[#allocation4 + $0x17] sm:$0xf] %vm579, 0.0
      %v581 = vld [vmem:[%s1] sm:$0x3]
      %v582 = vld [vmem:[%s2] sm:$0x3]
      %v583 = vld [vmem:[%s570] sm:$0xff]
      %v584 = vld [vmem:[%s570 + $0x8] sm:$0xff]
      %v585 = vpack.c.bf16 %v584, %v583
      %v587 = vshrl.u32 %v585, 16
      %v589 = vshll.u32 %v585, 16
      %v591 = vrot.slane %v589, 1
      %v592 = vor.u32 %v587, %v591
      %vm593 = vcmask 31744
      %v595 = vsel %vm593, %v592, 0
      %vm597 = vcmask 1041408
      %v599 = vsel %vm597, %v582, 0
      %601 = vmatprep.subr.bf16.mxu0 0
      %602 = vmatpush1.bf16.msra.mxu0 %v599
      %603 = vmatprep.subr.bf16.mxu0 0
      %604 = vmatpush1.bf16.msra.mxu0 0
      %605 = vmatprep.subr.bf16.mxu0 0
      %606 = vmatpush1.bf16.msra.mxu0 0
      %607 = vmatprep.subr.bf16.mxu0 0
      %608 = vmatpush1.bf16.msra.mxu0 0
      %609 = vmatprep.subr.bf16.mxu0 0
      %610 = vmatpush1.bf16.msra.mxu0 0
      %611 = vmatprep.subr.bf16.mxu0 0
      %612 = vmatpush1.bf16.msra.mxu0 0
      %613 = vmatprep.subr.bf16.mxu0 0
      %614 = vmatpush1.bf16.msra.mxu0 0
      %615 = vmatprep.subr.bf16.mxu0 0
      %616 = vmatpush1.bf16.msra.mxu0 0
      %617 = vmatprep.subr.bf16.mxu0 0
      %618 = vmatpush1.bf16.msra.mxu0 0
      %619 = vmatprep.subr.bf16.mxu0 0
      %620 = vmatpush1.bf16.msra.mxu0 0
      %621 = vmatprep.subr.bf16.mxu0 0
      %622 = vmatpush1.bf16.msra.mxu0 0
      %623 = vmatprep.subr.bf16.mxu0 0
      %624 = vmatpush1.bf16.msra.mxu0 0
      %625 = vmatprep.subr.bf16.mxu0 0
      %626 = vmatpush1.bf16.msra.mxu0 0
      %627 = vmatprep.subr.bf16.mxu0 0
      %628 = vmatpush1.bf16.msra.mxu0 0
      %629 = vmatprep.subr.bf16.mxu0 0
      %630 = vmatpush1.bf16.msra.mxu0 0
      %631 = vmatprep.subr.bf16.mxu0 0
      %632 = vmatpush1.bf16.msra.mxu0 0
      %633 = vmatprep.mubr.bf16.mxu0 0
      %634 = vmatmul.mubr.bf16.gmra.mrb[0].mxu0 %v595
      %v635 = vpop.f32.mrb[0].mxu0
      %v636 = vadd.f32 0.0, %v635
      %v637 = vpop.f32.mrb[0].mxu0
      %v638 = vpop.f32.mrb[0].mxu0
      %v639 = vadd.f32 0.0, %v638
      %v640 = vpop.f32.mrb[0].mxu0
      %641 = vdwg.mxu0
      %v642 = vsel %vm593, %v585, 0
      %v645 = vsel %vm597, %v581, 0
      %647 = vmatprep.subr.bf16.mxu0 0
      %648 = vmatpush1.bf16.msra.mxu0 %v645
      %649 = vmatprep.subr.bf16.mxu0 0
      %650 = vmatpush1.bf16.msra.mxu0 0
      %651 = vmatprep.subr.bf16.mxu0 0
      %652 = vmatpush1.bf16.msra.mxu0 0
      %653 = vmatprep.subr.bf16.mxu0 0
      %654 = vmatpush1.bf16.msra.mxu0 0
      %655 = vmatprep.subr.bf16.mxu0 0
      %656 = vmatpush1.bf16.msra.mxu0 0
      %657 = vmatprep.subr.bf16.mxu0 0
      %658 = vmatpush1.bf16.msra.mxu0 0
      %659 = vmatprep.subr.bf16.mxu0 0
      %660 = vmatpush1.bf16.msra.mxu0 0
      %661 = vmatprep.subr.bf16.mxu0 0
      %662 = vmatpush1.bf16.msra.mxu0 0
      %663 = vmatprep.subr.bf16.mxu0 0
      %664 = vmatpush1.bf16.msra.mxu0 0
      %665 = vmatprep.subr.bf16.mxu0 0
      %666 = vmatpush1.bf16.msra.mxu0 0
      %667 = vmatprep.subr.bf16.mxu0 0
      %668 = vmatpush1.bf16.msra.mxu0 0
      %669 = vmatprep.subr.bf16.mxu0 0
      %670 = vmatpush1.bf16.msra.mxu0 0
      %671 = vmatprep.subr.bf16.mxu0 0
      %672 = vmatpush1.bf16.msra.mxu0 0
      %673 = vmatprep.subr.bf16.mxu0 0
      %674 = vmatpush1.bf16.msra.mxu0 0
      %675 = vmatprep.subr.bf16.mxu0 0
      %676 = vmatpush1.bf16.msra.mxu0 0
      %677 = vmatprep.subr.bf16.mxu0 0
      %678 = vmatpush1.bf16.msra.mxu0 0
      %679 = vmatprep.mubr.bf16.mxu0 0
      %680 = vmatmul.mubr.bf16.gmra.mrb[0].mxu0 %v642
      %v681 = vpop.f32.mrb[0].mxu0
      %v682 = vadd.f32 %v636, %v681
      %v683 = vpop.f32.mrb[0].mxu0
      %v684 = vpop.f32.mrb[0].mxu0
      %v685 = vadd.f32 %v639, %v684
      %v686 = vpop.f32.mrb[0].mxu0
      %687 = vdwg.mxu0
      %688 = vst.msk [vmem:[#allocation2] sm:$0xff] %vm577, %v682
      %vm689 = vcmask 129024
      %690 = vst.msk [vmem:[#allocation2 + $0x8] sm:$0x7f] %vm689, %v685
      %v691 = vld [vmem:[#allocation2] sm:$0xff]
      %v692 = vld [vmem:[#allocation2 + $0x8] sm:$0x7f]
      %v693 = vld [vmem:[%s3] sm:$0x1]
      %v694 = vld [vmem:[%s4] sm:$0x1]
      %v695 = vsel %vm577, %v691, 0.0
      %v696 = vsel %vm689, %v692, 0.0
      %v697 = vadd.f32 %v695, %v696
      %698 = vadd.xlane.f32.xlu0 %v697
      %v699 = vpop.xlane.xlu0 %698
      %v700 = vrot.slane %v699, 4
      %v701 = vadd.f32 %v699, %v700
      %v702 = vrot.slane %v701, 2
      %v703 = vadd.f32 %v701, %v702
      %v704 = vrot.slane %v703, 1
      %v705 = vadd.f32 %v703, %v704
      %s706 = vtos %v705
      %v707 = vstv %s706
      %v708 = vrcp.pop 240.0
      %v709 = vmul.f32 %v707, %v708
      %v710 = vmul.f32 %v691, %v691
      %v711 = vmul.f32 %v692, %v692
      %v712 = vsel %vm577, %v710, 0.0
      %v713 = vsel %vm689, %v711, 0.0
      %v714 = vadd.f32 %v712, %v713
      %715 = vadd.xlane.f32.xlu0 %v714
      %v716 = vpop.xlane.xlu0 %715
      %v717 = vrot.slane %v716, 4
      %v718 = vadd.f32 %v716, %v717
      %v719 = vrot.slane %v718, 2
      %v720 = vadd.f32 %v718, %v719
      %v721 = vrot.slane %v720, 1
      %v722 = vadd.f32 %v720, %v721
      %s723 = vtos %v722
      %v724 = vstv %s723
      %v725 = vmul.f32 %v724, %v708
      %v726 = vmul.f32 %v709, %v709
      %v727 = vsub.f32 %v725, %v726
      %v728 = vmax.f32 %v727, 0.0
      %v729 = vsub.f32 %v691, %v709
      %v730 = vsub.f32 %v692, %v709
      %v731 = vadd.f32 %v728, 1e-05
      %v732 = vrsqrt.pop %v731
      %v733 = vmul.f32 %v729, %v732
      %v734 = vmul.f32 %v730, %v732
      %v736 = vlaneseq
      %v737 = vshrl.u32 %v736, 7
      %v738 = vsub.s32 0, %v737
      %v739 = vrot.slane %v693, %v738
      %v741 = vmul.f32 %v733, %v739
      %v742 = vmul.f32 %v734, %v739
      %v744 = vlaneseq
      %v745 = vshrl.u32 %v744, 7
      %v746 = vsub.s32 0, %v745
      %v747 = vrot.slane %v694, %v746
      %v749 = vadd.f32 %v741, %v747
      %v750 = vadd.f32 %v742, %v747
      %v751 = vld [vmem:[%s5] sm:$0xf]
      %v752 = vld [vmem:[%s5 + $0x4] sm:$0xf]
      %v753 = vpack.c.bf16 %v750, %v749
      %v754 = vld [vmem:[%s6] sm:$0x1]
      %v756 = vlaneseq
      %v757 = vshrl.u32 %v756, 7
      %v758 = vsub.s32 0, %v757
      %v759 = vrot.slane %v754, %v758
      %v763 = vunpack.c.l.b16 %v751
      %v764 = vunpack.c.l.b16 %v752
      %v765 = vpack.c.b16 %v764, %v763
      %v768 = vsel %vm577, %v753, 0
      %770 = vmatprep.subr.bf16.mxu0 0
      %771 = vmatpush1.bf16.msra.mxu0 %v765
      %772 = vmatprep.subr.bf16.mxu0 0
      %773 = vmatpush1.bf16.msra.mxu0 0
      %774 = vmatprep.subr.bf16.mxu0 0
      %775 = vmatpush1.bf16.msra.mxu0 0
      %776 = vmatprep.subr.bf16.mxu0 0
      %777 = vmatpush1.bf16.msra.mxu0 0
      %778 = vmatprep.subr.bf16.mxu0 0
      %779 = vmatpush1.bf16.msra.mxu0 0
      %780 = vmatprep.subr.bf16.mxu0 0
      %781 = vmatpush1.bf16.msra.mxu0 0
      %782 = vmatprep.subr.bf16.mxu0 0
      %783 = vmatpush1.bf16.msra.mxu0 0
      %784 = vmatprep.subr.bf16.mxu0 0
      %785 = vmatpush1.bf16.msra.mxu0 0
      %786 = vmatprep.subr.bf16.mxu0 0
      %787 = vmatpush1.bf16.msra.mxu0 0
      %788 = vmatprep.subr.bf16.mxu0 0
      %789 = vmatpush1.bf16.msra.mxu0 0
      %790 = vmatprep.subr.bf16.mxu0 0
      %791 = vmatpush1.bf16.msra.mxu0 0
      %792 = vmatprep.subr.bf16.mxu0 0
      %793 = vmatpush1.bf16.msra.mxu0 0
      %794 = vmatprep.subr.bf16.mxu0 0
      %795 = vmatpush1.bf16.msra.mxu0 0
      %796 = vmatprep.subr.bf16.mxu0 0
      %797 = vmatpush1.bf16.msra.mxu0 0
      %798 = vmatprep.subr.bf16.mxu0 0
      %799 = vmatpush1.bf16.msra.mxu0 0
      %800 = vmatprep.subr.bf16.mxu0 0
      %801 = vmatpush1.bf16.msra.mxu0 0
      %802 = vmatprep.mubr.bf16.mxu0 0
      %803 = vmatmul.mubr.bf16.gmra.mrb[0].mxu0 %v768
      %v804 = vpop.f32.mrb[0].mxu0
      %v805 = vadd.f32 %v759, %v804
      %v806 = vpop.f32.mrb[0].mxu0
      %v807 = vpop.f32.mrb[0].mxu0
      %v808 = vadd.f32 %v759, %v807
      %v809 = vpop.f32.mrb[0].mxu0
      %810 = vdwg.mxu0
      %v811 = vld [vmem:[%s8] sm:$0x3f]
      %v812 = vld [vmem:[%s7] sm:$0xf]
      %v813 = vpack.c.bf16 %v808, %v805
      %v814 = vlaneseq
      %v815 = vshrl.u32 %v814, 7
      %v816 = vsub.s32 0, %v815
      %v817 = vrot.slane %v811, %v816
      %vm818 = vcmask 64512
      %v820 = vsel %vm818, %v813, 0
      %vm822 = vcmask 1043456
      %v824 = vsel %vm822, %v812, 0
      %826 = vmatprep.subr.bf16.mxu0 0
      %827 = vmatpush1.bf16.msra.mxu0 %v824
      %828 = vmatprep.subr.bf16.mxu0 0
      %829 = vmatpush1.bf16.msra.mxu0 0
      %830 = vmatprep.subr.bf16.mxu0 0
      %831 = vmatpush1.bf16.msra.mxu0 0
      %832 = vmatprep.subr.bf16.mxu0 0
      %833 = vmatpush1.bf16.msra.mxu0 0
      %834 = vmatprep.subr.bf16.mxu0 0
      %835 = vmatpush1.bf16.msra.mxu0 0
      %836 = vmatprep.subr.bf16.mxu0 0
      %837 = vmatpush1.bf16.msra.mxu0 0
      %838 = vmatprep.subr.bf16.mxu0 0
      %839 = vmatpush1.bf16.msra.mxu0 0
      %840 = vmatprep.subr.bf16.mxu0 0
      %841 = vmatpush1.bf16.msra.mxu0 0
      %842 = vmatprep.subr.bf16.mxu0 0
      %843 = vmatpush1.bf16.msra.mxu0 0
      %844 = vmatprep.subr.bf16.mxu0 0
      %845 = vmatpush1.bf16.msra.mxu0 0
      %846 = vmatprep.subr.bf16.mxu0 0
      %847 = vmatpush1.bf16.msra.mxu0 0
      %848 = vmatprep.subr.bf16.mxu0 0
      %849 = vmatpush1.bf16.msra.mxu0 0
      %850 = vmatprep.subr.bf16.mxu0 0
      %851 = vmatpush1.bf16.msra.mxu0 0
      %852 = vmatprep.subr.bf16.mxu0 0
      %853 = vmatpush1.bf16.msra.mxu0 0
      %854 = vmatprep.subr.bf16.mxu0 0
      %855 = vmatpush1.bf16.msra.mxu0 0
      %856 = vmatprep.subr.bf16.mxu0 0
      %857 = vmatpush1.bf16.msra.mxu0 0
      %858 = vmatprep.mubr.bf16.mxu0 0
      %859 = vmatmul.mubr.bf16.gmra.mrb[0].mxu0 %v820
      %v860 = vpop.f32.mrb[0].mxu0
      %v861 = vadd.f32 %v817, %v860
      %v862 = vpop.f32.mrb[0].mxu0
      %v863 = vpop.f32.mrb[0].mxu0
      %v864 = vadd.f32 %v817, %v863
      %v865 = vpop.f32.mrb[0].mxu0
      %866 = vdwg.mxu0
      %vm867 = vcmp.ge.f32.partialorder %v861, 0.0
      %vm868 = vcmp.ge.f32.partialorder %v864, 0.0
      %v869 = vmul.f32 %v861, 0.25
      %v870 = vmul.f32 %v864, 0.25
      %v871 = vsel %vm867, %v861, %v869
      %v872 = vsel %vm868, %v864, %v870
      %v873 = vsel %vm577, %v871, 0.0
      %v874 = vsel %vm689, %v872, 0.0
      %v875 = vadd.f32 %v873, %v874
      %876 = vadd.xlane.f32.xlu0 %v875
      %v877 = vpop.xlane.xlu0 %876
      %v878 = vrot.slane %v877, 4
      %v879 = vadd.f32 %v877, %v878
      %v880 = vrot.slane %v879, 2
      %v881 = vadd.f32 %v879, %v880
      %v882 = vrot.slane %v881, 1
      %v883 = vadd.f32 %v881, %v882
      %s884 = vtos %v883
      %v885 = vstv %s884
      %v886 = vmul.f32 %v885, %v708
      %v887 = vmul.f32 %v871, %v871
      %v888 = vmul.f32 %v872, %v872
      %v889 = vsel %vm577, %v887, 0.0
      %v890 = vsel %vm689, %v888, 0.0
      %v891 = vadd.f32 %v889, %v890
      %892 = vadd.xlane.f32.xlu0 %v891
      %v893 = vpop.xlane.xlu0 %892
      %v894 = vrot.slane %v893, 4
      %v895 = vadd.f32 %v893, %v894
      %v896 = vrot.slane %v895, 2
      %v897 = vadd.f32 %v895, %v896
      %v898 = vrot.slane %v897, 1
      %v899 = vadd.f32 %v897, %v898
      %s900 = vtos %v899
      %v901 = vstv %s900
      %v902 = vmul.f32 %v901, %v708
      %v903 = vmul.f32 %v886, %v886
      %v904 = vsub.f32 %v902, %v903
      %v905 = vmax.f32 %v904, 0.0
      %v906 = vsub.f32 %v871, %v886
      %v907 = vsub.f32 %v872, %v886
      %v908 = vadd.f32 %v905, 1e-05
      %v909 = vrsqrt.pop %v908
      %v910 = vmul.f32 %v906, %v909
      %v911 = vmul.f32 %v907, %v909
      %v912 = vlaneseq
      %v913 = vshrl.u32 %v912, 7
      %v914 = vsub.s32 1, %v913
      %v915 = vrot.slane %v811, %v914
      %v916 = vmul.f32 %v910, %v915
      %v917 = vmul.f32 %v911, %v915
      %v918 = vlaneseq
      %v919 = vshrl.u32 %v918, 7
      %v920 = vsub.s32 2, %v919
      %v921 = vrot.slane %v811, %v920
      %v922 = vadd.f32 %v916, %v921
      %v923 = vadd.f32 %v917, %v921
      %v924 = vld [vmem:[%s9] sm:$0x7]
      %925 = vst.msk [vmem:[#allocation4 + $0x8] sm:$0xff] %vm577, %v922
      %926 = vst.msk [vmem:[#allocation4 + $0x10] sm:$0x7f] %vm689, %v923
      %v927 = vld [vmem:[#allocation4 + $0x7] sm:$0xff]
      %v928 = vld [vmem:[#allocation4 + $0xf] sm:$0x7f]
      %v929 = vlaneseq
      %v930 = vshrl.u32 %v929, 7
      %v931 = vsub.s32 0, %v930
      %v932 = vrot.slane %v924, %v931
      %v933 = vmul.f32 %v932, %v927
      %v934 = vmul.f32 %v932, %v928
      %v935 = vld [vmem:[#allocation4 + $0x8] sm:$0xff]
      %v936 = vld [vmem:[#allocation4 + $0x10] sm:$0x7f]
      %v937 = vlaneseq
      %v938 = vshrl.u32 %v937, 7
      %v939 = vsub.s32 1, %v938
      %v940 = vrot.slane %v924, %v939
      %v941 = vmul.f32 %v940, %v935
      %v942 = vmul.f32 %v940, %v936
      %v943 = vadd.f32 %v933, %v941
      %v944 = vadd.f32 %v934, %v942
      %v945 = vld [vmem:[#allocation4 + $0x9] sm:$0xff]
      %v946 = vld [vmem:[#allocation4 + $0x11] sm:$0x7f]
      %v947 = vlaneseq
      %v948 = vshrl.u32 %v947, 7
      %v949 = vsub.s32 2, %v948
      %v950 = vrot.slane %v924, %v949
      %v951 = vmul.f32 %v950, %v945
      %v952 = vmul.f32 %v950, %v946
      %v953 = vadd.f32 %v943, %v951
      %v954 = vadd.f32 %v944, %v952
      %955 = vst.msk [vmem:[#allocation3] sm:$0xff] %vm577, %v953
      %956 = vst.msk [vmem:[#allocation3 + $0x8] sm:$0x7f] %vm689, %v954
      %v957 = vld [vmem:[#allocation3] sm:$0xff]
      %v958 = vld [vmem:[#allocation3 + $0x8] sm:$0x7f]
      %v959 = vlaneseq
      %v960 = vshrl.u32 %v959, 7
      %v961 = vsub.s32 3, %v960
      %v962 = vrot.slane %v811, %v961
      %v963 = vadd.f32 %v957, %v962
      %v964 = vadd.f32 %v958, %v962
      %vm965 = vcmp.ge.f32.partialorder %v963, 0.0
      %vm966 = vcmp.ge.f32.partialorder %v964, 0.0
      %v967 = vmul.f32 %v963, 0.25
      %v968 = vmul.f32 %v964, 0.25
      %v969 = vsel %vm965, %v963, %v967
      %v970 = vsel %vm966, %v964, %v968
      %v971 = vsel %vm577, %v969, 0.0
      %v972 = vsel %vm689, %v970, 0.0
      %v973 = vadd.f32 %v971, %v972
      %974 = vadd.xlane.f32.xlu0 %v973
      %v975 = vpop.xlane.xlu0 %974
      %v976 = vrot.slane %v975, 4
      %v977 = vadd.f32 %v975, %v976
      %v978 = vrot.slane %v977, 2
      %v979 = vadd.f32 %v977, %v978
      %v980 = vrot.slane %v979, 1
      %v981 = vadd.f32 %v979, %v980
      %s982 = vtos %v981
      %v983 = vstv %s982
      %v984 = vmul.f32 %v983, %v708
      %v985 = vmul.f32 %v969, %v969
      %v986 = vmul.f32 %v970, %v970
      %v987 = vsel %vm577, %v985, 0.0
      %v988 = vsel %vm689, %v986, 0.0
      %v989 = vadd.f32 %v987, %v988
      %990 = vadd.xlane.f32.xlu0 %v989
      %v991 = vpop.xlane.xlu0 %990
      %v992 = vrot.slane %v991, 4
      %v993 = vadd.f32 %v991, %v992
      %v994 = vrot.slane %v993, 2
      %v995 = vadd.f32 %v993, %v994
      %v996 = vrot.slane %v995, 1
      %v997 = vadd.f32 %v995, %v996
      %s998 = vtos %v997
      %v999 = vstv %s998
      %v1000 = vmul.f32 %v999, %v708
      %v1001 = vmul.f32 %v984, %v984
      %v1002 = vsub.f32 %v1000, %v1001
      %v1003 = vmax.f32 %v1002, 0.0
      %v1004 = vsub.f32 %v969, %v984
      %v1005 = vsub.f32 %v970, %v984
      %v1006 = vadd.f32 %v1003, 1e-05
      %v1007 = vrsqrt.pop %v1006
      %v1008 = vmul.f32 %v1004, %v1007
      %v1009 = vmul.f32 %v1005, %v1007
      %v1010 = vlaneseq
      %v1011 = vshrl.u32 %v1010, 7
      %v1012 = vsub.s32 4, %v1011
      %v1013 = vrot.slane %v811, %v1012
      %v1014 = vmul.f32 %v1008, %v1013
      %v1015 = vmul.f32 %v1009, %v1013
      %v1016 = vlaneseq
      %v1017 = vshrl.u32 %v1016, 7
      %v1018 = vsub.s32 5, %v1017
      %v1019 = vrot.slane %v811, %v1018
      %v1020 = vadd.f32 %v1014, %v1019
      %v1021 = vadd.f32 %v1015, %v1019
      %v1022 = vld [vmem:[%s10] sm:$0xf]
      %v1023 = vld [vmem:[%s10 + $0x4] sm:$0xf]
      %v1024 = vpack.c.bf16 %v1021, %v1020
      %v1025 = vld [vmem:[%s11] sm:$0x1]
      %v1027 = vlaneseq
      %v1028 = vshrl.u32 %v1027, 7
      %v1029 = vsub.s32 0, %v1028
      %v1030 = vrot.slane %v1025, %v1029
      %v1034 = vunpack.c.l.b16 %v1022
      %v1035 = vunpack.c.l.b16 %v1023
      %v1036 = vpack.c.b16 %v1035, %v1034
      %v1039 = vsel %vm577, %v1024, 0
      %1041 = vmatprep.subr.bf16.mxu0 0
      %1042 = vmatpush1.bf16.msra.mxu0 %v1036
      %1043 = vmatprep.subr.bf16.mxu0 0
      %1044 = vmatpush1.bf16.msra.mxu0 0
      %1045 = vmatprep.subr.bf16.mxu0 0
      %1046 = vmatpush1.bf16.msra.mxu0 0
      %1047 = vmatprep.subr.bf16.mxu0 0
      %1048 = vmatpush1.bf16.msra.mxu0 0
      %1049 = vmatprep.subr.bf16.mxu0 0
      %1050 = vmatpush1.bf16.msra.mxu0 0
      %1051 = vmatprep.subr.bf16.mxu0 0
      %1052 = vmatpush1.bf16.msra.mxu0 0
      %1053 = vmatprep.subr.bf16.mxu0 0
      %1054 = vmatpush1.bf16.msra.mxu0 0
      %1055 = vmatprep.subr.bf16.mxu0 0
      %1056 = vmatpush1.bf16.msra.mxu0 0
      %1057 = vmatprep.subr.bf16.mxu0 0
      %1058 = vmatpush1.bf16.msra.mxu0 0
      %1059 = vmatprep.subr.bf16.mxu0 0
      %1060 = vmatpush1.bf16.msra.mxu0 0
      %1061 = vmatprep.subr.bf16.mxu0 0
      %1062 = vmatpush1.bf16.msra.mxu0 0
      %1063 = vmatprep.subr.bf16.mxu0 0
      %1064 = vmatpush1.bf16.msra.mxu0 0
      %1065 = vmatprep.subr.bf16.mxu0 0
      %1066 = vmatpush1.bf16.msra.mxu0 0
      %1067 = vmatprep.subr.bf16.mxu0 0
      %1068 = vmatpush1.bf16.msra.mxu0 0
      %1069 = vmatprep.subr.bf16.mxu0 0
      %1070 = vmatpush1.bf16.msra.mxu0 0
      %1071 = vmatprep.subr.bf16.mxu0 0
      %1072 = vmatpush1.bf16.msra.mxu0 0
      %1073 = vmatprep.mubr.bf16.mxu0 0
      %1074 = vmatmul.mubr.bf16.gmra.mrb[0].mxu0 %v1039
      %v1075 = vpop.f32.mrb[0].mxu0
      %v1076 = vadd.f32 %v1030, %v1075
      %v1077 = vpop.f32.mrb[0].mxu0
      %v1078 = vpop.f32.mrb[0].mxu0
      %v1079 = vadd.f32 %v1030, %v1078
      %v1080 = vpop.f32.mrb[0].mxu0
      %1081 = vdwg.mxu0
      %v1082 = vld [vmem:[%s12] sm:$0xf]
      %v1083 = vld [vmem:[%s12 + $0x4] sm:$0xf]
      %v1086 = vunpack.c.l.b16 %v1082
      %v1087 = vunpack.c.l.b16 %v1083
      %v1088 = vpack.c.b16 %v1087, %v1086
      %1090 = vmatprep.subr.bf16.mxu0 0
      %1091 = vmatpush1.bf16.msra.mxu0 %v1088
      %1092 = vmatprep.subr.bf16.mxu0 0
      %1093 = vmatpush1.bf16.msra.mxu0 0
      %1094 = vmatprep.subr.bf16.mxu0 0
      %1095 = vmatpush1.bf16.msra.mxu0 0
      %1096 = vmatprep.subr.bf16.mxu0 0
      %1097 = vmatpush1.bf16.msra.mxu0 0
      %1098 = vmatprep.subr.bf16.mxu0 0
      %1099 = vmatpush1.bf16.msra.mxu0 0
      %1100 = vmatprep.subr.bf16.mxu0 0
      %1101 = vmatpush1.bf16.msra.mxu0 0
      %1102 = vmatprep.subr.bf16.mxu0 0
      %1103 = vmatpush1.bf16.msra.mxu0 0
      %1104 = vmatprep.subr.bf16.mxu0 0
      %1105 = vmatpush1.bf16.msra.mxu0 0
      %1106 = vmatprep.subr.bf16.mxu0 0
      %1107 = vmatpush1.bf16.msra.mxu0 0
      %1108 = vmatprep.subr.bf16.mxu0 0
      %1109 = vmatpush1.bf16.msra.mxu0 0
      %1110 = vmatprep.subr.bf16.mxu0 0
      %1111 = vmatpush1.bf16.msra.mxu0 0
      %1112 = vmatprep.subr.bf16.mxu0 0
      %1113 = vmatpush1.bf16.msra.mxu0 0
      %1114 = vmatprep.subr.bf16.mxu0 0
      %1115 = vmatpush1.bf16.msra.mxu0 0
      %1116 = vmatprep.subr.bf16.mxu0 0
      %1117 = vmatpush1.bf16.msra.mxu0 0
      %1118 = vmatprep.subr.bf16.mxu0 0
      %1119 = vmatpush1.bf16.msra.mxu0 0
      %1120 = vmatprep.subr.bf16.mxu0 0
      %1121 = vmatpush1.bf16.msra.mxu0 0
      %1122 = vmatprep.mubr.bf16.mxu0 0
      %1123 = vmatmul.mubr.bf16.gmra.mrb[0].mxu0 %v1039
      %v1124 = vpop.f32.mrb[0].mxu0
      %v1125 = vadd.f32 0.0, %v1124
      %v1126 = vpop.f32.mrb[0].mxu0
      %v1127 = vpop.f32.mrb[0].mxu0
      %v1128 = vadd.f32 0.0, %v1127
      %v1129 = vpop.f32.mrb[0].mxu0
      %1130 = vdwg.mxu0
      %v1131 = vadd.f32 %v805, %v1125
      %v1132 = vadd.f32 %v808, %v1128
      %v1133 = vld [vmem:[%s13] sm:$0x1]
      %v1135 = vlaneseq
      %v1136 = vshrl.u32 %v1135, 7
      %v1137 = vsub.s32 0, %v1136
      %v1138 = vrot.slane %v1133, %v1137
      %v1140 = vadd.f32 %v1131, %v1138
      %v1141 = vadd.f32 %v1132, %v1138
      %s1142 = scalar_lea.vmem %s8, 8
      %v1143 = vld [vmem:[%s1142] sm:$0x3f]
      %s1144 = scalar_lea.vmem %s7, 4
      %v1145 = vld [vmem:[%s1144] sm:$0xf]
      %v1146 = vpack.c.bf16 %v1141, %v1140
      %v1147 = vlaneseq
      %v1148 = vshrl.u32 %v1147, 7
      %v1149 = vsub.s32 0, %v1148
      %v1150 = vrot.slane %v1143, %v1149
      %v1152 = vsel %vm818, %v1146, 0
      %v1155 = vsel %vm822, %v1145, 0
      %1157 = vmatprep.subr.bf16.mxu0 0
      %1158 = vmatpush1.bf16.msra.mxu0 %v1155
      %1159 = vmatprep.subr.bf16.mxu0 0
      %1160 = vmatpush1.bf16.msra.mxu0 0
      %1161 = vmatprep.subr.bf16.mxu0 0
      %1162 = vmatpush1.bf16.msra.mxu0 0
      %1163 = vmatprep.subr.bf16.mxu0 0
      %1164 = vmatpush1.bf16.msra.mxu0 0
      %1165 = vmatprep.subr.bf16.mxu0 0
      %1166 = vmatpush1.bf16.msra.mxu0 0
      %1167 = vmatprep.subr.bf16.mxu0 0
      %1168 = vmatpush1.bf16.msra.mxu0 0
      %1169 = vmatprep.subr.bf16.mxu0 0
      %1170 = vmatpush1.bf16.msra.mxu0 0
      %1171 = vmatprep.subr.bf16.mxu0 0
      %1172 = vmatpush1.bf16.msra.mxu0 0
      %1173 = vmatprep.subr.bf16.mxu0 0
      %1174 = vmatpush1.bf16.msra.mxu0 0
      %1175 = vmatprep.subr.bf16.mxu0 0
      %1176 = vmatpush1.bf16.msra.mxu0 0
      %1177 = vmatprep.subr.bf16.mxu0 0
      %1178 = vmatpush1.bf16.msra.mxu0 0
      %1179 = vmatprep.subr.bf16.mxu0 0
      %1180 = vmatpush1.bf16.msra.mxu0 0
      %1181 = vmatprep.subr.bf16.mxu0 0
      %1182 = vmatpush1.bf16.msra.mxu0 0
      %1183 = vmatprep.subr.bf16.mxu0 0
      %1184 = vmatpush1.bf16.msra.mxu0 0
      %1185 = vmatprep.subr.bf16.mxu0 0
      %1186 = vmatpush1.bf16.msra.mxu0 0
      %1187 = vmatprep.subr.bf16.mxu0 0
      %1188 = vmatpush1.bf16.msra.mxu0 0
      %1189 = vmatprep.mubr.bf16.mxu0 0
      %1190 = vmatmul.mubr.bf16.gmra.mrb[0].mxu0 %v1152
      %v1191 = vpop.f32.mrb[0].mxu0
      %v1192 = vadd.f32 %v1150, %v1191
      %v1193 = vpop.f32.mrb[0].mxu0
      %v1194 = vpop.f32.mrb[0].mxu0
      %v1195 = vadd.f32 %v1150, %v1194
      %v1196 = vpop.f32.mrb[0].mxu0
      %1197 = vdwg.mxu0
      %vm1198 = vcmp.ge.f32.partialorder %v1192, 0.0
      %vm1199 = vcmp.ge.f32.partialorder %v1195, 0.0
      %v1200 = vmul.f32 %v1192, 0.25
      %v1201 = vmul.f32 %v1195, 0.25
      %v1202 = vsel %vm1198, %v1192, %v1200
      %v1203 = vsel %vm1199, %v1195, %v1201
      %v1204 = vsel %vm577, %v1202, 0.0
      %v1205 = vsel %vm689, %v1203, 0.0
      %v1206 = vadd.f32 %v1204, %v1205
      %1207 = vadd.xlane.f32.xlu0 %v1206
      %v1208 = vpop.xlane.xlu0 %1207
      %v1209 = vrot.slane %v1208, 4
      %v1210 = vadd.f32 %v1208, %v1209
      %v1211 = vrot.slane %v1210, 2
      %v1212 = vadd.f32 %v1210, %v1211
      %v1213 = vrot.slane %v1212, 1
      %v1214 = vadd.f32 %v1212, %v1213
      %s1215 = vtos %v1214
      %v1216 = vstv %s1215
      %v1217 = vmul.f32 %v1216, %v708
      %v1218 = vmul.f32 %v1202, %v1202
      %v1219 = vmul.f32 %v1203, %v1203
      %v1220 = vsel %vm577, %v1218, 0.0
      %v1221 = vsel %vm689, %v1219, 0.0
      %v1222 = vadd.f32 %v1220, %v1221
      %1223 = vadd.xlane.f32.xlu0 %v1222
      %v1224 = vpop.xlane.xlu0 %1223
      %v1225 = vrot.slane %v1224, 4
      %v1226 = vadd.f32 %v1224, %v1225
      %v1227 = vrot.slane %v1226, 2
      %v1228 = vadd.f32 %v1226, %v1227
      %v1229 = vrot.slane %v1228, 1
      %v1230 = vadd.f32 %v1228, %v1229
      %s1231 = vtos %v1230
      %v1232 = vstv %s1231
      %v1233 = vmul.f32 %v1232, %v708
      %v1234 = vmul.f32 %v1217, %v1217
      %v1235 = vsub.f32 %v1233, %v1234
      %v1236 = vmax.f32 %v1235, 0.0
      %v1237 = vsub.f32 %v1202, %v1217
      %v1238 = vsub.f32 %v1203, %v1217
      %v1239 = vadd.f32 %v1236, 1e-05
      %v1240 = vrsqrt.pop %v1239
      %v1241 = vmul.f32 %v1237, %v1240
      %v1242 = vmul.f32 %v1238, %v1240
      %v1243 = vlaneseq
      %v1244 = vshrl.u32 %v1243, 7
      %v1245 = vsub.s32 1, %v1244
      %v1246 = vrot.slane %v1143, %v1245
      %v1247 = vmul.f32 %v1241, %v1246
      %v1248 = vmul.f32 %v1242, %v1246
      %v1249 = vlaneseq
      %v1250 = vshrl.u32 %v1249, 7
      %v1251 = vsub.s32 2, %v1250
      %v1252 = vrot.slane %v1143, %v1251
      %v1253 = vadd.f32 %v1247, %v1252
      %v1254 = vadd.f32 %v1248, %v1252
      %s1255 = scalar_lea.vmem %s9, 4
      %v1256 = vld [vmem:[%s1255] sm:$0x7]
      %1257 = vst.msk [vmem:[#allocation4 + $0x8] sm:$0xff] %vm577, %v1253
      %1258 = vst.msk [vmem:[#allocation4 + $0x10] sm:$0x7f] %vm689, %v1254
      %v1259 = vld [vmem:[#allocation4 + $0x6] sm:$0xff]
      %v1260 = vld [vmem:[#allocation4 + $0xe] sm:$0x7f]
      %v1261 = vlaneseq
      %v1262 = vshrl.u32 %v1261, 7
      %v1263 = vsub.s32 0, %v1262
      %v1264 = vrot.slane %v1256, %v1263
      %v1265 = vmul.f32 %v1264, %v1259
      %v1266 = vmul.f32 %v1264, %v1260
      %v1267 = vld [vmem:[#allocation4 + $0x8] sm:$0xff]
      %v1268 = vld [vmem:[#allocation4 + $0x10] sm:$0x7f]
      %v1269 = vlaneseq
      %v1270 = vshrl.u32 %v1269, 7
      %v1271 = vsub.s32 1, %v1270
      %v1272 = vrot.slane %v1256, %v1271
      %v1273 = vmul.f32 %v1272, %v1267
      %v1274 = vmul.f32 %v1272, %v1268
      %v1275 = vadd.f32 %v1265, %v1273
      %v1276 = vadd.f32 %v1266, %v1274
      %v1277 = vld [vmem:[#allocation4 + $0xa] sm:$0xff]
      %v1278 = vld [vmem:[#allocation4 + $0x12] sm:$0x7f]
      %v1279 = vlaneseq
      %v1280 = vshrl.u32 %v1279, 7
      %v1281 = vsub.s32 2, %v1280
      %v1282 = vrot.slane %v1256, %v1281
      %v1283 = vmul.f32 %v1282, %v1277
      %v1284 = vmul.f32 %v1282, %v1278
      %v1285 = vadd.f32 %v1275, %v1283
      %v1286 = vadd.f32 %v1276, %v1284
      %1287 = vst.msk [vmem:[#allocation3] sm:$0xff] %vm577, %v1285
      %1288 = vst.msk [vmem:[#allocation3 + $0x8] sm:$0x7f] %vm689, %v1286
      %v1289 = vld [vmem:[#allocation3] sm:$0xff]
      %v1290 = vld [vmem:[#allocation3 + $0x8] sm:$0x7f]
      %v1291 = vlaneseq
      %v1292 = vshrl.u32 %v1291, 7
      %v1293 = vsub.s32 3, %v1292
      %v1294 = vrot.slane %v1143, %v1293
      %v1295 = vadd.f32 %v1289, %v1294
      %v1296 = vadd.f32 %v1290, %v1294
      %vm1297 = vcmp.ge.f32.partialorder %v1295, 0.0
      %vm1298 = vcmp.ge.f32.partialorder %v1296, 0.0
      %v1299 = vmul.f32 %v1295, 0.25
      %v1300 = vmul.f32 %v1296, 0.25
      %v1301 = vsel %vm1297, %v1295, %v1299
      %v1302 = vsel %vm1298, %v1296, %v1300
      %v1303 = vsel %vm577, %v1301, 0.0
      %v1304 = vsel %vm689, %v1302, 0.0
      %v1305 = vadd.f32 %v1303, %v1304
      %1306 = vadd.xlane.f32.xlu0 %v1305
      %v1307 = vpop.xlane.xlu0 %1306
      %v1308 = vrot.slane %v1307, 4
      %v1309 = vadd.f32 %v1307, %v1308
      %v1310 = vrot.slane %v1309, 2
      %v1311 = vadd.f32 %v1309, %v1310
      %v1312 = vrot.slane %v1311, 1
      %v1313 = vadd.f32 %v1311, %v1312
      %s1314 = vtos %v1313
      %v1315 = vstv %s1314
      %v1316 = vmul.f32 %v1315, %v708
      %v1317 = vmul.f32 %v1301, %v1301
      %v1318 = vmul.f32 %v1302, %v1302
      %v1319 = vsel %vm577, %v1317, 0.0
      %v1320 = vsel %vm689, %v1318, 0.0
      %v1321 = vadd.f32 %v1319, %v1320
      %1322 = vadd.xlane.f32.xlu0 %v1321
      %v1323 = vpop.xlane.xlu0 %1322
      %v1324 = vrot.slane %v1323, 4
      %v1325 = vadd.f32 %v1323, %v1324
      %v1326 = vrot.slane %v1325, 2
      %v1327 = vadd.f32 %v1325, %v1326
      %v1328 = vrot.slane %v1327, 1
      %v1329 = vadd.f32 %v1327, %v1328
      %s1330 = vtos %v1329
      %v1331 = vstv %s1330
      %v1332 = vmul.f32 %v1331, %v708
      %v1333 = vmul.f32 %v1316, %v1316
      %v1334 = vsub.f32 %v1332, %v1333
      %v1335 = vmax.f32 %v1334, 0.0
      %v1336 = vsub.f32 %v1301, %v1316
      %v1337 = vsub.f32 %v1302, %v1316
      %v1338 = vadd.f32 %v1335, 1e-05
      %v1339 = vrsqrt.pop %v1338
      %v1340 = vmul.f32 %v1336, %v1339
      %v1341 = vmul.f32 %v1337, %v1339
      %v1342 = vlaneseq
      %v1343 = vshrl.u32 %v1342, 7
      %v1344 = vsub.s32 4, %v1343
      %v1345 = vrot.slane %v1143, %v1344
      %v1346 = vmul.f32 %v1340, %v1345
      %v1347 = vmul.f32 %v1341, %v1345
      %v1348 = vlaneseq
      %v1349 = vshrl.u32 %v1348, 7
      %v1350 = vsub.s32 5, %v1349
      %v1351 = vrot.slane %v1143, %v1350
      %v1352 = vadd.f32 %v1346, %v1351
      %v1353 = vadd.f32 %v1347, %v1351
      %s1354 = scalar_lea.vmem %s10, 8
      %v1355 = vld [vmem:[%s1354] sm:$0xf]
      %v1356 = vld [vmem:[%s1354 + $0x4] sm:$0xf]
      %v1357 = vpack.c.bf16 %v1353, %v1352
      %v1360 = vunpack.c.l.b16 %v1355
      %v1361 = vunpack.c.l.b16 %v1356
      %v1362 = vpack.c.b16 %v1361, %v1360
      %v1365 = vsel %vm577, %v1357, 0
      %1367 = vmatprep.subr.bf16.mxu0 0
      %1368 = vmatpush1.bf16.msra.mxu0 %v1362
      %1369 = vmatprep.subr.bf16.mxu0 0
      %1370 = vmatpush1.bf16.msra.mxu0 0
      %1371 = vmatprep.subr.bf16.mxu0 0
      %1372 = vmatpush1.bf16.msra.mxu0 0
      %1373 = vmatprep.subr.bf16.mxu0 0
      %1374 = vmatpush1.bf16.msra.mxu0 0
      %1375 = vmatprep.subr.bf16.mxu0 0
      %1376 = vmatpush1.bf16.msra.mxu0 0
      %1377 = vmatprep.subr.bf16.mxu0 0
      %1378 = vmatpush1.bf16.msra.mxu0 0
      %1379 = vmatprep.subr.bf16.mxu0 0
      %1380 = vmatpush1.bf16.msra.mxu0 0
      %1381 = vmatprep.subr.bf16.mxu0 0
      %1382 = vmatpush1.bf16.msra.mxu0 0
      %1383 = vmatprep.subr.bf16.mxu0 0
      %1384 = vmatpush1.bf16.msra.mxu0 0
      %1385 = vmatprep.subr.bf16.mxu0 0
      %1386 = vmatpush1.bf16.msra.mxu0 0
      %1387 = vmatprep.subr.bf16.mxu0 0
      %1388 = vmatpush1.bf16.msra.mxu0 0
      %1389 = vmatprep.subr.bf16.mxu0 0
      %1390 = vmatpush1.bf16.msra.mxu0 0
      %1391 = vmatprep.subr.bf16.mxu0 0
      %1392 = vmatpush1.bf16.msra.mxu0 0
      %1393 = vmatprep.subr.bf16.mxu0 0
      %1394 = vmatpush1.bf16.msra.mxu0 0
      %1395 = vmatprep.subr.bf16.mxu0 0
      %1396 = vmatpush1.bf16.msra.mxu0 0
      %1397 = vmatprep.subr.bf16.mxu0 0
      %1398 = vmatpush1.bf16.msra.mxu0 0
      %1399 = vmatprep.mubr.bf16.mxu0 0
      %1400 = vmatmul.mubr.bf16.gmra.mrb[0].mxu0 %v1365
      %v1401 = vpop.f32.mrb[0].mxu0
      %v1402 = vadd.f32 0.0, %v1401
      %v1403 = vpop.f32.mrb[0].mxu0
      %v1404 = vpop.f32.mrb[0].mxu0
      %v1405 = vadd.f32 0.0, %v1404
      %v1406 = vpop.f32.mrb[0].mxu0
      %1407 = vdwg.mxu0
      %v1408 = vadd.f32 %v1076, %v1402
      %v1409 = vadd.f32 %v1079, %v1405
      %s1410 = scalar_lea.vmem %s11, 1
      %v1411 = vld [vmem:[%s1410] sm:$0x1]
      %v1413 = vlaneseq
      %v1414 = vshrl.u32 %v1413, 7
      %v1415 = vsub.s32 0, %v1414
      %v1416 = vrot.slane %v1411, %v1415
      %v1418 = vadd.f32 %v1408, %v1416
      %v1419 = vadd.f32 %v1409, %v1416
      %s1420 = scalar_lea.vmem %s12, 8
      %v1421 = vld [vmem:[%s1420] sm:$0xf]
      %v1422 = vld [vmem:[%s1420 + $0x4] sm:$0xf]
      %v1425 = vunpack.c.l.b16 %v1421
      %v1426 = vunpack.c.l.b16 %v1422
      %v1427 = vpack.c.b16 %v1426, %v1425
      %1429 = vmatprep.subr.bf16.mxu0 0
      %1430 = vmatpush1.bf16.msra.mxu0 %v1427
      %1431 = vmatprep.subr.bf16.mxu0 0
      %1432 = vmatpush1.bf16.msra.mxu0 0
      %1433 = vmatprep.subr.bf16.mxu0 0
      %1434 = vmatpush1.bf16.msra.mxu0 0
      %1435 = vmatprep.subr.bf16.mxu0 0
      %1436 = vmatpush1.bf16.msra.mxu0 0
      %1437 = vmatprep.subr.bf16.mxu0 0
      %1438 = vmatpush1.bf16.msra.mxu0 0
      %1439 = vmatprep.subr.bf16.mxu0 0
      %1440 = vmatpush1.bf16.msra.mxu0 0
      %1441 = vmatprep.subr.bf16.mxu0 0
      %1442 = vmatpush1.bf16.msra.mxu0 0
      %1443 = vmatprep.subr.bf16.mxu0 0
      %1444 = vmatpush1.bf16.msra.mxu0 0
      %1445 = vmatprep.subr.bf16.mxu0 0
      %1446 = vmatpush1.bf16.msra.mxu0 0
      %1447 = vmatprep.subr.bf16.mxu0 0
      %1448 = vmatpush1.bf16.msra.mxu0 0
      %1449 = vmatprep.subr.bf16.mxu0 0
      %1450 = vmatpush1.bf16.msra.mxu0 0
      %1451 = vmatprep.subr.bf16.mxu0 0
      %1452 = vmatpush1.bf16.msra.mxu0 0
      %1453 = vmatprep.subr.bf16.mxu0 0
      %1454 = vmatpush1.bf16.msra.mxu0 0
      %1455 = vmatprep.subr.bf16.mxu0 0
      %1456 = vmatpush1.bf16.msra.mxu0 0
      %1457 = vmatprep.subr.bf16.mxu0 0
      %1458 = vmatpush1.bf16.msra.mxu0 0
      %1459 = vmatprep.subr.bf16.mxu0 0
      %1460 = vmatpush1.bf16.msra.mxu0 0
      %1461 = vmatprep.mubr.bf16.mxu0 0
      %1462 = vmatmul.mubr.bf16.gmra.mrb[0].mxu0 %v1365
      %v1463 = vpop.f32.mrb[0].mxu0
      %v1464 = vadd.f32 0.0, %v1463
      %v1465 = vpop.f32.mrb[0].mxu0
      %v1466 = vpop.f32.mrb[0].mxu0
      %v1467 = vadd.f32 0.0, %v1466
      %v1468 = vpop.f32.mrb[0].mxu0
      %1469 = vdwg.mxu0
      %v1470 = vadd.f32 %v1140, %v1464
      %v1471 = vadd.f32 %v1141, %v1467
      %s1472 = scalar_lea.vmem %s13, 1
      %v1473 = vld [vmem:[%s1472] sm:$0x1]
      %v1475 = vlaneseq
      %v1476 = vshrl.u32 %v1475, 7
      %v1477 = vsub.s32 0, %v1476
      %v1478 = vrot.slane %v1473, %v1477
      %v1480 = vadd.f32 %v1470, %v1478
      %v1481 = vadd.f32 %v1471, %v1478
      %s1482 = scalar_lea.vmem %s8, 16
      %v1483 = vld [vmem:[%s1482] sm:$0x3f]
      %s1484 = scalar_lea.vmem %s7, 8
      %v1485 = vld [vmem:[%s1484] sm:$0xf]
      %v1486 = vpack.c.bf16 %v1481, %v1480
      %v1487 = vlaneseq
      %v1488 = vshrl.u32 %v1487, 7
      %v1489 = vsub.s32 0, %v1488
      %v1490 = vrot.slane %v1483, %v1489
      %v1492 = vsel %vm818, %v1486, 0
      %v1495 = vsel %vm822, %v1485, 0
      %1497 = vmatprep.subr.bf16.mxu0 0
      %1498 = vmatpush1.bf16.msra.mxu0 %v1495
      %1499 = vmatprep.subr.bf16.mxu0 0
      %1500 = vmatpush1.bf16.msra.mxu0 0
      %1501 = vmatprep.subr.bf16.mxu0 0
      %1502 = vmatpush1.bf16.msra.mxu0 0
      %1503 = vmatprep.subr.bf16.mxu0 0
      %1504 = vmatpush1.bf16.msra.mxu0 0
      %1505 = vmatprep.subr.bf16.mxu0 0
      %1506 = vmatpush1.bf16.msra.mxu0 0
      %1507 = vmatprep.subr.bf16.mxu0 0
      %1508 = vmatpush1.bf16.msra.mxu0 0
      %1509 = vmatprep.subr.bf16.mxu0 0
      %1510 = vmatpush1.bf16.msra.mxu0 0
      %1511 = vmatprep.subr.bf16.mxu0 0
      %1512 = vmatpush1.bf16.msra.mxu0 0
      %1513 = vmatprep.subr.bf16.mxu0 0
      %1514 = vmatpush1.bf16.msra.mxu0 0
      %1515 = vmatprep.subr.bf16.mxu0 0
      %1516 = vmatpush1.bf16.msra.mxu0 0
      %1517 = vmatprep.subr.bf16.mxu0 0
      %1518 = vmatpush1.bf16.msra.mxu0 0
      %1519 = vmatprep.subr.bf16.mxu0 0
      %1520 = vmatpush1.bf16.msra.mxu0 0
      %1521 = vmatprep.subr.bf16.mxu0 0
      %1522 = vmatpush1.bf16.msra.mxu0 0
      %1523 = vmatprep.subr.bf16.mxu0 0
      %1524 = vmatpush1.bf16.msra.mxu0 0
      %1525 = vmatprep.subr.bf16.mxu0 0
      %1526 = vmatpush1.bf16.msra.mxu0 0
      %1527 = vmatprep.subr.bf16.mxu0 0
      %1528 = vmatpush1.bf16.msra.mxu0 0
      %1529 = vmatprep.mubr.bf16.mxu0 0
      %1530 = vmatmul.mubr.bf16.gmra.mrb[0].mxu0 %v1492
      %v1531 = vpop.f32.mrb[0].mxu0
      %v1532 = vadd.f32 %v1490, %v1531
      %v1533 = vpop.f32.mrb[0].mxu0
      %v1534 = vpop.f32.mrb[0].mxu0
      %v1535 = vadd.f32 %v1490, %v1534
      %v1536 = vpop.f32.mrb[0].mxu0
      %1537 = vdwg.mxu0
      %vm1538 = vcmp.ge.f32.partialorder %v1532, 0.0
      %vm1539 = vcmp.ge.f32.partialorder %v1535, 0.0
      %v1540 = vmul.f32 %v1532, 0.25
      %v1541 = vmul.f32 %v1535, 0.25
      %v1542 = vsel %vm1538, %v1532, %v1540
      %v1543 = vsel %vm1539, %v1535, %v1541
      %v1544 = vsel %vm577, %v1542, 0.0
      %v1545 = vsel %vm689, %v1543, 0.0
      %v1546 = vadd.f32 %v1544, %v1545
      %1547 = vadd.xlane.f32.xlu0 %v1546
      %v1548 = vpop.xlane.xlu0 %1547
      %v1549 = vrot.slane %v1548, 4
      %v1550 = vadd.f32 %v1548, %v1549
      %v1551 = vrot.slane %v1550, 2
      %v1552 = vadd.f32 %v1550, %v1551
      %v1553 = vrot.slane %v1552, 1
      %v1554 = vadd.f32 %v1552, %v1553
      %s1555 = vtos %v1554
      %v1556 = vstv %s1555
      %v1557 = vmul.f32 %v1556, %v708
      %v1558 = vmul.f32 %v1542, %v1542
      %v1559 = vmul.f32 %v1543, %v1543
      %v1560 = vsel %vm577, %v1558, 0.0
      %v1561 = vsel %vm689, %v1559, 0.0
      %v1562 = vadd.f32 %v1560, %v1561
      %1563 = vadd.xlane.f32.xlu0 %v1562
      %v1564 = vpop.xlane.xlu0 %1563
      %v1565 = vrot.slane %v1564, 4
      %v1566 = vadd.f32 %v1564, %v1565
      %v1567 = vrot.slane %v1566, 2
      %v1568 = vadd.f32 %v1566, %v1567
      %v1569 = vrot.slane %v1568, 1
      %v1570 = vadd.f32 %v1568, %v1569
      %s1571 = vtos %v1570
      %v1572 = vstv %s1571
      %v1573 = vmul.f32 %v1572, %v708
      %v1574 = vmul.f32 %v1557, %v1557
      %v1575 = vsub.f32 %v1573, %v1574
      %v1576 = vmax.f32 %v1575, 0.0
      %v1577 = vsub.f32 %v1542, %v1557
      %v1578 = vsub.f32 %v1543, %v1557
      %v1579 = vadd.f32 %v1576, 1e-05
      %v1580 = vrsqrt.pop %v1579
      %v1581 = vmul.f32 %v1577, %v1580
      %v1582 = vmul.f32 %v1578, %v1580
      %v1583 = vlaneseq
      %v1584 = vshrl.u32 %v1583, 7
      %v1585 = vsub.s32 1, %v1584
      %v1586 = vrot.slane %v1483, %v1585
      %v1587 = vmul.f32 %v1581, %v1586
      %v1588 = vmul.f32 %v1582, %v1586
      %v1589 = vlaneseq
      %v1590 = vshrl.u32 %v1589, 7
      %v1591 = vsub.s32 2, %v1590
      %v1592 = vrot.slane %v1483, %v1591
      %v1593 = vadd.f32 %v1587, %v1592
      %v1594 = vadd.f32 %v1588, %v1592
      %s1595 = scalar_lea.vmem %s9, 8
      %v1596 = vld [vmem:[%s1595] sm:$0x7]
      %1597 = vst.msk [vmem:[#allocation4 + $0x8] sm:$0xff] %vm577, %v1593
      %1598 = vst.msk [vmem:[#allocation4 + $0x10] sm:$0x7f] %vm689, %v1594
      %v1599 = vld [vmem:[#allocation4 + $0x4] sm:$0xff]
      %v1600 = vld [vmem:[#allocation4 + $0xc] sm:$0x7f]
      %v1601 = vlaneseq
      %v1602 = vshrl.u32 %v1601, 7
      %v1603 = vsub.s32 0, %v1602
      %v1604 = vrot.slane %v1596, %v1603
      %v1605 = vmul.f32 %v1604, %v1599
      %v1606 = vmul.f32 %v1604, %v1600
      %v1607 = vld [vmem:[#allocation4 + $0x8] sm:$0xff]
      %v1608 = vld [vmem:[#allocation4 + $0x10] sm:$0x7f]
      %v1609 = vlaneseq
      %v1610 = vshrl.u32 %v1609, 7
      %v1611 = vsub.s32 1, %v1610
      %v1612 = vrot.slane %v1596, %v1611
      %v1613 = vmul.f32 %v1612, %v1607
      %v1614 = vmul.f32 %v1612, %v1608
      %v1615 = vadd.f32 %v1605, %v1613
      %v1616 = vadd.f32 %v1606, %v1614
      %v1617 = vld [vmem:[#allocation4 + $0xc] sm:$0xff]
      %v1618 = vld [vmem:[#allocation4 + $0x14] sm:$0x7f]
      %v1619 = vlaneseq
      %v1620 = vshrl.u32 %v1619, 7
      %v1621 = vsub.s32 2, %v1620
      %v1622 = vrot.slane %v1596, %v1621
      %v1623 = vmul.f32 %v1622, %v1617
      %v1624 = vmul.f32 %v1622, %v1618
      %v1625 = vadd.f32 %v1615, %v1623
      %v1626 = vadd.f32 %v1616, %v1624
      %1627 = vst.msk [vmem:[#allocation3] sm:$0xff] %vm577, %v1625
      %1628 = vst.msk [vmem:[#allocation3 + $0x8] sm:$0x7f] %vm689, %v1626
      %v1629 = vld [vmem:[#allocation3] sm:$0xff]
      %v1630 = vld [vmem:[#allocation3 + $0x8] sm:$0x7f]
      %v1631 = vlaneseq
      %v1632 = vshrl.u32 %v1631, 7
      %v1633 = vsub.s32 3, %v1632
      %v1634 = vrot.slane %v1483, %v1633
      %v1635 = vadd.f32 %v1629, %v1634
      %v1636 = vadd.f32 %v1630, %v1634
      %vm1637 = vcmp.ge.f32.partialorder %v1635, 0.0
      %vm1638 = vcmp.ge.f32.partialorder %v1636, 0.0
      %v1639 = vmul.f32 %v1635, 0.25
      %v1640 = vmul.f32 %v1636, 0.25
      %v1641 = vsel %vm1637, %v1635, %v1639
      %v1642 = vsel %vm1638, %v1636, %v1640
      %v1643 = vsel %vm577, %v1641, 0.0
      %v1644 = vsel %vm689, %v1642, 0.0
      %v1645 = vadd.f32 %v1643, %v1644
      %1646 = vadd.xlane.f32.xlu0 %v1645
      %v1647 = vpop.xlane.xlu0 %1646
      %v1648 = vrot.slane %v1647, 4
      %v1649 = vadd.f32 %v1647, %v1648
      %v1650 = vrot.slane %v1649, 2
      %v1651 = vadd.f32 %v1649, %v1650
      %v1652 = vrot.slane %v1651, 1
      %v1653 = vadd.f32 %v1651, %v1652
      %s1654 = vtos %v1653
      %v1655 = vstv %s1654
      %v1656 = vmul.f32 %v1655, %v708
      %v1657 = vmul.f32 %v1641, %v1641
      %v1658 = vmul.f32 %v1642, %v1642
      %v1659 = vsel %vm577, %v1657, 0.0
      %v1660 = vsel %vm689, %v1658, 0.0
      %v1661 = vadd.f32 %v1659, %v1660
      %1662 = vadd.xlane.f32.xlu0 %v1661
      %v1663 = vpop.xlane.xlu0 %1662
      %v1664 = vrot.slane %v1663, 4
      %v1665 = vadd.f32 %v1663, %v1664
      %v1666 = vrot.slane %v1665, 2
      %v1667 = vadd.f32 %v1665, %v1666
      %v1668 = vrot.slane %v1667, 1
      %v1669 = vadd.f32 %v1667, %v1668
      %s1670 = vtos %v1669
      %v1671 = vstv %s1670
      %v1672 = vmul.f32 %v1671, %v708
      %v1673 = vmul.f32 %v1656, %v1656
      %v1674 = vsub.f32 %v1672, %v1673
      %v1675 = vmax.f32 %v1674, 0.0
      %v1676 = vsub.f32 %v1641, %v1656
      %v1677 = vsub.f32 %v1642, %v1656
      %v1678 = vadd.f32 %v1675, 1e-05
      %v1679 = vrsqrt.pop %v1678
      %v1680 = vmul.f32 %v1676, %v1679
      %v1681 = vmul.f32 %v1677, %v1679
      %v1682 = vlaneseq
      %v1683 = vshrl.u32 %v1682, 7
      %v1684 = vsub.s32 4, %v1683
      %v1685 = vrot.slane %v1483, %v1684
      %v1686 = vmul.f32 %v1680, %v1685
      %v1687 = vmul.f32 %v1681, %v1685
      %v1688 = vlaneseq
      %v1689 = vshrl.u32 %v1688, 7
      %v1690 = vsub.s32 5, %v1689
      %v1691 = vrot.slane %v1483, %v1690
      %v1692 = vadd.f32 %v1686, %v1691
      %v1693 = vadd.f32 %v1687, %v1691
      %s1694 = scalar_lea.vmem %s10, 16
      %v1695 = vld [vmem:[%s1694] sm:$0xf]
      %v1696 = vld [vmem:[%s1694 + $0x4] sm:$0xf]
      %v1697 = vpack.c.bf16 %v1693, %v1692
      %v1700 = vunpack.c.l.b16 %v1695
      %v1701 = vunpack.c.l.b16 %v1696
      %v1702 = vpack.c.b16 %v1701, %v1700
      %v1705 = vsel %vm577, %v1697, 0
      %1707 = vmatprep.subr.bf16.mxu0 0
      %1708 = vmatpush1.bf16.msra.mxu0 %v1702
      %1709 = vmatprep.subr.bf16.mxu0 0
      %1710 = vmatpush1.bf16.msra.mxu0 0
      %1711 = vmatprep.subr.bf16.mxu0 0
      %1712 = vmatpush1.bf16.msra.mxu0 0
      %1713 = vmatprep.subr.bf16.mxu0 0
      %1714 = vmatpush1.bf16.msra.mxu0 0
      %1715 = vmatprep.subr.bf16.mxu0 0
      %1716 = vmatpush1.bf16.msra.mxu0 0
      %1717 = vmatprep.subr.bf16.mxu0 0
      %1718 = vmatpush1.bf16.msra.mxu0 0
      %1719 = vmatprep.subr.bf16.mxu0 0
      %1720 = vmatpush1.bf16.msra.mxu0 0
      %1721 = vmatprep.subr.bf16.mxu0 0
      %1722 = vmatpush1.bf16.msra.mxu0 0
      %1723 = vmatprep.subr.bf16.mxu0 0
      %1724 = vmatpush1.bf16.msra.mxu0 0
      %1725 = vmatprep.subr.bf16.mxu0 0
      %1726 = vmatpush1.bf16.msra.mxu0 0
      %1727 = vmatprep.subr.bf16.mxu0 0
      %1728 = vmatpush1.bf16.msra.mxu0 0
      %1729 = vmatprep.subr.bf16.mxu0 0
      %1730 = vmatpush1.bf16.msra.mxu0 0
      %1731 = vmatprep.subr.bf16.mxu0 0
      %1732 = vmatpush1.bf16.msra.mxu0 0
      %1733 = vmatprep.subr.bf16.mxu0 0
      %1734 = vmatpush1.bf16.msra.mxu0 0
      %1735 = vmatprep.subr.bf16.mxu0 0
      %1736 = vmatpush1.bf16.msra.mxu0 0
      %1737 = vmatprep.subr.bf16.mxu0 0
      %1738 = vmatpush1.bf16.msra.mxu0 0
      %1739 = vmatprep.mubr.bf16.mxu0 0
      %1740 = vmatmul.mubr.bf16.gmra.mrb[0].mxu0 %v1705
      %v1741 = vpop.f32.mrb[0].mxu0
      %v1742 = vadd.f32 0.0, %v1741
      %v1743 = vpop.f32.mrb[0].mxu0
      %v1744 = vpop.f32.mrb[0].mxu0
      %v1745 = vadd.f32 0.0, %v1744
      %v1746 = vpop.f32.mrb[0].mxu0
      %1747 = vdwg.mxu0
      %v1748 = vadd.f32 %v1418, %v1742
      %v1749 = vadd.f32 %v1419, %v1745
      %s1750 = scalar_lea.vmem %s11, 2
      %v1751 = vld [vmem:[%s1750] sm:$0x1]
      %v1753 = vlaneseq
      %v1754 = vshrl.u32 %v1753, 7
      %v1755 = vsub.s32 0, %v1754
      %v1756 = vrot.slane %v1751, %v1755
      %v1758 = vadd.f32 %v1748, %v1756
      %v1759 = vadd.f32 %v1749, %v1756
      %s1760 = scalar_lea.vmem %s12, 16
      %v1761 = vld [vmem:[%s1760] sm:$0xf]
      %v1762 = vld [vmem:[%s1760 + $0x4] sm:$0xf]
      %v1765 = vunpack.c.l.b16 %v1761
      %v1766 = vunpack.c.l.b16 %v1762
      %v1767 = vpack.c.b16 %v1766, %v1765
      %1769 = vmatprep.subr.bf16.mxu0 0
      %1770 = vmatpush1.bf16.msra.mxu0 %v1767
      %1771 = vmatprep.subr.bf16.mxu0 0
      %1772 = vmatpush1.bf16.msra.mxu0 0
      %1773 = vmatprep.subr.bf16.mxu0 0
      %1774 = vmatpush1.bf16.msra.mxu0 0
      %1775 = vmatprep.subr.bf16.mxu0 0
      %1776 = vmatpush1.bf16.msra.mxu0 0
      %1777 = vmatprep.subr.bf16.mxu0 0
      %1778 = vmatpush1.bf16.msra.mxu0 0
      %1779 = vmatprep.subr.bf16.mxu0 0
      %1780 = vmatpush1.bf16.msra.mxu0 0
      %1781 = vmatprep.subr.bf16.mxu0 0
      %1782 = vmatpush1.bf16.msra.mxu0 0
      %1783 = vmatprep.subr.bf16.mxu0 0
      %1784 = vmatpush1.bf16.msra.mxu0 0
      %1785 = vmatprep.subr.bf16.mxu0 0
      %1786 = vmatpush1.bf16.msra.mxu0 0
      %1787 = vmatprep.subr.bf16.mxu0 0
      %1788 = vmatpush1.bf16.msra.mxu0 0
      %1789 = vmatprep.subr.bf16.mxu0 0
      %1790 = vmatpush1.bf16.msra.mxu0 0
      %1791 = vmatprep.subr.bf16.mxu0 0
      %1792 = vmatpush1.bf16.msra.mxu0 0
      %1793 = vmatprep.subr.bf16.mxu0 0
      %1794 = vmatpush1.bf16.msra.mxu0 0
      %1795 = vmatprep.subr.bf16.mxu0 0
      %1796 = vmatpush1.bf16.msra.mxu0 0
      %1797 = vmatprep.subr.bf16.mxu0 0
      %1798 = vmatpush1.bf16.msra.mxu0 0
      %1799 = vmatprep.subr.bf16.mxu0 0
      %1800 = vmatpush1.bf16.msra.mxu0 0
      %1801 = vmatprep.mubr.bf16.mxu0 0
      %1802 = vmatmul.mubr.bf16.gmra.mrb[0].mxu0 %v1705
      %v1803 = vpop.f32.mrb[0].mxu0
      %v1804 = vadd.f32 0.0, %v1803
      %v1805 = vpop.f32.mrb[0].mxu0
      %v1806 = vpop.f32.mrb[0].mxu0
      %v1807 = vadd.f32 0.0, %v1806
      %v1808 = vpop.f32.mrb[0].mxu0
      %1809 = vdwg.mxu0
      %v1810 = vadd.f32 %v1480, %v1804
      %v1811 = vadd.f32 %v1481, %v1807
      %s1812 = scalar_lea.vmem %s13, 2
      %v1813 = vld [vmem:[%s1812] sm:$0x1]
      %v1815 = vlaneseq
      %v1816 = vshrl.u32 %v1815, 7
      %v1817 = vsub.s32 0, %v1816
      %v1818 = vrot.slane %v1813, %v1817
      %v1820 = vadd.f32 %v1810, %v1818
      %v1821 = vadd.f32 %v1811, %v1818
      %s1822 = scalar_lea.vmem %s8, 24
      %v1823 = vld [vmem:[%s1822] sm:$0x3f]
      %s1824 = scalar_lea.vmem %s7, 12
      %v1825 = vld [vmem:[%s1824] sm:$0xf]
      %v1826 = vpack.c.bf16 %v1821, %v1820
      %v1827 = vlaneseq
      %v1828 = vshrl.u32 %v1827, 7
      %v1829 = vsub.s32 0, %v1828
      %v1830 = vrot.slane %v1823, %v1829
      %v1832 = vsel %vm818, %v1826, 0
      %v1835 = vsel %vm822, %v1825, 0
      %1837 = vmatprep.subr.bf16.mxu0 0
      %1838 = vmatpush1.bf16.msra.mxu0 %v1835
      %1839 = vmatprep.subr.bf16.mxu0 0
      %1840 = vmatpush1.bf16.msra.mxu0 0
      %1841 = vmatprep.subr.bf16.mxu0 0
      %1842 = vmatpush1.bf16.msra.mxu0 0
      %1843 = vmatprep.subr.bf16.mxu0 0
      %1844 = vmatpush1.bf16.msra.mxu0 0
      %1845 = vmatprep.subr.bf16.mxu0 0
      %1846 = vmatpush1.bf16.msra.mxu0 0
      %1847 = vmatprep.subr.bf16.mxu0 0
      %1848 = vmatpush1.bf16.msra.mxu0 0
      %1849 = vmatprep.subr.bf16.mxu0 0
      %1850 = vmatpush1.bf16.msra.mxu0 0
      %1851 = vmatprep.subr.bf16.mxu0 0
      %1852 = vmatpush1.bf16.msra.mxu0 0
      %1853 = vmatprep.subr.bf16.mxu0 0
      %1854 = vmatpush1.bf16.msra.mxu0 0
      %1855 = vmatprep.subr.bf16.mxu0 0
      %1856 = vmatpush1.bf16.msra.mxu0 0
      %1857 = vmatprep.subr.bf16.mxu0 0
      %1858 = vmatpush1.bf16.msra.mxu0 0
      %1859 = vmatprep.subr.bf16.mxu0 0
      %1860 = vmatpush1.bf16.msra.mxu0 0
      %1861 = vmatprep.subr.bf16.mxu0 0
      %1862 = vmatpush1.bf16.msra.mxu0 0
      %1863 = vmatprep.subr.bf16.mxu0 0
      %1864 = vmatpush1.bf16.msra.mxu0 0
      %1865 = vmatprep.subr.bf16.mxu0 0
      %1866 = vmatpush1.bf16.msra.mxu0 0
      %1867 = vmatprep.subr.bf16.mxu0 0
      %1868 = vmatpush1.bf16.msra.mxu0 0
      %1869 = vmatprep.mubr.bf16.mxu0 0
      %1870 = vmatmul.mubr.bf16.gmra.mrb[0].mxu0 %v1832
      %v1871 = vpop.f32.mrb[0].mxu0
      %v1872 = vadd.f32 %v1830, %v1871
      %v1873 = vpop.f32.mrb[0].mxu0
      %v1874 = vpop.f32.mrb[0].mxu0
      %v1875 = vadd.f32 %v1830, %v1874
      %v1876 = vpop.f32.mrb[0].mxu0
      %1877 = vdwg.mxu0
      %vm1878 = vcmp.ge.f32.partialorder %v1872, 0.0
      %vm1879 = vcmp.ge.f32.partialorder %v1875, 0.0
      %v1880 = vmul.f32 %v1872, 0.25
      %v1881 = vmul.f32 %v1875, 0.25
      %v1882 = vsel %vm1878, %v1872, %v1880
      %v1883 = vsel %vm1879, %v1875, %v1881
      %v1884 = vsel %vm577, %v1882, 0.0
      %v1885 = vsel %vm689, %v1883, 0.0
      %v1886 = vadd.f32 %v1884, %v1885
      %1887 = vadd.xlane.f32.xlu0 %v1886
      %v1888 = vpop.xlane.xlu0 %1887
      %v1889 = vrot.slane %v1888, 4
      %v1890 = vadd.f32 %v1888, %v1889
      %v1891 = vrot.slane %v1890, 2
      %v1892 = vadd.f32 %v1890, %v1891
      %v1893 = vrot.slane %v1892, 1
      %v1894 = vadd.f32 %v1892, %v1893
      %s1895 = vtos %v1894
      %v1896 = vstv %s1895
      %v1897 = vmul.f32 %v1896, %v708
      %v1898 = vmul.f32 %v1882, %v1882
      %v1899 = vmul.f32 %v1883, %v1883
      %v1900 = vsel %vm577, %v1898, 0.0
      %v1901 = vsel %vm689, %v1899, 0.0
      %v1902 = vadd.f32 %v1900, %v1901
      %1903 = vadd.xlane.f32.xlu0 %v1902
      %v1904 = vpop.xlane.xlu0 %1903
      %v1905 = vrot.slane %v1904, 4
      %v1906 = vadd.f32 %v1904, %v1905
      %v1907 = vrot.slane %v1906, 2
      %v1908 = vadd.f32 %v1906, %v1907
      %v1909 = vrot.slane %v1908, 1
      %v1910 = vadd.f32 %v1908, %v1909
      %s1911 = vtos %v1910
      %v1912 = vstv %s1911
      %v1913 = vmul.f32 %v1912, %v708
      %v1914 = vmul.f32 %v1897, %v1897
      %v1915 = vsub.f32 %v1913, %v1914
      %v1916 = vmax.f32 %v1915, 0.0
      %v1917 = vsub.f32 %v1882, %v1897
      %v1918 = vsub.f32 %v1883, %v1897
      %v1919 = vadd.f32 %v1916, 1e-05
      %v1920 = vrsqrt.pop %v1919
      %v1921 = vmul.f32 %v1917, %v1920
      %v1922 = vmul.f32 %v1918, %v1920
      %v1923 = vlaneseq
      %v1924 = vshrl.u32 %v1923, 7
      %v1925 = vsub.s32 1, %v1924
      %v1926 = vrot.slane %v1823, %v1925
      %v1927 = vmul.f32 %v1921, %v1926
      %v1928 = vmul.f32 %v1922, %v1926
      %v1929 = vlaneseq
      %v1930 = vshrl.u32 %v1929, 7
      %v1931 = vsub.s32 2, %v1930
      %v1932 = vrot.slane %v1823, %v1931
      %v1933 = vadd.f32 %v1927, %v1932
      %v1934 = vadd.f32 %v1928, %v1932
      %s1935 = scalar_lea.vmem %s9, 12
      %v1936 = vld [vmem:[%s1935] sm:$0x7]
      %1937 = vst.msk [vmem:[#allocation4 + $0x8] sm:$0xff] %vm577, %v1933
      %1938 = vst.msk [vmem:[#allocation4 + $0x10] sm:$0x7f] %vm689, %v1934
      %v1939 = vld [vmem:[#allocation4 + $0x7] sm:$0xff]
      %v1940 = vld [vmem:[#allocation4 + $0xf] sm:$0x7f]
      %v1941 = vlaneseq
      %v1942 = vshrl.u32 %v1941, 7
      %v1943 = vsub.s32 0, %v1942
      %v1944 = vrot.slane %v1936, %v1943
      %v1945 = vmul.f32 %v1944, %v1939
      %v1946 = vmul.f32 %v1944, %v1940
      %v1947 = vld [vmem:[#allocation4 + $0x8] sm:$0xff]
      %v1948 = vld [vmem:[#allocation4 + $0x10] sm:$0x7f]
      %v1949 = vlaneseq
      %v1950 = vshrl.u32 %v1949, 7
      %v1951 = vsub.s32 1, %v1950
      %v1952 = vrot.slane %v1936, %v1951
      %v1953 = vmul.f32 %v1952, %v1947
      %v1954 = vmul.f32 %v1952, %v1948
      %v1955 = vadd.f32 %v1945, %v1953
      %v1956 = vadd.f32 %v1946, %v1954
      %v1957 = vld [vmem:[#allocation4 + $0x9] sm:$0xff]
      %v1958 = vld [vmem:[#allocation4 + $0x11] sm:$0x7f]
      %v1959 = vlaneseq
      %v1960 = vshrl.u32 %v1959, 7
      %v1961 = vsub.s32 2, %v1960
      %v1962 = vrot.slane %v1936, %v1961
      %v1963 = vmul.f32 %v1962, %v1957
      %v1964 = vmul.f32 %v1962, %v1958
      %v1965 = vadd.f32 %v1955, %v1963
      %v1966 = vadd.f32 %v1956, %v1964
      %1967 = vst.msk [vmem:[#allocation3] sm:$0xff] %vm577, %v1965
      %1968 = vst.msk [vmem:[#allocation3 + $0x8] sm:$0x7f] %vm689, %v1966
      %v1969 = vld [vmem:[#allocation3] sm:$0xff]
      %v1970 = vld [vmem:[#allocation3 + $0x8] sm:$0x7f]
      %v1971 = vlaneseq
      %v1972 = vshrl.u32 %v1971, 7
      %v1973 = vsub.s32 3, %v1972
      %v1974 = vrot.slane %v1823, %v1973
      %v1975 = vadd.f32 %v1969, %v1974
      %v1976 = vadd.f32 %v1970, %v1974
      %vm1977 = vcmp.ge.f32.partialorder %v1975, 0.0
      %vm1978 = vcmp.ge.f32.partialorder %v1976, 0.0
      %v1979 = vmul.f32 %v1975, 0.25
      %v1980 = vmul.f32 %v1976, 0.25
      %v1981 = vsel %vm1977, %v1975, %v1979
      %v1982 = vsel %vm1978, %v1976, %v1980
      %v1983 = vsel %vm577, %v1981, 0.0
      %v1984 = vsel %vm689, %v1982, 0.0
      %v1985 = vadd.f32 %v1983, %v1984
      %1986 = vadd.xlane.f32.xlu0 %v1985
      %v1987 = vpop.xlane.xlu0 %1986
      %v1988 = vrot.slane %v1987, 4
      %v1989 = vadd.f32 %v1987, %v1988
      %v1990 = vrot.slane %v1989, 2
      %v1991 = vadd.f32 %v1989, %v1990
      %v1992 = vrot.slane %v1991, 1
      %v1993 = vadd.f32 %v1991, %v1992
      %s1994 = vtos %v1993
      %v1995 = vstv %s1994
      %v1996 = vmul.f32 %v1995, %v708
      %v1997 = vmul.f32 %v1981, %v1981
      %v1998 = vmul.f32 %v1982, %v1982
      %v1999 = vsel %vm577, %v1997, 0.0
      %v2000 = vsel %vm689, %v1998, 0.0
      %v2001 = vadd.f32 %v1999, %v2000
      %2002 = vadd.xlane.f32.xlu0 %v2001
      %v2003 = vpop.xlane.xlu0 %2002
      %v2004 = vrot.slane %v2003, 4
      %v2005 = vadd.f32 %v2003, %v2004
      %v2006 = vrot.slane %v2005, 2
      %v2007 = vadd.f32 %v2005, %v2006
      %v2008 = vrot.slane %v2007, 1
      %v2009 = vadd.f32 %v2007, %v2008
      %s2010 = vtos %v2009
      %v2011 = vstv %s2010
      %v2012 = vmul.f32 %v2011, %v708
      %v2013 = vmul.f32 %v1996, %v1996
      %v2014 = vsub.f32 %v2012, %v2013
      %v2015 = vmax.f32 %v2014, 0.0
      %v2016 = vsub.f32 %v1981, %v1996
      %v2017 = vsub.f32 %v1982, %v1996
      %v2018 = vadd.f32 %v2015, 1e-05
      %v2019 = vrsqrt.pop %v2018
      %v2020 = vmul.f32 %v2016, %v2019
      %v2021 = vmul.f32 %v2017, %v2019
      %v2022 = vlaneseq
      %v2023 = vshrl.u32 %v2022, 7
      %v2024 = vsub.s32 4, %v2023
      %v2025 = vrot.slane %v1823, %v2024
      %v2026 = vmul.f32 %v2020, %v2025
      %v2027 = vmul.f32 %v2021, %v2025
      %v2028 = vlaneseq
      %v2029 = vshrl.u32 %v2028, 7
      %v2030 = vsub.s32 5, %v2029
      %v2031 = vrot.slane %v1823, %v2030
      %v2032 = vadd.f32 %v2026, %v2031
      %v2033 = vadd.f32 %v2027, %v2031
      %s2034 = scalar_lea.vmem %s10, 24
      %v2035 = vld [vmem:[%s2034] sm:$0xf]
      %v2036 = vld [vmem:[%s2034 + $0x4] sm:$0xf]
      %v2037 = vpack.c.bf16 %v2033, %v2032
      %v2040 = vunpack.c.l.b16 %v2035
      %v2041 = vunpack.c.l.b16 %v2036
      %v2042 = vpack.c.b16 %v2041, %v2040
      %v2045 = vsel %vm577, %v2037, 0
      %2047 = vmatprep.subr.bf16.mxu0 0
      %2048 = vmatpush1.bf16.msra.mxu0 %v2042
      %2049 = vmatprep.subr.bf16.mxu0 0
      %2050 = vmatpush1.bf16.msra.mxu0 0
      %2051 = vmatprep.subr.bf16.mxu0 0
      %2052 = vmatpush1.bf16.msra.mxu0 0
      %2053 = vmatprep.subr.bf16.mxu0 0
      %2054 = vmatpush1.bf16.msra.mxu0 0
      %2055 = vmatprep.subr.bf16.mxu0 0
      %2056 = vmatpush1.bf16.msra.mxu0 0
      %2057 = vmatprep.subr.bf16.mxu0 0
      %2058 = vmatpush1.bf16.msra.mxu0 0
      %2059 = vmatprep.subr.bf16.mxu0 0
      %2060 = vmatpush1.bf16.msra.mxu0 0
      %2061 = vmatprep.subr.bf16.mxu0 0
      %2062 = vmatpush1.bf16.msra.mxu0 0
      %2063 = vmatprep.subr.bf16.mxu0 0
      %2064 = vmatpush1.bf16.msra.mxu0 0
      %2065 = vmatprep.subr.bf16.mxu0 0
      %2066 = vmatpush1.bf16.msra.mxu0 0
      %2067 = vmatprep.subr.bf16.mxu0 0
      %2068 = vmatpush1.bf16.msra.mxu0 0
      %2069 = vmatprep.subr.bf16.mxu0 0
      %2070 = vmatpush1.bf16.msra.mxu0 0
      %2071 = vmatprep.subr.bf16.mxu0 0
      %2072 = vmatpush1.bf16.msra.mxu0 0
      %2073 = vmatprep.subr.bf16.mxu0 0
      %2074 = vmatpush1.bf16.msra.mxu0 0
      %2075 = vmatprep.subr.bf16.mxu0 0
      %2076 = vmatpush1.bf16.msra.mxu0 0
      %2077 = vmatprep.subr.bf16.mxu0 0
      %2078 = vmatpush1.bf16.msra.mxu0 0
      %2079 = vmatprep.mubr.bf16.mxu0 0
      %2080 = vmatmul.mubr.bf16.gmra.mrb[0].mxu0 %v2045
      %v2081 = vpop.f32.mrb[0].mxu0
      %v2082 = vadd.f32 0.0, %v2081
      %v2083 = vpop.f32.mrb[0].mxu0
      %v2084 = vpop.f32.mrb[0].mxu0
      %v2085 = vadd.f32 0.0, %v2084
      %v2086 = vpop.f32.mrb[0].mxu0
      %2087 = vdwg.mxu0
      %v2088 = vadd.f32 %v1758, %v2082
      %v2089 = vadd.f32 %v1759, %v2085
      %s2090 = scalar_lea.vmem %s11, 3
      %v2091 = vld [vmem:[%s2090] sm:$0x1]
      %v2093 = vlaneseq
      %v2094 = vshrl.u32 %v2093, 7
      %v2095 = vsub.s32 0, %v2094
      %v2096 = vrot.slane %v2091, %v2095
      %v2098 = vadd.f32 %v2088, %v2096
      %v2099 = vadd.f32 %v2089, %v2096
      %s2100 = scalar_lea.vmem %s12, 24
      %v2101 = vld [vmem:[%s2100] sm:$0xf]
      %v2102 = vld [vmem:[%s2100 + $0x4] sm:$0xf]
      %v2105 = vunpack.c.l.b16 %v2101
      %v2106 = vunpack.c.l.b16 %v2102
      %v2107 = vpack.c.b16 %v2106, %v2105
      %2109 = vmatprep.subr.bf16.mxu0 0
      %2110 = vmatpush1.bf16.msra.mxu0 %v2107
      %2111 = vmatprep.subr.bf16.mxu0 0
      %2112 = vmatpush1.bf16.msra.mxu0 0
      %2113 = vmatprep.subr.bf16.mxu0 0
      %2114 = vmatpush1.bf16.msra.mxu0 0
      %2115 = vmatprep.subr.bf16.mxu0 0
      %2116 = vmatpush1.bf16.msra.mxu0 0
      %2117 = vmatprep.subr.bf16.mxu0 0
      %2118 = vmatpush1.bf16.msra.mxu0 0
      %2119 = vmatprep.subr.bf16.mxu0 0
      %2120 = vmatpush1.bf16.msra.mxu0 0
      %2121 = vmatprep.subr.bf16.mxu0 0
      %2122 = vmatpush1.bf16.msra.mxu0 0
      %2123 = vmatprep.subr.bf16.mxu0 0
      %2124 = vmatpush1.bf16.msra.mxu0 0
      %2125 = vmatprep.subr.bf16.mxu0 0
      %2126 = vmatpush1.bf16.msra.mxu0 0
      %2127 = vmatprep.subr.bf16.mxu0 0
      %2128 = vmatpush1.bf16.msra.mxu0 0
      %2129 = vmatprep.subr.bf16.mxu0 0
      %2130 = vmatpush1.bf16.msra.mxu0 0
      %2131 = vmatprep.subr.bf16.mxu0 0
      %2132 = vmatpush1.bf16.msra.mxu0 0
      %2133 = vmatprep.subr.bf16.mxu0 0
      %2134 = vmatpush1.bf16.msra.mxu0 0
      %2135 = vmatprep.subr.bf16.mxu0 0
      %2136 = vmatpush1.bf16.msra.mxu0 0
      %2137 = vmatprep.subr.bf16.mxu0 0
      %2138 = vmatpush1.bf16.msra.mxu0 0
      %2139 = vmatprep.subr.bf16.mxu0 0
      %2140 = vmatpush1.bf16.msra.mxu0 0
      %2141 = vmatprep.mubr.bf16.mxu0 0
      %2142 = vmatmul.mubr.bf16.gmra.mrb[0].mxu0 %v2045
      %v2143 = vpop.f32.mrb[0].mxu0
      %v2144 = vadd.f32 0.0, %v2143
      %v2145 = vpop.f32.mrb[0].mxu0
      %v2146 = vpop.f32.mrb[0].mxu0
      %v2147 = vadd.f32 0.0, %v2146
      %v2148 = vpop.f32.mrb[0].mxu0
      %2149 = vdwg.mxu0
      %v2150 = vadd.f32 %v1820, %v2144
      %v2151 = vadd.f32 %v1821, %v2147
      %s2152 = scalar_lea.vmem %s13, 3
      %v2153 = vld [vmem:[%s2152] sm:$0x1]
      %v2155 = vlaneseq
      %v2156 = vshrl.u32 %v2155, 7
      %v2157 = vsub.s32 0, %v2156
      %v2158 = vrot.slane %v2153, %v2157
      %v2160 = vadd.f32 %v2150, %v2158
      %v2161 = vadd.f32 %v2151, %v2158
      %s2162 = scalar_lea.vmem %s8, 32
      %v2163 = vld [vmem:[%s2162] sm:$0x3f]
      %s2164 = scalar_lea.vmem %s7, 16
      %v2165 = vld [vmem:[%s2164] sm:$0xf]
      %v2166 = vpack.c.bf16 %v2161, %v2160
      %v2167 = vlaneseq
      %v2168 = vshrl.u32 %v2167, 7
      %v2169 = vsub.s32 0, %v2168
      %v2170 = vrot.slane %v2163, %v2169
      %v2172 = vsel %vm818, %v2166, 0
      %v2175 = vsel %vm822, %v2165, 0
      %2177 = vmatprep.subr.bf16.mxu0 0
      %2178 = vmatpush1.bf16.msra.mxu0 %v2175
      %2179 = vmatprep.subr.bf16.mxu0 0
      %2180 = vmatpush1.bf16.msra.mxu0 0
      %2181 = vmatprep.subr.bf16.mxu0 0
      %2182 = vmatpush1.bf16.msra.mxu0 0
      %2183 = vmatprep.subr.bf16.mxu0 0
      %2184 = vmatpush1.bf16.msra.mxu0 0
      %2185 = vmatprep.subr.bf16.mxu0 0
      %2186 = vmatpush1.bf16.msra.mxu0 0
      %2187 = vmatprep.subr.bf16.mxu0 0
      %2188 = vmatpush1.bf16.msra.mxu0 0
      %2189 = vmatprep.subr.bf16.mxu0 0
      %2190 = vmatpush1.bf16.msra.mxu0 0
      %2191 = vmatprep.subr.bf16.mxu0 0
      %2192 = vmatpush1.bf16.msra.mxu0 0
      %2193 = vmatprep.subr.bf16.mxu0 0
      %2194 = vmatpush1.bf16.msra.mxu0 0
      %2195 = vmatprep.subr.bf16.mxu0 0
      %2196 = vmatpush1.bf16.msra.mxu0 0
      %2197 = vmatprep.subr.bf16.mxu0 0
      %2198 = vmatpush1.bf16.msra.mxu0 0
      %2199 = vmatprep.subr.bf16.mxu0 0
      %2200 = vmatpush1.bf16.msra.mxu0 0
      %2201 = vmatprep.subr.bf16.mxu0 0
      %2202 = vmatpush1.bf16.msra.mxu0 0
      %2203 = vmatprep.subr.bf16.mxu0 0
      %2204 = vmatpush1.bf16.msra.mxu0 0
      %2205 = vmatprep.subr.bf16.mxu0 0
      %2206 = vmatpush1.bf16.msra.mxu0 0
      %2207 = vmatprep.subr.bf16.mxu0 0
      %2208 = vmatpush1.bf16.msra.mxu0 0
      %2209 = vmatprep.mubr.bf16.mxu0 0
      %2210 = vmatmul.mubr.bf16.gmra.mrb[0].mxu0 %v2172
      %v2211 = vpop.f32.mrb[0].mxu0
      %v2212 = vadd.f32 %v2170, %v2211
      %v2213 = vpop.f32.mrb[0].mxu0
      %v2214 = vpop.f32.mrb[0].mxu0
      %v2215 = vadd.f32 %v2170, %v2214
      %v2216 = vpop.f32.mrb[0].mxu0
      %2217 = vdwg.mxu0
      %vm2218 = vcmp.ge.f32.partialorder %v2212, 0.0
      %vm2219 = vcmp.ge.f32.partialorder %v2215, 0.0
      %v2220 = vmul.f32 %v2212, 0.25
      %v2221 = vmul.f32 %v2215, 0.25
      %v2222 = vsel %vm2218, %v2212, %v2220
      %v2223 = vsel %vm2219, %v2215, %v2221
      %v2224 = vsel %vm577, %v2222, 0.0
      %v2225 = vsel %vm689, %v2223, 0.0
      %v2226 = vadd.f32 %v2224, %v2225
      %2227 = vadd.xlane.f32.xlu0 %v2226
      %v2228 = vpop.xlane.xlu0 %2227
      %v2229 = vrot.slane %v2228, 4
      %v2230 = vadd.f32 %v2228, %v2229
      %v2231 = vrot.slane %v2230, 2
      %v2232 = vadd.f32 %v2230, %v2231
      %v2233 = vrot.slane %v2232, 1
      %v2234 = vadd.f32 %v2232, %v2233
      %s2235 = vtos %v2234
      %v2236 = vstv %s2235
      %v2237 = vmul.f32 %v2236, %v708
      %v2238 = vmul.f32 %v2222, %v2222
      %v2239 = vmul.f32 %v2223, %v2223
      %v2240 = vsel %vm577, %v2238, 0.0
      %v2241 = vsel %vm689, %v2239, 0.0
      %v2242 = vadd.f32 %v2240, %v2241
      %2243 = vadd.xlane.f32.xlu0 %v2242
      %v2244 = vpop.xlane.xlu0 %2243
      %v2245 = vrot.slane %v2244, 4
      %v2246 = vadd.f32 %v2244, %v2245
      %v2247 = vrot.slane %v2246, 2
      %v2248 = vadd.f32 %v2246, %v2247
      %v2249 = vrot.slane %v2248, 1
      %v2250 = vadd.f32 %v2248, %v2249
      %s2251 = vtos %v2250
      %v2252 = vstv %s2251
      %v2253 = vmul.f32 %v2252, %v708
      %v2254 = vmul.f32 %v2237, %v2237
      %v2255 = vsub.f32 %v2253, %v2254
      %v2256 = vmax.f32 %v2255, 0.0
      %v2257 = vsub.f32 %v2222, %v2237
      %v2258 = vsub.f32 %v2223, %v2237
      %v2259 = vadd.f32 %v2256, 1e-05
      %v2260 = vrsqrt.pop %v2259
      %v2261 = vmul.f32 %v2257, %v2260
      %v2262 = vmul.f32 %v2258, %v2260
      %v2263 = vlaneseq
      %v2264 = vshrl.u32 %v2263, 7
      %v2265 = vsub.s32 1, %v2264
      %v2266 = vrot.slane %v2163, %v2265
      %v2267 = vmul.f32 %v2261, %v2266
      %v2268 = vmul.f32 %v2262, %v2266
      %v2269 = vlaneseq
      %v2270 = vshrl.u32 %v2269, 7
      %v2271 = vsub.s32 2, %v2270
      %v2272 = vrot.slane %v2163, %v2271
      %v2273 = vadd.f32 %v2267, %v2272
      %v2274 = vadd.f32 %v2268, %v2272
      %s2275 = scalar_lea.vmem %s9, 16
      %v2276 = vld [vmem:[%s2275] sm:$0x7]
      %2277 = vst.msk [vmem:[#allocation4 + $0x8] sm:$0xff] %vm577, %v2273
      %2278 = vst.msk [vmem:[#allocation4 + $0x10] sm:$0x7f] %vm689, %v2274
      %v2279 = vld [vmem:[#allocation4 + $0x6] sm:$0xff]
      %v2280 = vld [vmem:[#allocation4 + $0xe] sm:$0x7f]
      %v2281 = vlaneseq
      %v2282 = vshrl.u32 %v2281, 7
      %v2283 = vsub.s32 0, %v2282
      %v2284 = vrot.slane %v2276, %v2283
      %v2285 = vmul.f32 %v2284, %v2279
      %v2286 = vmul.f32 %v2284, %v2280
      %v2287 = vld [vmem:[#allocation4 + $0x8] sm:$0xff]
      %v2288 = vld [vmem:[#allocation4 + $0x10] sm:$0x7f]
      %v2289 = vlaneseq
      %v2290 = vshrl.u32 %v2289, 7
      %v2291 = vsub.s32 1, %v2290
      %v2292 = vrot.slane %v2276, %v2291
      %v2293 = vmul.f32 %v2292, %v2287
      %v2294 = vmul.f32 %v2292, %v2288
      %v2295 = vadd.f32 %v2285, %v2293
      %v2296 = vadd.f32 %v2286, %v2294
      %v2297 = vld [vmem:[#allocation4 + $0xa] sm:$0xff]
      %v2298 = vld [vmem:[#allocation4 + $0x12] sm:$0x7f]
      %v2299 = vlaneseq
      %v2300 = vshrl.u32 %v2299, 7
      %v2301 = vsub.s32 2, %v2300
      %v2302 = vrot.slane %v2276, %v2301
      %v2303 = vmul.f32 %v2302, %v2297
      %v2304 = vmul.f32 %v2302, %v2298
      %v2305 = vadd.f32 %v2295, %v2303
      %v2306 = vadd.f32 %v2296, %v2304
      %2307 = vst.msk [vmem:[#allocation3] sm:$0xff] %vm577, %v2305
      %2308 = vst.msk [vmem:[#allocation3 + $0x8] sm:$0x7f] %vm689, %v2306
      %v2309 = vld [vmem:[#allocation3] sm:$0xff]
      %v2310 = vld [vmem:[#allocation3 + $0x8] sm:$0x7f]
      %v2311 = vlaneseq
      %v2312 = vshrl.u32 %v2311, 7
      %v2313 = vsub.s32 3, %v2312
      %v2314 = vrot.slane %v2163, %v2313
      %v2315 = vadd.f32 %v2309, %v2314
      %v2316 = vadd.f32 %v2310, %v2314
      %vm2317 = vcmp.ge.f32.partialorder %v2315, 0.0
      %vm2318 = vcmp.ge.f32.partialorder %v2316, 0.0
      %v2319 = vmul.f32 %v2315, 0.25
      %v2320 = vmul.f32 %v2316, 0.25
      %v2321 = vsel %vm2317, %v2315, %v2319
      %v2322 = vsel %vm2318, %v2316, %v2320
      %v2323 = vsel %vm577, %v2321, 0.0
      %v2324 = vsel %vm689, %v2322, 0.0
      %v2325 = vadd.f32 %v2323, %v2324
      %2326 = vadd.xlane.f32.xlu0 %v2325
      %v2327 = vpop.xlane.xlu0 %2326
      %v2328 = vrot.slane %v2327, 4
      %v2329 = vadd.f32 %v2327, %v2328
      %v2330 = vrot.slane %v2329, 2
      %v2331 = vadd.f32 %v2329, %v2330
      %v2332 = vrot.slane %v2331, 1
      %v2333 = vadd.f32 %v2331, %v2332
      %s2334 = vtos %v2333
      %v2335 = vstv %s2334
      %v2336 = vmul.f32 %v2335, %v708
      %v2337 = vmul.f32 %v2321, %v2321
      %v2338 = vmul.f32 %v2322, %v2322
      %v2339 = vsel %vm577, %v2337, 0.0
      %v2340 = vsel %vm689, %v2338, 0.0
      %v2341 = vadd.f32 %v2339, %v2340
      %2342 = vadd.xlane.f32.xlu0 %v2341
      %v2343 = vpop.xlane.xlu0 %2342
      %v2344 = vrot.slane %v2343, 4
      %v2345 = vadd.f32 %v2343, %v2344
      %v2346 = vrot.slane %v2345, 2
      %v2347 = vadd.f32 %v2345, %v2346
      %v2348 = vrot.slane %v2347, 1
      %v2349 = vadd.f32 %v2347, %v2348
      %s2350 = vtos %v2349
      %v2351 = vstv %s2350
      %v2352 = vmul.f32 %v2351, %v708
      %v2353 = vmul.f32 %v2336, %v2336
      %v2354 = vsub.f32 %v2352, %v2353
      %v2355 = vmax.f32 %v2354, 0.0
      %v2356 = vsub.f32 %v2321, %v2336
      %v2357 = vsub.f32 %v2322, %v2336
      %v2358 = vadd.f32 %v2355, 1e-05
      %v2359 = vrsqrt.pop %v2358
      %v2360 = vmul.f32 %v2356, %v2359
      %v2361 = vmul.f32 %v2357, %v2359
      %v2362 = vlaneseq
      %v2363 = vshrl.u32 %v2362, 7
      %v2364 = vsub.s32 4, %v2363
      %v2365 = vrot.slane %v2163, %v2364
      %v2366 = vmul.f32 %v2360, %v2365
      %v2367 = vmul.f32 %v2361, %v2365
      %v2368 = vlaneseq
      %v2369 = vshrl.u32 %v2368, 7
      %v2370 = vsub.s32 5, %v2369
      %v2371 = vrot.slane %v2163, %v2370
      %v2372 = vadd.f32 %v2366, %v2371
      %v2373 = vadd.f32 %v2367, %v2371
      %s2374 = scalar_lea.vmem %s10, 32
      %v2375 = vld [vmem:[%s2374] sm:$0xf]
      %v2376 = vld [vmem:[%s2374 + $0x4] sm:$0xf]
      %v2377 = vpack.c.bf16 %v2373, %v2372
      %v2380 = vunpack.c.l.b16 %v2375
      %v2381 = vunpack.c.l.b16 %v2376
      %v2382 = vpack.c.b16 %v2381, %v2380
      %v2385 = vsel %vm577, %v2377, 0
      %2387 = vmatprep.subr.bf16.mxu0 0
      %2388 = vmatpush1.bf16.msra.mxu0 %v2382
      %2389 = vmatprep.subr.bf16.mxu0 0
      %2390 = vmatpush1.bf16.msra.mxu0 0
      %2391 = vmatprep.subr.bf16.mxu0 0
      %2392 = vmatpush1.bf16.msra.mxu0 0
      %2393 = vmatprep.subr.bf16.mxu0 0
      %2394 = vmatpush1.bf16.msra.mxu0 0
      %2395 = vmatprep.subr.bf16.mxu0 0
      %2396 = vmatpush1.bf16.msra.mxu0 0
      %2397 = vmatprep.subr.bf16.mxu0 0
      %2398 = vmatpush1.bf16.msra.mxu0 0
      %2399 = vmatprep.subr.bf16.mxu0 0
      %2400 = vmatpush1.bf16.msra.mxu0 0
      %2401 = vmatprep.subr.bf16.mxu0 0
      %2402 = vmatpush1.bf16.msra.mxu0 0
      %2403 = vmatprep.subr.bf16.mxu0 0
      %2404 = vmatpush1.bf16.msra.mxu0 0
      %2405 = vmatprep.subr.bf16.mxu0 0
      %2406 = vmatpush1.bf16.msra.mxu0 0
      %2407 = vmatprep.subr.bf16.mxu0 0
      %2408 = vmatpush1.bf16.msra.mxu0 0
      %2409 = vmatprep.subr.bf16.mxu0 0
      %2410 = vmatpush1.bf16.msra.mxu0 0
      %2411 = vmatprep.subr.bf16.mxu0 0
      %2412 = vmatpush1.bf16.msra.mxu0 0
      %2413 = vmatprep.subr.bf16.mxu0 0
      %2414 = vmatpush1.bf16.msra.mxu0 0
      %2415 = vmatprep.subr.bf16.mxu0 0
      %2416 = vmatpush1.bf16.msra.mxu0 0
      %2417 = vmatprep.subr.bf16.mxu0 0
      %2418 = vmatpush1.bf16.msra.mxu0 0
      %2419 = vmatprep.mubr.bf16.mxu0 0
      %2420 = vmatmul.mubr.bf16.gmra.mrb[0].mxu0 %v2385
      %v2421 = vpop.f32.mrb[0].mxu0
      %v2422 = vadd.f32 0.0, %v2421
      %v2423 = vpop.f32.mrb[0].mxu0
      %v2424 = vpop.f32.mrb[0].mxu0
      %v2425 = vadd.f32 0.0, %v2424
      %v2426 = vpop.f32.mrb[0].mxu0
      %2427 = vdwg.mxu0
      %v2428 = vadd.f32 %v2098, %v2422
      %v2429 = vadd.f32 %v2099, %v2425
      %s2430 = scalar_lea.vmem %s11, 4
      %v2431 = vld [vmem:[%s2430] sm:$0x1]
      %v2433 = vlaneseq
      %v2434 = vshrl.u32 %v2433, 7
      %v2435 = vsub.s32 0, %v2434
      %v2436 = vrot.slane %v2431, %v2435
      %v2438 = vadd.f32 %v2428, %v2436
      %v2439 = vadd.f32 %v2429, %v2436
      %s2440 = scalar_lea.vmem %s12, 32
      %v2441 = vld [vmem:[%s2440] sm:$0xf]
      %v2442 = vld [vmem:[%s2440 + $0x4] sm:$0xf]
      %v2445 = vunpack.c.l.b16 %v2441
      %v2446 = vunpack.c.l.b16 %v2442
      %v2447 = vpack.c.b16 %v2446, %v2445
      %2449 = vmatprep.subr.bf16.mxu0 0
      %2450 = vmatpush1.bf16.msra.mxu0 %v2447
      %2451 = vmatprep.subr.bf16.mxu0 0
      %2452 = vmatpush1.bf16.msra.mxu0 0
      %2453 = vmatprep.subr.bf16.mxu0 0
      %2454 = vmatpush1.bf16.msra.mxu0 0
      %2455 = vmatprep.subr.bf16.mxu0 0
      %2456 = vmatpush1.bf16.msra.mxu0 0
      %2457 = vmatprep.subr.bf16.mxu0 0
      %2458 = vmatpush1.bf16.msra.mxu0 0
      %2459 = vmatprep.subr.bf16.mxu0 0
      %2460 = vmatpush1.bf16.msra.mxu0 0
      %2461 = vmatprep.subr.bf16.mxu0 0
      %2462 = vmatpush1.bf16.msra.mxu0 0
      %2463 = vmatprep.subr.bf16.mxu0 0
      %2464 = vmatpush1.bf16.msra.mxu0 0
      %2465 = vmatprep.subr.bf16.mxu0 0
      %2466 = vmatpush1.bf16.msra.mxu0 0
      %2467 = vmatprep.subr.bf16.mxu0 0
      %2468 = vmatpush1.bf16.msra.mxu0 0
      %2469 = vmatprep.subr.bf16.mxu0 0
      %2470 = vmatpush1.bf16.msra.mxu0 0
      %2471 = vmatprep.subr.bf16.mxu0 0
      %2472 = vmatpush1.bf16.msra.mxu0 0
      %2473 = vmatprep.subr.bf16.mxu0 0
      %2474 = vmatpush1.bf16.msra.mxu0 0
      %2475 = vmatprep.subr.bf16.mxu0 0
      %2476 = vmatpush1.bf16.msra.mxu0 0
      %2477 = vmatprep.subr.bf16.mxu0 0
      %2478 = vmatpush1.bf16.msra.mxu0 0
      %2479 = vmatprep.subr.bf16.mxu0 0
      %2480 = vmatpush1.bf16.msra.mxu0 0
      %2481 = vmatprep.mubr.bf16.mxu0 0
      %2482 = vmatmul.mubr.bf16.gmra.mrb[0].mxu0 %v2385
      %v2483 = vpop.f32.mrb[0].mxu0
      %v2484 = vadd.f32 0.0, %v2483
      %v2485 = vpop.f32.mrb[0].mxu0
      %v2486 = vpop.f32.mrb[0].mxu0
      %v2487 = vadd.f32 0.0, %v2486
      %v2488 = vpop.f32.mrb[0].mxu0
      %2489 = vdwg.mxu0
      %v2490 = vadd.f32 %v2160, %v2484
      %v2491 = vadd.f32 %v2161, %v2487
      %s2492 = scalar_lea.vmem %s13, 4
      %v2493 = vld [vmem:[%s2492] sm:$0x1]
      %v2495 = vlaneseq
      %v2496 = vshrl.u32 %v2495, 7
      %v2497 = vsub.s32 0, %v2496
      %v2498 = vrot.slane %v2493, %v2497
      %v2500 = vadd.f32 %v2490, %v2498
      %v2501 = vadd.f32 %v2491, %v2498
      %s2502 = scalar_lea.vmem %s8, 40
      %v2503 = vld [vmem:[%s2502] sm:$0x3f]
      %s2504 = scalar_lea.vmem %s7, 20
      %v2505 = vld [vmem:[%s2504] sm:$0xf]
      %v2506 = vpack.c.bf16 %v2501, %v2500
      %v2507 = vlaneseq
      %v2508 = vshrl.u32 %v2507, 7
      %v2509 = vsub.s32 0, %v2508
      %v2510 = vrot.slane %v2503, %v2509
      %v2512 = vsel %vm818, %v2506, 0
      %v2515 = vsel %vm822, %v2505, 0
      %2517 = vmatprep.subr.bf16.mxu0 0
      %2518 = vmatpush1.bf16.msra.mxu0 %v2515
      %2519 = vmatprep.subr.bf16.mxu0 0
      %2520 = vmatpush1.bf16.msra.mxu0 0
      %2521 = vmatprep.subr.bf16.mxu0 0
      %2522 = vmatpush1.bf16.msra.mxu0 0
      %2523 = vmatprep.subr.bf16.mxu0 0
      %2524 = vmatpush1.bf16.msra.mxu0 0
      %2525 = vmatprep.subr.bf16.mxu0 0
      %2526 = vmatpush1.bf16.msra.mxu0 0
      %2527 = vmatprep.subr.bf16.mxu0 0
      %2528 = vmatpush1.bf16.msra.mxu0 0
      %2529 = vmatprep.subr.bf16.mxu0 0
      %2530 = vmatpush1.bf16.msra.mxu0 0
      %2531 = vmatprep.subr.bf16.mxu0 0
      %2532 = vmatpush1.bf16.msra.mxu0 0
      %2533 = vmatprep.subr.bf16.mxu0 0
      %2534 = vmatpush1.bf16.msra.mxu0 0
      %2535 = vmatprep.subr.bf16.mxu0 0
      %2536 = vmatpush1.bf16.msra.mxu0 0
      %2537 = vmatprep.subr.bf16.mxu0 0
      %2538 = vmatpush1.bf16.msra.mxu0 0
      %2539 = vmatprep.subr.bf16.mxu0 0
      %2540 = vmatpush1.bf16.msra.mxu0 0
      %2541 = vmatprep.subr.bf16.mxu0 0
      %2542 = vmatpush1.bf16.msra.mxu0 0
      %2543 = vmatprep.subr.bf16.mxu0 0
      %2544 = vmatpush1.bf16.msra.mxu0 0
      %2545 = vmatprep.subr.bf16.mxu0 0
      %2546 = vmatpush1.bf16.msra.mxu0 0
      %2547 = vmatprep.subr.bf16.mxu0 0
      %2548 = vmatpush1.bf16.msra.mxu0 0
      %2549 = vmatprep.mubr.bf16.mxu0 0
      %2550 = vmatmul.mubr.bf16.gmra.mrb[0].mxu0 %v2512
      %v2551 = vpop.f32.mrb[0].mxu0
      %v2552 = vadd.f32 %v2510, %v2551
      %v2553 = vpop.f32.mrb[0].mxu0
      %v2554 = vpop.f32.mrb[0].mxu0
      %v2555 = vadd.f32 %v2510, %v2554
      %v2556 = vpop.f32.mrb[0].mxu0
      %2557 = vdwg.mxu0
      %vm2558 = vcmp.ge.f32.partialorder %v2552, 0.0
      %vm2559 = vcmp.ge.f32.partialorder %v2555, 0.0
      %v2560 = vmul.f32 %v2552, 0.25
      %v2561 = vmul.f32 %v2555, 0.25
      %v2562 = vsel %vm2558, %v2552, %v2560
      %v2563 = vsel %vm2559, %v2555, %v2561
      %v2564 = vsel %vm577, %v2562, 0.0
      %v2565 = vsel %vm689, %v2563, 0.0
      %v2566 = vadd.f32 %v2564, %v2565
      %2567 = vadd.xlane.f32.xlu0 %v2566
      %v2568 = vpop.xlane.xlu0 %2567
      %v2569 = vrot.slane %v2568, 4
      %v2570 = vadd.f32 %v2568, %v2569
      %v2571 = vrot.slane %v2570, 2
      %v2572 = vadd.f32 %v2570, %v2571
      %v2573 = vrot.slane %v2572, 1
      %v2574 = vadd.f32 %v2572, %v2573
      %s2575 = vtos %v2574
      %v2576 = vstv %s2575
      %v2577 = vmul.f32 %v2576, %v708
      %v2578 = vmul.f32 %v2562, %v2562
      %v2579 = vmul.f32 %v2563, %v2563
      %v2580 = vsel %vm577, %v2578, 0.0
      %v2581 = vsel %vm689, %v2579, 0.0
      %v2582 = vadd.f32 %v2580, %v2581
      %2583 = vadd.xlane.f32.xlu0 %v2582
      %v2584 = vpop.xlane.xlu0 %2583
      %v2585 = vrot.slane %v2584, 4
      %v2586 = vadd.f32 %v2584, %v2585
      %v2587 = vrot.slane %v2586, 2
      %v2588 = vadd.f32 %v2586, %v2587
      %v2589 = vrot.slane %v2588, 1
      %v2590 = vadd.f32 %v2588, %v2589
      %s2591 = vtos %v2590
      %v2592 = vstv %s2591
      %v2593 = vmul.f32 %v2592, %v708
      %v2594 = vmul.f32 %v2577, %v2577
      %v2595 = vsub.f32 %v2593, %v2594
      %v2596 = vmax.f32 %v2595, 0.0
      %v2597 = vsub.f32 %v2562, %v2577
      %v2598 = vsub.f32 %v2563, %v2577
      %v2599 = vadd.f32 %v2596, 1e-05
      %v2600 = vrsqrt.pop %v2599
      %v2601 = vmul.f32 %v2597, %v2600
      %v2602 = vmul.f32 %v2598, %v2600
      %v2603 = vlaneseq
      %v2604 = vshrl.u32 %v2603, 7
      %v2605 = vsub.s32 1, %v2604
      %v2606 = vrot.slane %v2503, %v2605
      %v2607 = vmul.f32 %v2601, %v2606
      %v2608 = vmul.f32 %v2602, %v2606
      %v2609 = vlaneseq
      %v2610 = vshrl.u32 %v2609, 7
      %v2611 = vsub.s32 2, %v2610
      %v2612 = vrot.slane %v2503, %v2611
      %v2613 = vadd.f32 %v2607, %v2612
      %v2614 = vadd.f32 %v2608, %v2612
      %s2615 = scalar_lea.vmem %s9, 20
      %v2616 = vld [vmem:[%s2615] sm:$0x7]
      %2617 = vst.msk [vmem:[#allocation4 + $0x8] sm:$0xff] %vm577, %v2613
      %2618 = vst.msk [vmem:[#allocation4 + $0x10] sm:$0x7f] %vm689, %v2614
      %v2619 = vld [vmem:[#allocation4 + $0x4] sm:$0xff]
      %v2620 = vld [vmem:[#allocation4 + $0xc] sm:$0x7f]
      %v2621 = vlaneseq
      %v2622 = vshrl.u32 %v2621, 7
      %v2623 = vsub.s32 0, %v2622
      %v2624 = vrot.slane %v2616, %v2623
      %v2625 = vmul.f32 %v2624, %v2619
      %v2626 = vmul.f32 %v2624, %v2620
      %v2627 = vld [vmem:[#allocation4 + $0x8] sm:$0xff]
      %v2628 = vld [vmem:[#allocation4 + $0x10] sm:$0x7f]
      %v2629 = vlaneseq
      %v2630 = vshrl.u32 %v2629, 7
      %v2631 = vsub.s32 1, %v2630
      %v2632 = vrot.slane %v2616, %v2631
      %v2633 = vmul.f32 %v2632, %v2627
      %v2634 = vmul.f32 %v2632, %v2628
      %v2635 = vadd.f32 %v2625, %v2633
      %v2636 = vadd.f32 %v2626, %v2634
      %v2637 = vld [vmem:[#allocation4 + $0xc] sm:$0xff]
      %v2638 = vld [vmem:[#allocation4 + $0x14] sm:$0x7f]
      %v2639 = vlaneseq
      %v2640 = vshrl.u32 %v2639, 7
      %v2641 = vsub.s32 2, %v2640
      %v2642 = vrot.slane %v2616, %v2641
      %v2643 = vmul.f32 %v2642, %v2637
      %v2644 = vmul.f32 %v2642, %v2638
      %v2645 = vadd.f32 %v2635, %v2643
      %v2646 = vadd.f32 %v2636, %v2644
      %2647 = vst.msk [vmem:[#allocation3] sm:$0xff] %vm577, %v2645
      %2648 = vst.msk [vmem:[#allocation3 + $0x8] sm:$0x7f] %vm689, %v2646
      %v2649 = vld [vmem:[#allocation3] sm:$0xff]
      %v2650 = vld [vmem:[#allocation3 + $0x8] sm:$0x7f]
      %v2651 = vlaneseq
      %v2652 = vshrl.u32 %v2651, 7
      %v2653 = vsub.s32 3, %v2652
      %v2654 = vrot.slane %v2503, %v2653
      %v2655 = vadd.f32 %v2649, %v2654
      %v2656 = vadd.f32 %v2650, %v2654
      %vm2657 = vcmp.ge.f32.partialorder %v2655, 0.0
      %vm2658 = vcmp.ge.f32.partialorder %v2656, 0.0
      %v2659 = vmul.f32 %v2655, 0.25
      %v2660 = vmul.f32 %v2656, 0.25
      %v2661 = vsel %vm2657, %v2655, %v2659
      %v2662 = vsel %vm2658, %v2656, %v2660
      %v2663 = vsel %vm577, %v2661, 0.0
      %v2664 = vsel %vm689, %v2662, 0.0
      %v2665 = vadd.f32 %v2663, %v2664
      %2666 = vadd.xlane.f32.xlu0 %v2665
      %v2667 = vpop.xlane.xlu0 %2666
      %v2668 = vrot.slane %v2667, 4
      %v2669 = vadd.f32 %v2667, %v2668
      %v2670 = vrot.slane %v2669, 2
      %v2671 = vadd.f32 %v2669, %v2670
      %v2672 = vrot.slane %v2671, 1
      %v2673 = vadd.f32 %v2671, %v2672
      %s2674 = vtos %v2673
      %v2675 = vstv %s2674
      %v2676 = vmul.f32 %v2675, %v708
      %v2677 = vmul.f32 %v2661, %v2661
      %v2678 = vmul.f32 %v2662, %v2662
      %v2679 = vsel %vm577, %v2677, 0.0
      %v2680 = vsel %vm689, %v2678, 0.0
      %v2681 = vadd.f32 %v2679, %v2680
      %2682 = vadd.xlane.f32.xlu0 %v2681
      %v2683 = vpop.xlane.xlu0 %2682
      %v2684 = vrot.slane %v2683, 4
      %v2685 = vadd.f32 %v2683, %v2684
      %v2686 = vrot.slane %v2685, 2
      %v2687 = vadd.f32 %v2685, %v2686
      %v2688 = vrot.slane %v2687, 1
      %v2689 = vadd.f32 %v2687, %v2688
      %s2690 = vtos %v2689
      %v2691 = vstv %s2690
      %v2692 = vmul.f32 %v2691, %v708
      %v2693 = vmul.f32 %v2676, %v2676
      %v2694 = vsub.f32 %v2692, %v2693
      %v2695 = vmax.f32 %v2694, 0.0
      %v2696 = vsub.f32 %v2661, %v2676
      %v2697 = vsub.f32 %v2662, %v2676
      %v2698 = vadd.f32 %v2695, 1e-05
      %v2699 = vrsqrt.pop %v2698
      %v2700 = vmul.f32 %v2696, %v2699
      %v2701 = vmul.f32 %v2697, %v2699
      %v2702 = vlaneseq
      %v2703 = vshrl.u32 %v2702, 7
      %v2704 = vsub.s32 4, %v2703
      %v2705 = vrot.slane %v2503, %v2704
      %v2706 = vmul.f32 %v2700, %v2705
      %v2707 = vmul.f32 %v2701, %v2705
      %v2708 = vlaneseq
      %v2709 = vshrl.u32 %v2708, 7
      %v2710 = vsub.s32 5, %v2709
      %v2711 = vrot.slane %v2503, %v2710
      %v2712 = vadd.f32 %v2706, %v2711
      %v2713 = vadd.f32 %v2707, %v2711
      %s2714 = scalar_lea.vmem %s10, 40
      %v2715 = vld [vmem:[%s2714] sm:$0xf]
      %v2716 = vld [vmem:[%s2714 + $0x4] sm:$0xf]
      %v2717 = vpack.c.bf16 %v2713, %v2712
      %v2720 = vunpack.c.l.b16 %v2715
      %v2721 = vunpack.c.l.b16 %v2716
      %v2722 = vpack.c.b16 %v2721, %v2720
      %v2725 = vsel %vm577, %v2717, 0
      %2727 = vmatprep.subr.bf16.mxu0 0
      %2728 = vmatpush1.bf16.msra.mxu0 %v2722
      %2729 = vmatprep.subr.bf16.mxu0 0
      %2730 = vmatpush1.bf16.msra.mxu0 0
      %2731 = vmatprep.subr.bf16.mxu0 0
      %2732 = vmatpush1.bf16.msra.mxu0 0
      %2733 = vmatprep.subr.bf16.mxu0 0
      %2734 = vmatpush1.bf16.msra.mxu0 0
      %2735 = vmatprep.subr.bf16.mxu0 0
      %2736 = vmatpush1.bf16.msra.mxu0 0
      %2737 = vmatprep.subr.bf16.mxu0 0
      %2738 = vmatpush1.bf16.msra.mxu0 0
      %2739 = vmatprep.subr.bf16.mxu0 0
      %2740 = vmatpush1.bf16.msra.mxu0 0
      %2741 = vmatprep.subr.bf16.mxu0 0
      %2742 = vmatpush1.bf16.msra.mxu0 0
      %2743 = vmatprep.subr.bf16.mxu0 0
      %2744 = vmatpush1.bf16.msra.mxu0 0
      %2745 = vmatprep.subr.bf16.mxu0 0
      %2746 = vmatpush1.bf16.msra.mxu0 0
      %2747 = vmatprep.subr.bf16.mxu0 0
      %2748 = vmatpush1.bf16.msra.mxu0 0
      %2749 = vmatprep.subr.bf16.mxu0 0
      %2750 = vmatpush1.bf16.msra.mxu0 0
      %2751 = vmatprep.subr.bf16.mxu0 0
      %2752 = vmatpush1.bf16.msra.mxu0 0
      %2753 = vmatprep.subr.bf16.mxu0 0
      %2754 = vmatpush1.bf16.msra.mxu0 0
      %2755 = vmatprep.subr.bf16.mxu0 0
      %2756 = vmatpush1.bf16.msra.mxu0 0
      %2757 = vmatprep.subr.bf16.mxu0 0
      %2758 = vmatpush1.bf16.msra.mxu0 0
      %2759 = vmatprep.mubr.bf16.mxu0 0
      %2760 = vmatmul.mubr.bf16.gmra.mrb[0].mxu0 %v2725
      %v2761 = vpop.f32.mrb[0].mxu0
      %v2762 = vadd.f32 0.0, %v2761
      %v2763 = vpop.f32.mrb[0].mxu0
      %v2764 = vpop.f32.mrb[0].mxu0
      %v2765 = vadd.f32 0.0, %v2764
      %v2766 = vpop.f32.mrb[0].mxu0
      %2767 = vdwg.mxu0
      %v2768 = vadd.f32 %v2438, %v2762
      %v2769 = vadd.f32 %v2439, %v2765
      %s2770 = scalar_lea.vmem %s11, 5
      %v2771 = vld [vmem:[%s2770] sm:$0x1]
      %v2773 = vlaneseq
      %v2774 = vshrl.u32 %v2773, 7
      %v2775 = vsub.s32 0, %v2774
      %v2776 = vrot.slane %v2771, %v2775
      %v2778 = vadd.f32 %v2768, %v2776
      %v2779 = vadd.f32 %v2769, %v2776
      %vm2780 = vcmp.ge.f32.partialorder %v2778, 0.0
      %vm2781 = vcmp.ge.f32.partialorder %v2779, 0.0
      %v2782 = vmul.f32 %v2778, 0.25
      %v2783 = vmul.f32 %v2779, 0.25
      %v2784 = vsel %vm2780, %v2778, %v2782
      %v2785 = vsel %vm2781, %v2779, %v2783
      %v2786 = vld [vmem:[%s14] sm:$0xf]
      %v2787 = vpack.c.bf16 %v2785, %v2784
      %v2788 = vld [vmem:[%s15] sm:$0x1]
      %v2790 = vlaneseq
      %v2791 = vshrl.u32 %v2790, 7
      %v2792 = vsub.s32 0, %v2791
      %v2793 = vrot.slane %v2788, %v2792
      %v2796 = vsel %vm818, %v2787, 0
      %v2799 = vsel %vm822, %v2786, 0
      %2801 = vmatprep.subr.bf16.mxu0 0
      %2802 = vmatpush1.bf16.msra.mxu0 %v2799
      %2803 = vmatprep.subr.bf16.mxu0 0
      %2804 = vmatpush1.bf16.msra.mxu0 0
      %2805 = vmatprep.subr.bf16.mxu0 0
      %2806 = vmatpush1.bf16.msra.mxu0 0
      %2807 = vmatprep.subr.bf16.mxu0 0
      %2808 = vmatpush1.bf16.msra.mxu0 0
      %2809 = vmatprep.subr.bf16.mxu0 0
      %2810 = vmatpush1.bf16.msra.mxu0 0
      %2811 = vmatprep.subr.bf16.mxu0 0
      %2812 = vmatpush1.bf16.msra.mxu0 0
      %2813 = vmatprep.subr.bf16.mxu0 0
      %2814 = vmatpush1.bf16.msra.mxu0 0
      %2815 = vmatprep.subr.bf16.mxu0 0
      %2816 = vmatpush1.bf16.msra.mxu0 0
      %2817 = vmatprep.subr.bf16.mxu0 0
      %2818 = vmatpush1.bf16.msra.mxu0 0
      %2819 = vmatprep.subr.bf16.mxu0 0
      %2820 = vmatpush1.bf16.msra.mxu0 0
      %2821 = vmatprep.subr.bf16.mxu0 0
      %2822 = vmatpush1.bf16.msra.mxu0 0
      %2823 = vmatprep.subr.bf16.mxu0 0
      %2824 = vmatpush1.bf16.msra.mxu0 0
      %2825 = vmatprep.subr.bf16.mxu0 0
      %2826 = vmatpush1.bf16.msra.mxu0 0
      %2827 = vmatprep.subr.bf16.mxu0 0
      %2828 = vmatpush1.bf16.msra.mxu0 0
      %2829 = vmatprep.subr.bf16.mxu0 0
      %2830 = vmatpush1.bf16.msra.mxu0 0
      %2831 = vmatprep.subr.bf16.mxu0 0
      %2832 = vmatpush1.bf16.msra.mxu0 0
      %2833 = vmatprep.mubr.bf16.mxu0 0
      %2834 = vmatmul.mubr.bf16.gmra.mrb[0].mxu0 %v2796
      %v2835 = vpop.f32.mrb[0].mxu0
      %v2836 = vadd.f32 %v2793, %v2835
      %v2837 = vpop.f32.mrb[0].mxu0
      %v2838 = vpop.f32.mrb[0].mxu0
      %v2839 = vadd.f32 %v2793, %v2838
      %v2840 = vpop.f32.mrb[0].mxu0
      %2841 = vdwg.mxu0
      %v2842 = vxor.u32 %v2836, 2147483648
      %v2843 = vxor.u32 %v2839, 2147483648
      %v2844 = vmul.f32 %v2842, 1.442695
      %v2845 = vpow.pop %v2844
      %v2846 = vmul.f32 %v2843, 1.442695
      %v2847 = vpow.pop %v2846
      %v2848 = vadd.f32 %v2845, 1.0
      %v2849 = vadd.f32 %v2847, 1.0
      %v2850 = vrcp.pop %v2848
      %v2851 = vmul.f32 1.0, %v2850
      %v2852 = vrcp.pop %v2849
      %v2853 = vmul.f32 1.0, %v2852
      %v2854 = vmul.f32 %v691, %v2851
      %v2855 = vmul.f32 %v692, %v2853
      %v2856 = vld [vmem:[%s16] sm:$0xf]
      %v2857 = vld [vmem:[%s16 + $0x4] sm:$0xf]
      %v2858 = vpack.c.bf16 %v2855, %v2854
      %v2861 = vunpack.c.l.b16 %v2856
      %v2862 = vunpack.c.l.b16 %v2857
      %v2863 = vpack.c.b16 %v2862, %v2861
      %v2866 = vsel %vm577, %v2858, 0
      %2868 = vmatprep.subr.bf16.mxu0 0
      %2869 = vmatpush1.bf16.msra.mxu0 %v2863
      %2870 = vmatprep.subr.bf16.mxu0 0
      %2871 = vmatpush1.bf16.msra.mxu0 0
      %2872 = vmatprep.subr.bf16.mxu0 0
      %2873 = vmatpush1.bf16.msra.mxu0 0
      %2874 = vmatprep.subr.bf16.mxu0 0
      %2875 = vmatpush1.bf16.msra.mxu0 0
      %2876 = vmatprep.subr.bf16.mxu0 0
      %2877 = vmatpush1.bf16.msra.mxu0 0
      %2878 = vmatprep.subr.bf16.mxu0 0
      %2879 = vmatpush1.bf16.msra.mxu0 0
      %2880 = vmatprep.subr.bf16.mxu0 0
      %2881 = vmatpush1.bf16.msra.mxu0 0
      %2882 = vmatprep.subr.bf16.mxu0 0
      %2883 = vmatpush1.bf16.msra.mxu0 0
      %2884 = vmatprep.subr.bf16.mxu0 0
      %2885 = vmatpush1.bf16.msra.mxu0 0
      %2886 = vmatprep.subr.bf16.mxu0 0
      %2887 = vmatpush1.bf16.msra.mxu0 0
      %2888 = vmatprep.subr.bf16.mxu0 0
      %2889 = vmatpush1.bf16.msra.mxu0 0
      %2890 = vmatprep.subr.bf16.mxu0 0
      %2891 = vmatpush1.bf16.msra.mxu0 0
      %2892 = vmatprep.subr.bf16.mxu0 0
      %2893 = vmatpush1.bf16.msra.mxu0 0
      %2894 = vmatprep.subr.bf16.mxu0 0
      %2895 = vmatpush1.bf16.msra.mxu0 0
      %2896 = vmatprep.subr.bf16.mxu0 0
      %2897 = vmatpush1.bf16.msra.mxu0 0
      %2898 = vmatprep.subr.bf16.mxu0 0
      %2899 = vmatpush1.bf16.msra.mxu0 0
      %2900 = vmatprep.mubr.bf16.mxu0 0
      %2901 = vmatmul.mubr.bf16.gmra.mrb[0].mxu0 %v2866
      %v2902 = vpop.f32.mrb[0].mxu0
      %v2903 = vadd.f32 0.0, %v2902
      %v2904 = vpop.f32.mrb[0].mxu0
      %v2905 = vpop.f32.mrb[0].mxu0
      %v2906 = vadd.f32 0.0, %v2905
      %v2907 = vpop.f32.mrb[0].mxu0
      %2908 = vdwg.mxu0
      %v2909 = vld [vmem:[%s17] sm:$0xf]
      %v2910 = vld [vmem:[%s17 + $0x4] sm:$0xf]
      %v2913 = vunpack.c.l.b16 %v2909
      %v2914 = vunpack.c.l.b16 %v2910
      %v2915 = vpack.c.b16 %v2914, %v2913
      %2917 = vmatprep.subr.bf16.mxu0 0
      %2918 = vmatpush1.bf16.msra.mxu0 %v2915
      %2919 = vmatprep.subr.bf16.mxu0 0
      %2920 = vmatpush1.bf16.msra.mxu0 0
      %2921 = vmatprep.subr.bf16.mxu0 0
      %2922 = vmatpush1.bf16.msra.mxu0 0
      %2923 = vmatprep.subr.bf16.mxu0 0
      %2924 = vmatpush1.bf16.msra.mxu0 0
      %2925 = vmatprep.subr.bf16.mxu0 0
      %2926 = vmatpush1.bf16.msra.mxu0 0
      %2927 = vmatprep.subr.bf16.mxu0 0
      %2928 = vmatpush1.bf16.msra.mxu0 0
      %2929 = vmatprep.subr.bf16.mxu0 0
      %2930 = vmatpush1.bf16.msra.mxu0 0
      %2931 = vmatprep.subr.bf16.mxu0 0
      %2932 = vmatpush1.bf16.msra.mxu0 0
      %2933 = vmatprep.subr.bf16.mxu0 0
      %2934 = vmatpush1.bf16.msra.mxu0 0
      %2935 = vmatprep.subr.bf16.mxu0 0
      %2936 = vmatpush1.bf16.msra.mxu0 0
      %2937 = vmatprep.subr.bf16.mxu0 0
      %2938 = vmatpush1.bf16.msra.mxu0 0
      %2939 = vmatprep.subr.bf16.mxu0 0
      %2940 = vmatpush1.bf16.msra.mxu0 0
      %2941 = vmatprep.subr.bf16.mxu0 0
      %2942 = vmatpush1.bf16.msra.mxu0 0
      %2943 = vmatprep.subr.bf16.mxu0 0
      %2944 = vmatpush1.bf16.msra.mxu0 0
      %2945 = vmatprep.subr.bf16.mxu0 0
      %2946 = vmatpush1.bf16.msra.mxu0 0
      %2947 = vmatprep.subr.bf16.mxu0 0
      %2948 = vmatpush1.bf16.msra.mxu0 0
      %2949 = vmatprep.mubr.bf16.mxu0 0
      %2950 = vmatmul.mubr.bf16.gmra.mrb[0].mxu0 %v2866
      %v2951 = vpop.f32.mrb[0].mxu0
      %v2952 = vadd.f32 0.0, %v2951
      %v2953 = vpop.f32.mrb[0].mxu0
      %v2954 = vpop.f32.mrb[0].mxu0
      %v2955 = vadd.f32 0.0, %v2954
      %v2956 = vpop.f32.mrb[0].mxu0
      %2957 = vdwg.mxu0
      %vm2958 = vcmask 24576
      %2959 = vst.msk [vmem:[%s575] sm:$0x1] %vm2958, %v2903
      %vm2962 = vcmask 1040384
      %v2963 = vrot.slane %v2952, 7
      %v2964 = vrot.slane %v2955, 7
      %v2965 = vsel %vm2962, %v2963, %v2964
      %v2968 = vadd.f32 %v2903, %v2963
      %v2969 = vadd.f32 %v2906, %v2965
      %vm2970 = vcmask 31745
      %2971 = vst.msk [vmem:[%s575] sm:$0xfe] %vm2970, %v2968
      %vm2972 = vcmask 30720
      %2973 = vst.msk [vmem:[%s575 + $0x8] sm:$0x7f] %vm2972, %v2969
      %vm2974 = vcmask 30726
      %2975 = vst.msk [vmem:[%s575 + $0x9] sm:$0x40] %vm2974, %v2955
      %p2976 = scmp.lt.s32.totalorder %s29, 1
      %s2977 = scalar_select %p2976, %s29, 1
      %s2978 = smul.addr %s2977, 2
      %s2979 = smul.addr %s2978, 8
      %s2980 = scalar_lea.vmem %s18, %s2979
      // Predicated region
      $region93: #{tpu_custom_call.1} parent=91 // pred_check
        %p2981 = pneg %p430
      $region94: #{tpu_custom_call.1} parent=91 // pred_check_branch
        %2983 = sbr.rel (%p2981) target = $region96
      $region95: #{tpu_custom_call.1} parent=91 // pred_region
        _
      $region96: #{tpu_custom_call.1} parent=91 // pred_fallthru
        _
    $region92: #{tpu_custom_call.1} parent=5 // pred_fallthru
      _
    %p2984 = scmp.le.s32.totalorder 2, %s24
    // Predicated region
    $region97: #{tpu_custom_call.1} parent=5 // pred_check
      %p2985 = pneg %p2984
    $region98: #{tpu_custom_call.1} parent=5 // pred_check_branch
      %2987 = sbr.rel (%p2985) target = $region100
    $region99: #{tpu_custom_call.1} parent=5 // pred_region
      %s2988 = ssub.s32 %s24, 2
      // Predicated region
      $region101: #{tpu_custom_call.1} parent=99 // pred_check
        %p2989 = pneg %p436
      $region102: #{tpu_custom_call.1} parent=99 // pred_check_branch
        %2991 = sbr.rel (%p2989) target = $region104
      $region103: #{tpu_custom_call.1} parent=99 // pred_region
        %p2992 = scmp.lt.s32.totalorder %s30, 1
        %s2993 = scalar_select %p2992, %s30, 1
        %s2994 = smul.addr %s2993, 2
        %s2995 = smul.addr %s2994, 8
        %s2996 = scalar_lea.vmem %s18, %s2995
      $region104: #{tpu_custom_call.1} parent=99 // pred_fallthru
        _
    $region100: #{tpu_custom_call.1} parent=5 // pred_fallthru
      _
  $region6: #{tpu_custom_call.1} parent=0 // loop_footer
    %s28 = sadd.s32 1, %s24
  $region7: #{tpu_custom_call.1} parent=0 // loop_footer_branch
    %23 = sbr.rel target = $region3
  $region8: #{tpu_custom_call.1} parent=0 // loop_exit
    _

</llo_original>
